<compile_context>
chip_gen: v5e
topology: v5e:2x2
jax: 0.10.0
libtpu: 0.0.40
codegen_flags: <defaults>
</compile_context>

<pallas_src>
import functools
import math

import jax
import jax.numpy as jnp
from jax.experimental import pallas as pl


# -----------------------------------------------------------------------------
# Fused kernel
# -----------------------------------------------------------------------------

def _add_layernorm(x, r, g, b, eps):
    """LayerNorm(x + r) over last dim, two-pass (biased) variance like PyTorch."""
    v = x + r
    mean = jnp.mean(v, axis=-1, keepdims=True)
    c = v - mean
    var = jnp.mean(c * c, axis=-1, keepdims=True)
    return c * jax.lax.rsqrt(var + eps) * g + b


def video_encoder_kernel(x_ref, wt_ref, btpos_ref, bias_ref,
                         wqkv_ref, bqkv_ref, wo_ref, w1_ref, w2_ref, vec_ref,
                         o_ref, *, n_heads, eps):
    bf16 = jnp.bfloat16
    f32 = jnp.float32

    n_layers = w1_ref.shape[0]
    head_dim = wo_ref.shape[1]
    H = wt_ref.shape[1]
    PF = w1_ref.shape[2]
    BS = x_ref.shape[0]
    inv_scale = 1.0 / math.sqrt(head_dim)

    # Input projection; bias + positional encoding folded into one constant.
    h = jnp.dot(x_ref[...].astype(bf16), wt_ref[...],
                preferred_element_type=f32) + btpos_ref[...]            # [BS, H]
    attn_bias = bias_ref[...]                                           # [BS, BS]

    for li in range(n_layers):                  # static unroll (n_layers = 2)
        vec = vec_ref[li]                       # [8, max(PF, H)] packed per-layer vectors
        bo, b1 = vec[0:1, :H], vec[1:2, :PF]
        b2, g1 = vec[2:3, :H], vec[3:4, :H]
        be1, g2, be2 = vec[4:5, :H], vec[5:6, :H], vec[6:7, :H]

        # ---- multi-head self attention (per-head weights, no lane slicing / concat) ----
        h16 = h.astype(bf16)
        attn = jnp.zeros((BS, H), f32)
        for hd in range(n_heads):               # static unroll (n_heads = 4)
            iq = (li * 3 + 0) * n_heads + hd
            ik = (li * 3 + 1) * n_heads + hd
            iv = (li * 3 + 2) * n_heads + hd
            q = jnp.dot(h16, wqkv_ref[iq], preferred_element_type=f32) + bqkv_ref[iq]
            k = jnp.dot(h16, wqkv_ref[ik], preferred_element_type=f32) + bqkv_ref[ik]
            v = jnp.dot(h16, wqkv_ref[iv], preferred_element_type=f32) + bqkv_ref[iv]

            score = jax.lax.dot_general(q, k, (((1,), (1,)), ((), ())),
                                        preferred_element_type=f32)
            score = score * inv_scale + attn_bias          # block-diagonal clip mask
            score = score - jnp.max(score, axis=-1, keepdims=True)
            p = jnp.exp(score)
            alpha = p * pl.reciprocal(jnp.sum(p, axis=-1, keepdims=True), approx=True)

            ctx = jnp.dot(alpha, v, preferred_element_type=f32)          # [BS, head_dim]
            attn = attn + jnp.dot(ctx.astype(bf16), wo_ref[li * n_heads + hd],
                                  preferred_element_type=f32)
        attn = attn + bo

        h = _add_layernorm(h, attn, g1, be1, eps)

        # ---- position-wise feed forward ----
        hidden = jnp.dot(h.astype(bf16), w1_ref[li], preferred_element_type=f32) + b1
        hidden = jnp.maximum(hidden, 0.0)
        ff = jnp.dot(hidden.astype(bf16), w2_ref[li], preferred_element_type=f32) + b2

        h = _add_layernorm(h, ff, g2, be2, eps)

    o_ref[...] = h


# -----------------------------------------------------------------------------
# Wrapper
# -----------------------------------------------------------------------------

def video_representations_forward(video, params, *, video_voxel_shape, hid_dim,
                                  n_heads, n_layers):
    B = video.shape[0]
    # TODO(synk): VideoClipToVoxels is not defined in the spec; identity + reshape.
    voxels = video.reshape(B, -1, video_voxel_shape)
    S, V, H = voxels.shape[1], video_voxel_shape, hid_dim
    x_flat = voxels.reshape(B * S, V)

    # Fold projection bias + positional encoding into one [B*S, H] constant.
    btpos = jnp.tile(params["bt"] + params["pos"][:S], (B, 1))

    # Additive block-diagonal attention bias: tokens only attend within their own clip.
    clip_id = jnp.repeat(jnp.arange(B), S)
    attn_bias = jnp.where(clip_id[:, None] == clip_id[None, :],
                          0.0, -1e30).astype(jnp.float32)

    kernel = functools.partial(video_encoder_kernel, n_heads=n_heads, eps=1e-5)
    out = pl.pallas_call(
        kernel,
        out_shape=jax.ShapeDtypeStruct((B * S, H), jnp.float32),
        # No grid / BlockSpecs: single step, all operands whole-array resident in VMEM
        # (total << 1 MiB).  Restore a parallel row/batch grid axis when sizes grow.
    )(x_flat, params["Wt"], btpos, attn_bias,
      params["wqkv"], params["bqkv"], params["wo"],
      params["w1"], params["w2"], params["vec"])
    return out.reshape(B, S, H)


# -----------------------------------------------------------------------------
# Parameter construction (deterministic, synthetic)
# -----------------------------------------------------------------------------

def init_linear(key, din, dout, scale=0.05):
    k1, k2 = jax.random.split(key)
    W = jax.random.normal(k1, (din, dout), jnp.float32) * scale
    b = jax.random.normal(k2, (1, dout), jnp.float32) * scale
    return W, b


def make_positional_encoding(max_len, hid_dim):
    pos = jnp.arange(max_len, dtype=jnp.float32)[:, None]
    div_term = jnp.exp(-jnp.arange(0, hid_dim, 2, dtype=jnp.float32)
                       * math.log(10000.0) / hid_dim)
    pe = jnp.zeros((max_len, hid_dim), jnp.float32)
    pe = pe.at[:, 0::2].set(jnp.sin(pos * div_term))
    pe = pe.at[:, 1::2].set(jnp.cos(pos * div_term))
    return pe


def init_params(key, video_voxel_shape, hid_dim, n_layers, n_heads, pf_dim, max_length):
    H, PF, V = hid_dim, pf_dim, video_voxel_shape
    hd = H // n_heads
    bf16 = jnp.bfloat16
    keys = jax.random.split(key, 1 + n_layers)
    Wt, bt = init_linear(keys[0], V, H)

    wqkv, bqkv, wo = [], [], []
    bo, w1, b1, w2, b2 = [], [], [], [], []
    for li in range(n_layers):
        lk = jax.random.split(keys[1 + li], 6)
        wq, bq_ = init_linear(lk[0], H, H)
        wk, bk_ = init_linear(lk[1], H, H)
        wv, bv_ = init_linear(lk[2], H, H)
        wo_l, bo_l = init_linear(lk[3], H, H)
        w1_l, b1_l = init_linear(lk[4], H, PF)
        w2_l, b2_l = init_linear(lk[5], PF, H)
        for w, b in ((wq, bq_), (wk, bk_), (wv, bv_)):
            wqkv.append(w.reshape(H, n_heads, hd).transpose(1, 0, 2))   # [n_heads, H, hd]
            bqkv.append(b.reshape(1, n_heads, hd).transpose(1, 0, 2))   # [n_heads, 1, hd]
        wo.append(wo_l.reshape(n_heads, hd, H))                         # [n_heads, hd, H]
        bo.append(bo_l); w1.append(w1_l); b1.append(b1_l)
        w2.append(w2_l); b2.append(b2_l)

    ones = jnp.ones((n_layers, 1, H), jnp.float32)
    zeros = jnp.zeros((n_layers, 1, H), jnp.float32)
    params = dict(
        Wt=Wt.astype(bf16), bt=bt, pos=make_positional_encoding(max_length, H),
        wqkv=jnp.concatenate(wqkv, 0).astype(bf16),      # [L*3*n_heads, H, hd]
        bqkv=jnp.concatenate(bqkv, 0),                   # [L*3*n_heads, 1, hd]
        wo=jnp.concatenate(wo, 0).astype(bf16),          # [L*n_heads, hd, H]
        w1=jnp.stack(w1, 0).astype(bf16), w2=jnp.stack(w2, 0).astype(bf16),
        bo=jnp.stack(bo, 0), b1=jnp.stack(b1, 0), b2=jnp.stack(b2, 0),
        g1=ones, beta1=zeros, g2=ones, beta2=zeros)

    # Pack the 7 per-layer [1, dim] vectors into one [n_layers, 8, max(PF, H)] operand.
    width = max(PF, H)
    pad = lambda v: jnp.pad(v, ((0, 0), (0, width - v.shape[1])))
    params["vec"] = jnp.stack([
        jnp.concatenate([pad(params["bo"][li]), pad(params["b1"][li]),
                         pad(params["b2"][li]), pad(params["g1"][li]),
                         pad(params["beta1"][li]), pad(params["g2"][li]),
                         pad(params["beta2"][li]),
                         jnp.zeros((1, width), jnp.float32)], axis=0)
        for li in range(n_layers)], axis=0)
    return params


# -----------------------------------------------------------------------------
# Pure-JAX reference (same bf16 weight-matmul casts; exact softmax)
# -----------------------------------------------------------------------------

def reference_forward(video, params, *, video_voxel_shape, hid_dim, n_heads, n_layers):
    B = video.shape[0]
    x = video.reshape(B, -1, video_voxel_shape)
    S, H = x.shape[1], hid_dim
    head_dim = H // n_heads
    inv_scale = 1.0 / math.sqrt(head_dim)
    bf16 = jnp.bfloat16

    def bdot(a, b):
        return jnp.dot(a.astype(bf16), b.astype(bf16),
                       preferred_element_type=jnp.float32)

    def ln(v, g, b):
        mean = jnp.mean(v, axis=-1, keepdims=True)
        c = v - mean
        var = jnp.mean(c * c, axis=-1, keepdims=True)
        return c * jax.lax.rsqrt(var + 1e-5) * g + b

    h = bdot(x, params["Wt"]) + params["bt"] + params["pos"][:S]        # [B, S, H]

    for li in range(n_layers):
        attn = jnp.zeros_like(h)
        for hd in range(n_heads):
            iq = (li * 3 + 0) * n_heads + hd
            ik = (li * 3 + 1) * n_heads + hd
            iv = (li * 3 + 2) * n_heads + hd
            q = bdot(h, params["wqkv"][iq]) + params["bqkv"][iq]
            k = bdot(h, params["wqkv"][ik]) + params["bqkv"][ik]
            v = bdot(h, params["wqkv"][iv]) + params["bqkv"][iv]
            score = jnp.einsum("bqd,bkd->bqk", q, k) * inv_scale
            alpha = jax.nn.softmax(score, axis=-1)
            ctx = jnp.einsum("bqk,bkd->bqd", alpha, v)
            attn = attn + bdot(ctx, params["wo"][li * n_heads + hd])
        attn = attn + params["bo"][li]
        h = ln(h + attn, params["g1"][li], params["beta1"][li])
        hidden = jnp.maximum(bdot(h, params["w1"][li]) + params["b1"][li], 0.0)
        ff = bdot(hidden, params["w2"][li]) + params["b2"][li]
        h = ln(h + ff, params["g2"][li], params["beta2"][li])
    return h


# -----------------------------------------------------------------------------
# Main
# -----------------------------------------------------------------------------

if __name__ == "__main__":
    video_voxel_shape = 128        # features per voxel
    hid_dim = 32
    n_layers = 2
    n_heads = 4
    pf_dim = 64
    max_length = 16
    batch = 2
    frames, chans, hs, ws = 8, 1, 8, 16          # 8*1*8*16 = 1024 = 8 voxels of 128
    seq = (frames * chans * hs * ws) // video_voxel_shape

    key = jax.random.PRNGKey(0)
    k_param, k_data = jax.random.split(key)
    params = init_params(k_param, video_voxel_shape, hid_dim, n_layers, n_heads,
                         pf_dim, max_length)
    video = jax.random.normal(k_data, (batch, frames, chans, hs, ws), jnp.float32)

    out = video_representations_forward(
        video, params, video_voxel_shape=video_voxel_shape,
        hid_dim=hid_dim, n_heads=n_heads, n_layers=n_layers)
    out = jax.block_until_ready(out)

    ref = reference_forward(
        video, params, video_voxel_shape=video_voxel_shape,
        hid_dim=hid_dim, n_heads=n_heads, n_layers=n_layers)

    assert out.shape == (batch, seq, hid_dim)
    # Tolerance covers the approximate (EUP) softmax reciprocal; bf16 matmul casts are
    # applied identically in kernel and reference.
    assert jnp.allclose(out, ref, atol=1e-2, rtol=1e-2), "mismatch vs reference"

    print("KERNEL_OK")
</pallas_src>

<mosaic_0001>
module attributes {stable_mosaic.version = 11 : i64} {
  func.func @video_encoder_kernel(%arg0: memref<16x128xf32, #tpu.memory_space<vmem>>, %arg1: memref<128x32xbf16, #tpu.memory_space<vmem>>, %arg2: memref<16x32xf32, #tpu.memory_space<vmem>>, %arg3: memref<16x16xf32, #tpu.memory_space<vmem>>, %arg4: memref<24x32x8xbf16, #tpu.memory_space<vmem>>, %arg5: memref<24x1x8xf32, #tpu.memory_space<vmem>>, %arg6: memref<8x8x32xbf16, #tpu.memory_space<vmem>>, %arg7: memref<2x32x64xbf16, #tpu.memory_space<vmem>>, %arg8: memref<2x64x32xbf16, #tpu.memory_space<vmem>>, %arg9: memref<2x8x64xf32, #tpu.memory_space<vmem>>, %arg10: memref<16x32xf32, #tpu.memory_space<vmem>>) attributes {dimension_semantics = [], scalar_prefetch = 0 : i64, scratch_operands = 0 : i64, tpu.core_type = #tpu.core_type<tc>} {
    %c0 = arith.constant 0 : index
    %c0_0 = arith.constant 0 : index
    %0 = vector.load %arg0[%c0, %c0_0] : memref<16x128xf32, #tpu.memory_space<vmem>>, vector<16x128xf32>
    %1 = arith.truncf %0 : vector<16x128xf32> to vector<16x128xbf16>
    %c0_1 = arith.constant 0 : index
    %c0_2 = arith.constant 0 : index
    %2 = vector.load %arg1[%c0_1, %c0_2] : memref<128x32xbf16, #tpu.memory_space<vmem>>, vector<128x32xbf16>
    %cst = arith.constant dense<0.000000e+00> : vector<16x32xf32>
    %3 = tpu.matmul %1, %2, %cst {dimension_numbers = #tpu.dot_dimension_numbers<[1], [0], [0], [1], [0, 0, 1, 1], [], []>} : vector<16x128xbf16>, vector<128x32xbf16>, vector<16x32xf32> -> vector<16x32xf32>
    %c0_3 = arith.constant 0 : index
    %c0_4 = arith.constant 0 : index
    %4 = vector.load %arg2[%c0_3, %c0_4] : memref<16x32xf32, #tpu.memory_space<vmem>>, vector<16x32xf32>
    %5 = arith.addf %3, %4 : vector<16x32xf32>
    %c0_5 = arith.constant 0 : index
    %c0_6 = arith.constant 0 : index
    %6 = vector.load %arg3[%c0_5, %c0_6] : memref<16x16xf32, #tpu.memory_space<vmem>>, vector<16x16xf32>
    %c0_7 = arith.constant 0 : index
    %c0_8 = arith.constant 0 : index
    %c0_9 = arith.constant 0 : index
    %7 = vector.load %arg9[%c0_7, %c0_8, %c0_9] : memref<2x8x64xf32, #tpu.memory_space<vmem>>, vector<1x8x64xf32>
    %8 = vector.shape_cast %7 : vector<1x8x64xf32> to vector<8x64xf32>
    %9 = vector.extract_strided_slice %8 {offsets = [0, 0], sizes = [1, 32], strides = [1, 1]} : vector<8x64xf32> to vector<1x32xf32>
    %10 = vector.extract_strided_slice %8 {offsets = [1, 0], sizes = [1, 64], strides = [1, 1]} : vector<8x64xf32> to vector<1x64xf32>
    %11 = vector.extract_strided_slice %8 {offsets = [2, 0], sizes = [1, 32], strides = [1, 1]} : vector<8x64xf32> to vector<1x32xf32>
    %12 = vector.extract_strided_slice %8 {offsets = [3, 0], sizes = [1, 32], strides = [1, 1]} : vector<8x64xf32> to vector<1x32xf32>
    %13 = vector.extract_strided_slice %8 {offsets = [4, 0], sizes = [1, 32], strides = [1, 1]} : vector<8x64xf32> to vector<1x32xf32>
    %14 = vector.extract_strided_slice %8 {offsets = [5, 0], sizes = [1, 32], strides = [1, 1]} : vector<8x64xf32> to vector<1x32xf32>
    %15 = vector.extract_strided_slice %8 {offsets = [6, 0], sizes = [1, 32], strides = [1, 1]} : vector<8x64xf32> to vector<1x32xf32>
    %16 = arith.truncf %5 : vector<16x32xf32> to vector<16x32xbf16>
    %cst_10 = arith.constant 0.000000e+00 : f32
    %17 = vector.broadcast %cst_10 : f32 to vector<16x32xf32>
    %c0_11 = arith.constant 0 : index
    %c0_12 = arith.constant 0 : index
    %c0_13 = arith.constant 0 : index
    %18 = vector.load %arg4[%c0_11, %c0_12, %c0_13] : memref<24x32x8xbf16, #tpu.memory_space<vmem>>, vector<1x32x8xbf16>
    %19 = vector.shape_cast %18 : vector<1x32x8xbf16> to vector<32x8xbf16>
    %cst_14 = arith.constant dense<0.000000e+00> : vector<16x8xf32>
    %20 = tpu.matmul %16, %19, %cst_14 {dimension_numbers = #tpu.dot_dimension_numbers<[1], [0], [0], [1], [0, 0, 1, 1], [], []>} : vector<16x32xbf16>, vector<32x8xbf16>, vector<16x8xf32> -> vector<16x8xf32>
    %c0_15 = arith.constant 0 : index
    %c0_16 = arith.constant 0 : index
    %c0_17 = arith.constant 0 : index
    %21 = vector.load %arg5[%c0_15, %c0_16, %c0_17] : memref<24x1x8xf32, #tpu.memory_space<vmem>>, vector<1x1x8xf32>
    %22 = vector.shape_cast %21 : vector<1x1x8xf32> to vector<1x8xf32>
    %23 = vector.broadcast %22 : vector<1x8xf32> to vector<16x8xf32>
    %24 = arith.addf %20, %23 : vector<16x8xf32>
    %c4 = arith.constant 4 : index
    %c0_18 = arith.constant 0 : index
    %c0_19 = arith.constant 0 : index
    %25 = vector.load %arg4[%c4, %c0_18, %c0_19] : memref<24x32x8xbf16, #tpu.memory_space<vmem>>, vector<1x32x8xbf16>
    %26 = vector.shape_cast %25 : vector<1x32x8xbf16> to vector<32x8xbf16>
    %cst_20 = arith.constant dense<0.000000e+00> : vector<16x8xf32>
    %27 = tpu.matmul %16, %26, %cst_20 {dimension_numbers = #tpu.dot_dimension_numbers<[1], [0], [0], [1], [0, 0, 1, 1], [], []>} : vector<16x32xbf16>, vector<32x8xbf16>, vector<16x8xf32> -> vector<16x8xf32>
    %c4_21 = arith.constant 4 : index
    %c0_22 = arith.constant 0 : index
    %c0_23 = arith.constant 0 : index
    %28 = vector.load %arg5[%c4_21, %c0_22, %c0_23] : memref<24x1x8xf32, #tpu.memory_space<vmem>>, vector<1x1x8xf32>
    %29 = vector.shape_cast %28 : vector<1x1x8xf32> to vector<1x8xf32>
    %30 = vector.broadcast %29 : vector<1x8xf32> to vector<16x8xf32>
    %31 = arith.addf %27, %30 : vector<16x8xf32>
    %c8 = arith.constant 8 : index
    %c0_24 = arith.constant 0 : index
    %c0_25 = arith.constant 0 : index
    %32 = vector.load %arg4[%c8, %c0_24, %c0_25] : memref<24x32x8xbf16, #tpu.memory_space<vmem>>, vector<1x32x8xbf16>
    %33 = vector.shape_cast %32 : vector<1x32x8xbf16> to vector<32x8xbf16>
    %cst_26 = arith.constant dense<0.000000e+00> : vector<16x8xf32>
    %34 = tpu.matmul %16, %33, %cst_26 {dimension_numbers = #tpu.dot_dimension_numbers<[1], [0], [0], [1], [0, 0, 1, 1], [], []>} : vector<16x32xbf16>, vector<32x8xbf16>, vector<16x8xf32> -> vector<16x8xf32>
    %c8_27 = arith.constant 8 : index
    %c0_28 = arith.constant 0 : index
    %c0_29 = arith.constant 0 : index
    %35 = vector.load %arg5[%c8_27, %c0_28, %c0_29] : memref<24x1x8xf32, #tpu.memory_space<vmem>>, vector<1x1x8xf32>
    %36 = vector.shape_cast %35 : vector<1x1x8xf32> to vector<1x8xf32>
    %37 = vector.broadcast %36 : vector<1x8xf32> to vector<16x8xf32>
    %38 = arith.addf %34, %37 : vector<16x8xf32>
    %cst_30 = arith.constant dense<0.000000e+00> : vector<16x16xf32>
    %39 = tpu.matmul %24, %31, %cst_30 {dimension_numbers = #tpu.dot_dimension_numbers<[1], [1], [0], [0], [0, 0, 1, 0], [], []>} : vector<16x8xf32>, vector<16x8xf32>, vector<16x16xf32> -> vector<16x16xf32>
    %cst_31 = arith.constant 0.353553385 : f32
    %40 = vector.broadcast %cst_31 : f32 to vector<16x16xf32>
    %41 = arith.mulf %39, %40 : vector<16x16xf32>
    %42 = arith.addf %41, %6 : vector<16x16xf32>
    %cst_32 = arith.constant dense<0xFF800000> : vector<16xf32>
    %43 = vector.multi_reduction <maximumf>, %42, %cst_32 [1] : vector<16x16xf32> to vector<16xf32>
    %44 = vector.shape_cast %43 : vector<16xf32> to vector<16x1xf32>
    %45 = vector.broadcast %44 : vector<16x1xf32> to vector<16x16xf32>
    %46 = arith.subf %42, %45 : vector<16x16xf32>
    %47 = math.exp %46 : vector<16x16xf32>
    %cst_33 = arith.constant dense<0.000000e+00> : vector<16xf32>
    %48 = vector.multi_reduction <add>, %47, %cst_33 [1] : vector<16x16xf32> to vector<16xf32>
    %49 = vector.shape_cast %48 : vector<16xf32> to vector<16x1xf32>
    %50 = tpu.reciprocal %49 {approx = true} : vector<16x1xf32> -> vector<16x1xf32>
    %51 = vector.broadcast %50 : vector<16x1xf32> to vector<16x16xf32>
    %52 = arith.mulf %47, %51 : vector<16x16xf32>
    %cst_34 = arith.constant dense<0.000000e+00> : vector<16x8xf32>
    %53 = tpu.matmul %52, %38, %cst_34 {dimension_numbers = #tpu.dot_dimension_numbers<[1], [0], [0], [1], [0, 0, 1, 1], [], []>} : vector<16x16xf32>, vector<16x8xf32>, vector<16x8xf32> -> vector<16x8xf32>
    %54 = arith.truncf %53 : vector<16x8xf32> to vector<16x8xbf16>
    %c0_35 = arith.constant 0 : index
    %c0_36 = arith.constant 0 : index
    %c0_37 = arith.constant 0 : index
    %55 = vector.load %arg6[%c0_35, %c0_36, %c0_37] : memref<8x8x32xbf16, #tpu.memory_space<vmem>>, vector<1x8x32xbf16>
    %56 = vector.shape_cast %55 : vector<1x8x32xbf16> to vector<8x32xbf16>
    %cst_38 = arith.constant dense<0.000000e+00> : vector<16x32xf32>
    %57 = tpu.matmul %54, %56, %cst_38 {dimension_numbers = #tpu.dot_dimension_numbers<[1], [0], [0], [1], [0, 0, 1, 1], [], []>} : vector<16x8xbf16>, vector<8x32xbf16>, vector<16x32xf32> -> vector<16x32xf32>
    %58 = arith.addf %17, %57 : vector<16x32xf32>
    %c1 = arith.constant 1 : index
    %c0_39 = arith.constant 0 : index
    %c0_40 = arith.constant 0 : index
    %59 = vector.load %arg4[%c1, %c0_39, %c0_40] : memref<24x32x8xbf16, #tpu.memory_space<vmem>>, vector<1x32x8xbf16>
    %60 = vector.shape_cast %59 : vector<1x32x8xbf16> to vector<32x8xbf16>
    %cst_41 = arith.constant dense<0.000000e+00> : vector<16x8xf32>
    %61 = tpu.matmul %16, %60, %cst_41 {dimension_numbers = #tpu.dot_dimension_numbers<[1], [0], [0], [1], [0, 0, 1, 1], [], []>} : vector<16x32xbf16>, vector<32x8xbf16>, vector<16x8xf32> -> vector<16x8xf32>
    %c1_42 = arith.constant 1 : index
    %c0_43 = arith.constant 0 : index
    %c0_44 = arith.constant 0 : index
    %62 = vector.load %arg5[%c1_42, %c0_43, %c0_44] : memref<24x1x8xf32, #tpu.memory_space<vmem>>, vector<1x1x8xf32>
    %63 = vector.shape_cast %62 : vector<1x1x8xf32> to vector<1x8xf32>
    %64 = vector.broadcast %63 : vector<1x8xf32> to vector<16x8xf32>
    %65 = arith.addf %61, %64 : vector<16x8xf32>
    %c5 = arith.constant 5 : index
    %c0_45 = arith.constant 0 : index
    %c0_46 = arith.constant 0 : index
    %66 = vector.load %arg4[%c5, %c0_45, %c0_46] : memref<24x32x8xbf16, #tpu.memory_space<vmem>>, vector<1x32x8xbf16>
    %67 = vector.shape_cast %66 : vector<1x32x8xbf16> to vector<32x8xbf16>
    %cst_47 = arith.constant dense<0.000000e+00> : vector<16x8xf32>
    %68 = tpu.matmul %16, %67, %cst_47 {dimension_numbers = #tpu.dot_dimension_numbers<[1], [0], [0], [1], [0, 0, 1, 1], [], []>} : vector<16x32xbf16>, vector<32x8xbf16>, vector<16x8xf32> -> vector<16x8xf32>
    %c5_48 = arith.constant 5 : index
    %c0_49 = arith.constant 0 : index
    %c0_50 = arith.constant 0 : index
    %69 = vector.load %arg5[%c5_48, %c0_49, %c0_50] : memref<24x1x8xf32, #tpu.memory_space<vmem>>, vector<1x1x8xf32>
    %70 = vector.shape_cast %69 : vector<1x1x8xf32> to vector<1x8xf32>
    %71 = vector.broadcast %70 : vector<1x8xf32> to vector<16x8xf32>
    %72 = arith.addf %68, %71 : vector<16x8xf32>
    %c9 = arith.constant 9 : index
    %c0_51 = arith.constant 0 : index
    %c0_52 = arith.constant 0 : index
    %73 = vector.load %arg4[%c9, %c0_51, %c0_52] : memref<24x32x8xbf16, #tpu.memory_space<vmem>>, vector<1x32x8xbf16>
    %74 = vector.shape_cast %73 : vector<1x32x8xbf16> to vector<32x8xbf16>
    %cst_53 = arith.constant dense<0.000000e+00> : vector<16x8xf32>
    %75 = tpu.matmul %16, %74, %cst_53 {dimension_numbers = #tpu.dot_dimension_numbers<[1], [0], [0], [1], [0, 0, 1, 1], [], []>} : vector<16x32xbf16>, vector<32x8xbf16>, vector<16x8xf32> -> vector<16x8xf32>
    %c9_54 = arith.constant 9 : index
    %c0_55 = arith.constant 0 : index
    %c0_56 = arith.constant 0 : index
    %76 = vector.load %arg5[%c9_54, %c0_55, %c0_56] : memref<24x1x8xf32, #tpu.memory_space<vmem>>, vector<1x1x8xf32>
    %77 = vector.shape_cast %76 : vector<1x1x8xf32> to vector<1x8xf32>
    %78 = vector.broadcast %77 : vector<1x8xf32> to vector<16x8xf32>
    %79 = arith.addf %75, %78 : vector<16x8xf32>
    %cst_57 = arith.constant dense<0.000000e+00> : vector<16x16xf32>
    %80 = tpu.matmul %65, %72, %cst_57 {dimension_numbers = #tpu.dot_dimension_numbers<[1], [1], [0], [0], [0, 0, 1, 0], [], []>} : vector<16x8xf32>, vector<16x8xf32>, vector<16x16xf32> -> vector<16x16xf32>
    %cst_58 = arith.constant 0.353553385 : f32
    %81 = vector.broadcast %cst_58 : f32 to vector<16x16xf32>
    %82 = arith.mulf %80, %81 : vector<16x16xf32>
    %83 = arith.addf %82, %6 : vector<16x16xf32>
    %cst_59 = arith.constant dense<0xFF800000> : vector<16xf32>
    %84 = vector.multi_reduction <maximumf>, %83, %cst_59 [1] : vector<16x16xf32> to vector<16xf32>
    %85 = vector.shape_cast %84 : vector<16xf32> to vector<16x1xf32>
    %86 = vector.broadcast %85 : vector<16x1xf32> to vector<16x16xf32>
    %87 = arith.subf %83, %86 : vector<16x16xf32>
    %88 = math.exp %87 : vector<16x16xf32>
    %cst_60 = arith.constant dense<0.000000e+00> : vector<16xf32>
    %89 = vector.multi_reduction <add>, %88, %cst_60 [1] : vector<16x16xf32> to vector<16xf32>
    %90 = vector.shape_cast %89 : vector<16xf32> to vector<16x1xf32>
    %91 = tpu.reciprocal %90 {approx = true} : vector<16x1xf32> -> vector<16x1xf32>
    %92 = vector.broadcast %91 : vector<16x1xf32> to vector<16x16xf32>
    %93 = arith.mulf %88, %92 : vector<16x16xf32>
    %cst_61 = arith.constant dense<0.000000e+00> : vector<16x8xf32>
    %94 = tpu.matmul %93, %79, %cst_61 {dimension_numbers = #tpu.dot_dimension_numbers<[1], [0], [0], [1], [0, 0, 1, 1], [], []>} : vector<16x16xf32>, vector<16x8xf32>, vector<16x8xf32> -> vector<16x8xf32>
    %95 = arith.truncf %94 : vector<16x8xf32> to vector<16x8xbf16>
    %c1_62 = arith.constant 1 : index
    %c0_63 = arith.constant 0 : index
    %c0_64 = arith.constant 0 : index
    %96 = vector.load %arg6[%c1_62, %c0_63, %c0_64] : memref<8x8x32xbf16, #tpu.memory_space<vmem>>, vector<1x8x32xbf16>
    %97 = vector.shape_cast %96 : vector<1x8x32xbf16> to vector<8x32xbf16>
    %cst_65 = arith.constant dense<0.000000e+00> : vector<16x32xf32>
    %98 = tpu.matmul %95, %97, %cst_65 {dimension_numbers = #tpu.dot_dimension_numbers<[1], [0], [0], [1], [0, 0, 1, 1], [], []>} : vector<16x8xbf16>, vector<8x32xbf16>, vector<16x32xf32> -> vector<16x32xf32>
    %99 = arith.addf %58, %98 : vector<16x32xf32>
    %c2 = arith.constant 2 : index
    %c0_66 = arith.constant 0 : index
    %c0_67 = arith.constant 0 : index
    %100 = vector.load %arg4[%c2, %c0_66, %c0_67] : memref<24x32x8xbf16, #tpu.memory_space<vmem>>, vector<1x32x8xbf16>
    %101 = vector.shape_cast %100 : vector<1x32x8xbf16> to vector<32x8xbf16>
    %cst_68 = arith.constant dense<0.000000e+00> : vector<16x8xf32>
    %102 = tpu.matmul %16, %101, %cst_68 {dimension_numbers = #tpu.dot_dimension_numbers<[1], [0], [0], [1], [0, 0, 1, 1], [], []>} : vector<16x32xbf16>, vector<32x8xbf16>, vector<16x8xf32> -> vector<16x8xf32>
    %c2_69 = arith.constant 2 : index
    %c0_70 = arith.constant 0 : index
    %c0_71 = arith.constant 0 : index
    %103 = vector.load %arg5[%c2_69, %c0_70, %c0_71] : memref<24x1x8xf32, #tpu.memory_space<vmem>>, vector<1x1x8xf32>
    %104 = vector.shape_cast %103 : vector<1x1x8xf32> to vector<1x8xf32>
    %105 = vector.broadcast %104 : vector<1x8xf32> to vector<16x8xf32>
    %106 = arith.addf %102, %105 : vector<16x8xf32>
    %c6 = arith.constant 6 : index
    %c0_72 = arith.constant 0 : index
    %c0_73 = arith.constant 0 : index
    %107 = vector.load %arg4[%c6, %c0_72, %c0_73] : memref<24x32x8xbf16, #tpu.memory_space<vmem>>, vector<1x32x8xbf16>
    %108 = vector.shape_cast %107 : vector<1x32x8xbf16> to vector<32x8xbf16>
    %cst_74 = arith.constant dense<0.000000e+00> : vector<16x8xf32>
    %109 = tpu.matmul %16, %108, %cst_74 {dimension_numbers = #tpu.dot_dimension_numbers<[1], [0], [0], [1], [0, 0, 1, 1], [], []>} : vector<16x32xbf16>, vector<32x8xbf16>, vector<16x8xf32> -> vector<16x8xf32>
    %c6_75 = arith.constant 6 : index
    %c0_76 = arith.constant 0 : index
    %c0_77 = arith.constant 0 : index
    %110 = vector.load %arg5[%c6_75, %c0_76, %c0_77] : memref<24x1x8xf32, #tpu.memory_space<vmem>>, vector<1x1x8xf32>
    %111 = vector.shape_cast %110 : vector<1x1x8xf32> to vector<1x8xf32>
    %112 = vector.broadcast %111 : vector<1x8xf32> to vector<16x8xf32>
    %113 = arith.addf %109, %112 : vector<16x8xf32>
    %c10 = arith.constant 10 : index
    %c0_78 = arith.constant 0 : index
    %c0_79 = arith.constant 0 : index
    %114 = vector.load %arg4[%c10, %c0_78, %c0_79] : memref<24x32x8xbf16, #tpu.memory_space<vmem>>, vector<1x32x8xbf16>
    %115 = vector.shape_cast %114 : vector<1x32x8xbf16> to vector<32x8xbf16>
    %cst_80 = arith.constant dense<0.000000e+00> : vector<16x8xf32>
    %116 = tpu.matmul %16, %115, %cst_80 {dimension_numbers = #tpu.dot_dimension_numbers<[1], [0], [0], [1], [0, 0, 1, 1], [], []>} : vector<16x32xbf16>, vector<32x8xbf16>, vector<16x8xf32> -> vector<16x8xf32>
    %c10_81 = arith.constant 10 : index
    %c0_82 = arith.constant 0 : index
    %c0_83 = arith.constant 0 : index
    %117 = vector.load %arg5[%c10_81, %c0_82, %c0_83] : memref<24x1x8xf32, #tpu.memory_space<vmem>>, vector<1x1x8xf32>
    %118 = vector.shape_cast %117 : vector<1x1x8xf32> to vector<1x8xf32>
    %119 = vector.broadcast %118 : vector<1x8xf32> to vector<16x8xf32>
    %120 = arith.addf %116, %119 : vector<16x8xf32>
    %cst_84 = arith.constant dense<0.000000e+00> : vector<16x16xf32>
    %121 = tpu.matmul %106, %113, %cst_84 {dimension_numbers = #tpu.dot_dimension_numbers<[1], [1], [0], [0], [0, 0, 1, 0], [], []>} : vector<16x8xf32>, vector<16x8xf32>, vector<16x16xf32> -> vector<16x16xf32>
    %cst_85 = arith.constant 0.353553385 : f32
    %122 = vector.broadcast %cst_85 : f32 to vector<16x16xf32>
    %123 = arith.mulf %121, %122 : vector<16x16xf32>
    %124 = arith.addf %123, %6 : vector<16x16xf32>
    %cst_86 = arith.constant dense<0xFF800000> : vector<16xf32>
    %125 = vector.multi_reduction <maximumf>, %124, %cst_86 [1] : vector<16x16xf32> to vector<16xf32>
    %126 = vector.shape_cast %125 : vector<16xf32> to vector<16x1xf32>
    %127 = vector.broadcast %126 : vector<16x1xf32> to vector<16x16xf32>
    %128 = arith.subf %124, %127 : vector<16x16xf32>
    %129 = math.exp %128 : vector<16x16xf32>
    %cst_87 = arith.constant dense<0.000000e+00> : vector<16xf32>
    %130 = vector.multi_reduction <add>, %129, %cst_87 [1] : vector<16x16xf32> to vector<16xf32>
    %131 = vector.shape_cast %130 : vector<16xf32> to vector<16x1xf32>
    %132 = tpu.reciprocal %131 {approx = true} : vector<16x1xf32> -> vector<16x1xf32>
    %133 = vector.broadcast %132 : vector<16x1xf32> to vector<16x16xf32>
    %134 = arith.mulf %129, %133 : vector<16x16xf32>
    %cst_88 = arith.constant dense<0.000000e+00> : vector<16x8xf32>
    %135 = tpu.matmul %134, %120, %cst_88 {dimension_numbers = #tpu.dot_dimension_numbers<[1], [0], [0], [1], [0, 0, 1, 1], [], []>} : vector<16x16xf32>, vector<16x8xf32>, vector<16x8xf32> -> vector<16x8xf32>
    %136 = arith.truncf %135 : vector<16x8xf32> to vector<16x8xbf16>
    %c2_89 = arith.constant 2 : index
    %c0_90 = arith.constant 0 : index
    %c0_91 = arith.constant 0 : index
    %137 = vector.load %arg6[%c2_89, %c0_90, %c0_91] : memref<8x8x32xbf16, #tpu.memory_space<vmem>>, vector<1x8x32xbf16>
    %138 = vector.shape_cast %137 : vector<1x8x32xbf16> to vector<8x32xbf16>
    %cst_92 = arith.constant dense<0.000000e+00> : vector<16x32xf32>
    %139 = tpu.matmul %136, %138, %cst_92 {dimension_numbers = #tpu.dot_dimension_numbers<[1], [0], [0], [1], [0, 0, 1, 1], [], []>} : vector<16x8xbf16>, vector<8x32xbf16>, vector<16x32xf32> -> vector<16x32xf32>
    %140 = arith.addf %99, %139 : vector<16x32xf32>
    %c3 = arith.constant 3 : index
    %c0_93 = arith.constant 0 : index
    %c0_94 = arith.constant 0 : index
    %141 = vector.load %arg4[%c3, %c0_93, %c0_94] : memref<24x32x8xbf16, #tpu.memory_space<vmem>>, vector<1x32x8xbf16>
    %142 = vector.shape_cast %141 : vector<1x32x8xbf16> to vector<32x8xbf16>
    %cst_95 = arith.constant dense<0.000000e+00> : vector<16x8xf32>
    %143 = tpu.matmul %16, %142, %cst_95 {dimension_numbers = #tpu.dot_dimension_numbers<[1], [0], [0], [1], [0, 0, 1, 1], [], []>} : vector<16x32xbf16>, vector<32x8xbf16>, vector<16x8xf32> -> vector<16x8xf32>
    %c3_96 = arith.constant 3 : index
    %c0_97 = arith.constant 0 : index
    %c0_98 = arith.constant 0 : index
    %144 = vector.load %arg5[%c3_96, %c0_97, %c0_98] : memref<24x1x8xf32, #tpu.memory_space<vmem>>, vector<1x1x8xf32>
    %145 = vector.shape_cast %144 : vector<1x1x8xf32> to vector<1x8xf32>
    %146 = vector.broadcast %145 : vector<1x8xf32> to vector<16x8xf32>
    %147 = arith.addf %143, %146 : vector<16x8xf32>
    %c7 = arith.constant 7 : index
    %c0_99 = arith.constant 0 : index
    %c0_100 = arith.constant 0 : index
    %148 = vector.load %arg4[%c7, %c0_99, %c0_100] : memref<24x32x8xbf16, #tpu.memory_space<vmem>>, vector<1x32x8xbf16>
    %149 = vector.shape_cast %148 : vector<1x32x8xbf16> to vector<32x8xbf16>
    %cst_101 = arith.constant dense<0.000000e+00> : vector<16x8xf32>
    %150 = tpu.matmul %16, %149, %cst_101 {dimension_numbers = #tpu.dot_dimension_numbers<[1], [0], [0], [1], [0, 0, 1, 1], [], []>} : vector<16x32xbf16>, vector<32x8xbf16>, vector<16x8xf32> -> vector<16x8xf32>
    %c7_102 = arith.constant 7 : index
    %c0_103 = arith.constant 0 : index
    %c0_104 = arith.constant 0 : index
    %151 = vector.load %arg5[%c7_102, %c0_103, %c0_104] : memref<24x1x8xf32, #tpu.memory_space<vmem>>, vector<1x1x8xf32>
    %152 = vector.shape_cast %151 : vector<1x1x8xf32> to vector<1x8xf32>
    %153 = vector.broadcast %152 : vector<1x8xf32> to vector<16x8xf32>
    %154 = arith.addf %150, %153 : vector<16x8xf32>
    %c11 = arith.constant 11 : index
    %c0_105 = arith.constant 0 : index
    %c0_106 = arith.constant 0 : index
    %155 = vector.load %arg4[%c11, %c0_105, %c0_106] : memref<24x32x8xbf16, #tpu.memory_space<vmem>>, vector<1x32x8xbf16>
    %156 = vector.shape_cast %155 : vector<1x32x8xbf16> to vector<32x8xbf16>
    %cst_107 = arith.constant dense<0.000000e+00> : vector<16x8xf32>
    %157 = tpu.matmul %16, %156, %cst_107 {dimension_numbers = #tpu.dot_dimension_numbers<[1], [0], [0], [1], [0, 0, 1, 1], [], []>} : vector<16x32xbf16>, vector<32x8xbf16>, vector<16x8xf32> -> vector<16x8xf32>
    %c11_108 = arith.constant 11 : index
    %c0_109 = arith.constant 0 : index
    %c0_110 = arith.constant 0 : index
    %158 = vector.load %arg5[%c11_108, %c0_109, %c0_110] : memref<24x1x8xf32, #tpu.memory_space<vmem>>, vector<1x1x8xf32>
    %159 = vector.shape_cast %158 : vector<1x1x8xf32> to vector<1x8xf32>
    %160 = vector.broadcast %159 : vector<1x8xf32> to vector<16x8xf32>
    %161 = arith.addf %157, %160 : vector<16x8xf32>
    %cst_111 = arith.constant dense<0.000000e+00> : vector<16x16xf32>
    %162 = tpu.matmul %147, %154, %cst_111 {dimension_numbers = #tpu.dot_dimension_numbers<[1], [1], [0], [0], [0, 0, 1, 0], [], []>} : vector<16x8xf32>, vector<16x8xf32>, vector<16x16xf32> -> vector<16x16xf32>
    %cst_112 = arith.constant 0.353553385 : f32
    %163 = vector.broadcast %cst_112 : f32 to vector<16x16xf32>
    %164 = arith.mulf %162, %163 : vector<16x16xf32>
    %165 = arith.addf %164, %6 : vector<16x16xf32>
    %cst_113 = arith.constant dense<0xFF800000> : vector<16xf32>
    %166 = vector.multi_reduction <maximumf>, %165, %cst_113 [1] : vector<16x16xf32> to vector<16xf32>
    %167 = vector.shape_cast %166 : vector<16xf32> to vector<16x1xf32>
    %168 = vector.broadcast %167 : vector<16x1xf32> to vector<16x16xf32>
    %169 = arith.subf %165, %168 : vector<16x16xf32>
    %170 = math.exp %169 : vector<16x16xf32>
    %cst_114 = arith.constant dense<0.000000e+00> : vector<16xf32>
    %171 = vector.multi_reduction <add>, %170, %cst_114 [1] : vector<16x16xf32> to vector<16xf32>
    %172 = vector.shape_cast %171 : vector<16xf32> to vector<16x1xf32>
    %173 = tpu.reciprocal %172 {approx = true} : vector<16x1xf32> -> vector<16x1xf32>
    %174 = vector.broadcast %173 : vector<16x1xf32> to vector<16x16xf32>
    %175 = arith.mulf %170, %174 : vector<16x16xf32>
    %cst_115 = arith.constant dense<0.000000e+00> : vector<16x8xf32>
    %176 = tpu.matmul %175, %161, %cst_115 {dimension_numbers = #tpu.dot_dimension_numbers<[1], [0], [0], [1], [0, 0, 1, 1], [], []>} : vector<16x16xf32>, vector<16x8xf32>, vector<16x8xf32> -> vector<16x8xf32>
    %177 = arith.truncf %176 : vector<16x8xf32> to vector<16x8xbf16>
    %c3_116 = arith.constant 3 : index
    %c0_117 = arith.constant 0 : index
    %c0_118 = arith.constant 0 : index
    %178 = vector.load %arg6[%c3_116, %c0_117, %c0_118] : memref<8x8x32xbf16, #tpu.memory_space<vmem>>, vector<1x8x32xbf16>
    %179 = vector.shape_cast %178 : vector<1x8x32xbf16> to vector<8x32xbf16>
    %cst_119 = arith.constant dense<0.000000e+00> : vector<16x32xf32>
    %180 = tpu.matmul %177, %179, %cst_119 {dimension_numbers = #tpu.dot_dimension_numbers<[1], [0], [0], [1], [0, 0, 1, 1], [], []>} : vector<16x8xbf16>, vector<8x32xbf16>, vector<16x32xf32> -> vector<16x32xf32>
    %181 = arith.addf %140, %180 : vector<16x32xf32>
    %182 = vector.broadcast %9 : vector<1x32xf32> to vector<16x32xf32>
    %183 = arith.addf %181, %182 : vector<16x32xf32>
    %184 = arith.addf %5, %183 : vector<16x32xf32>
    %cst_120 = arith.constant dense<0.000000e+00> : vector<16xf32>
    %185 = vector.multi_reduction <add>, %184, %cst_120 [1] : vector<16x32xf32> to vector<16xf32>
    %186 = vector.shape_cast %185 : vector<16xf32> to vector<16x1xf32>
    %cst_121 = arith.constant 3.200000e+01 : f32
    %187 = vector.broadcast %cst_121 : f32 to vector<16x1xf32>
    %188 = arith.divf %186, %187 : vector<16x1xf32>
    %189 = vector.broadcast %188 : vector<16x1xf32> to vector<16x32xf32>
    %190 = arith.subf %184, %189 : vector<16x32xf32>
    %191 = arith.mulf %190, %190 : vector<16x32xf32>
    %cst_122 = arith.constant dense<0.000000e+00> : vector<16xf32>
    %192 = vector.multi_reduction <add>, %191, %cst_122 [1] : vector<16x32xf32> to vector<16xf32>
    %193 = vector.shape_cast %192 : vector<16xf32> to vector<16x1xf32>
    %cst_123 = arith.constant 3.200000e+01 : f32
    %194 = vector.broadcast %cst_123 : f32 to vector<16x1xf32>
    %195 = arith.divf %193, %194 : vector<16x1xf32>
    %cst_124 = arith.constant 9.99999974E-6 : f32
    %196 = vector.broadcast %cst_124 : f32 to vector<16x1xf32>
    %197 = arith.addf %195, %196 : vector<16x1xf32>
    %198 = math.rsqrt %197 : vector<16x1xf32>
    %199 = vector.broadcast %198 : vector<16x1xf32> to vector<16x32xf32>
    %200 = arith.mulf %190, %199 : vector<16x32xf32>
    %201 = vector.broadcast %12 : vector<1x32xf32> to vector<16x32xf32>
    %202 = arith.mulf %200, %201 : vector<16x32xf32>
    %203 = vector.broadcast %13 : vector<1x32xf32> to vector<16x32xf32>
    %204 = arith.addf %202, %203 : vector<16x32xf32>
    %205 = arith.truncf %204 : vector<16x32xf32> to vector<16x32xbf16>
    %c0_125 = arith.constant 0 : index
    %c0_126 = arith.constant 0 : index
    %c0_127 = arith.constant 0 : index
    %206 = vector.load %arg7[%c0_125, %c0_126, %c0_127] : memref<2x32x64xbf16, #tpu.memory_space<vmem>>, vector<1x32x64xbf16>
    %207 = vector.shape_cast %206 : vector<1x32x64xbf16> to vector<32x64xbf16>
    %cst_128 = arith.constant dense<0.000000e+00> : vector<16x64xf32>
    %208 = tpu.matmul %205, %207, %cst_128 {dimension_numbers = #tpu.dot_dimension_numbers<[1], [0], [0], [1], [0, 0, 1, 1], [], []>} : vector<16x32xbf16>, vector<32x64xbf16>, vector<16x64xf32> -> vector<16x64xf32>
    %209 = vector.broadcast %10 : vector<1x64xf32> to vector<16x64xf32>
    %210 = arith.addf %208, %209 : vector<16x64xf32>
    %cst_129 = arith.constant 0.000000e+00 : f32
    %211 = vector.broadcast %cst_129 : f32 to vector<16x64xf32>
    %212 = arith.maximumf %210, %211 : vector<16x64xf32>
    %213 = arith.truncf %212 : vector<16x64xf32> to vector<16x64xbf16>
    %c0_130 = arith.constant 0 : index
    %c0_131 = arith.constant 0 : index
    %c0_132 = arith.constant 0 : index
    %214 = vector.load %arg8[%c0_130, %c0_131, %c0_132] : memref<2x64x32xbf16, #tpu.memory_space<vmem>>, vector<1x64x32xbf16>
    %215 = vector.shape_cast %214 : vector<1x64x32xbf16> to vector<64x32xbf16>
    %cst_133 = arith.constant dense<0.000000e+00> : vector<16x32xf32>
    %216 = tpu.matmul %213, %215, %cst_133 {dimension_numbers = #tpu.dot_dimension_numbers<[1], [0], [0], [1], [0, 0, 1, 1], [], []>} : vector<16x64xbf16>, vector<64x32xbf16>, vector<16x32xf32> -> vector<16x32xf32>
    %217 = vector.broadcast %11 : vector<1x32xf32> to vector<16x32xf32>
    %218 = arith.addf %216, %217 : vector<16x32xf32>
    %219 = arith.addf %204, %218 : vector<16x32xf32>
    %cst_134 = arith.constant dense<0.000000e+00> : vector<16xf32>
    %220 = vector.multi_reduction <add>, %219, %cst_134 [1] : vector<16x32xf32> to vector<16xf32>
    %221 = vector.shape_cast %220 : vector<16xf32> to vector<16x1xf32>
    %cst_135 = arith.constant 3.200000e+01 : f32
    %222 = vector.broadcast %cst_135 : f32 to vector<16x1xf32>
    %223 = arith.divf %221, %222 : vector<16x1xf32>
    %224 = vector.broadcast %223 : vector<16x1xf32> to vector<16x32xf32>
    %225 = arith.subf %219, %224 : vector<16x32xf32>
    %226 = arith.mulf %225, %225 : vector<16x32xf32>
    %cst_136 = arith.constant dense<0.000000e+00> : vector<16xf32>
    %227 = vector.multi_reduction <add>, %226, %cst_136 [1] : vector<16x32xf32> to vector<16xf32>
    %228 = vector.shape_cast %227 : vector<16xf32> to vector<16x1xf32>
    %cst_137 = arith.constant 3.200000e+01 : f32
    %229 = vector.broadcast %cst_137 : f32 to vector<16x1xf32>
    %230 = arith.divf %228, %229 : vector<16x1xf32>
    %cst_138 = arith.constant 9.99999974E-6 : f32
    %231 = vector.broadcast %cst_138 : f32 to vector<16x1xf32>
    %232 = arith.addf %230, %231 : vector<16x1xf32>
    %233 = math.rsqrt %232 : vector<16x1xf32>
    %234 = vector.broadcast %233 : vector<16x1xf32> to vector<16x32xf32>
    %235 = arith.mulf %225, %234 : vector<16x32xf32>
    %236 = vector.broadcast %14 : vector<1x32xf32> to vector<16x32xf32>
    %237 = arith.mulf %235, %236 : vector<16x32xf32>
    %238 = vector.broadcast %15 : vector<1x32xf32> to vector<16x32xf32>
    %239 = arith.addf %237, %238 : vector<16x32xf32>
    %c1_139 = arith.constant 1 : index
    %c0_140 = arith.constant 0 : index
    %c0_141 = arith.constant 0 : index
    %240 = vector.load %arg9[%c1_139, %c0_140, %c0_141] : memref<2x8x64xf32, #tpu.memory_space<vmem>>, vector<1x8x64xf32>
    %241 = vector.shape_cast %240 : vector<1x8x64xf32> to vector<8x64xf32>
    %242 = vector.extract_strided_slice %241 {offsets = [0, 0], sizes = [1, 32], strides = [1, 1]} : vector<8x64xf32> to vector<1x32xf32>
    %243 = vector.extract_strided_slice %241 {offsets = [1, 0], sizes = [1, 64], strides = [1, 1]} : vector<8x64xf32> to vector<1x64xf32>
    %244 = vector.extract_strided_slice %241 {offsets = [2, 0], sizes = [1, 32], strides = [1, 1]} : vector<8x64xf32> to vector<1x32xf32>
    %245 = vector.extract_strided_slice %241 {offsets = [3, 0], sizes = [1, 32], strides = [1, 1]} : vector<8x64xf32> to vector<1x32xf32>
    %246 = vector.extract_strided_slice %241 {offsets = [4, 0], sizes = [1, 32], strides = [1, 1]} : vector<8x64xf32> to vector<1x32xf32>
    %247 = vector.extract_strided_slice %241 {offsets = [5, 0], sizes = [1, 32], strides = [1, 1]} : vector<8x64xf32> to vector<1x32xf32>
    %248 = vector.extract_strided_slice %241 {offsets = [6, 0], sizes = [1, 32], strides = [1, 1]} : vector<8x64xf32> to vector<1x32xf32>
    %249 = arith.truncf %239 : vector<16x32xf32> to vector<16x32xbf16>
    %cst_142 = arith.constant 0.000000e+00 : f32
    %250 = vector.broadcast %cst_142 : f32 to vector<16x32xf32>
    %c12 = arith.constant 12 : index
    %c0_143 = arith.constant 0 : index
    %c0_144 = arith.constant 0 : index
    %251 = vector.load %arg4[%c12, %c0_143, %c0_144] : memref<24x32x8xbf16, #tpu.memory_space<vmem>>, vector<1x32x8xbf16>
    %252 = vector.shape_cast %251 : vector<1x32x8xbf16> to vector<32x8xbf16>
    %cst_145 = arith.constant dense<0.000000e+00> : vector<16x8xf32>
    %253 = tpu.matmul %249, %252, %cst_145 {dimension_numbers = #tpu.dot_dimension_numbers<[1], [0], [0], [1], [0, 0, 1, 1], [], []>} : vector<16x32xbf16>, vector<32x8xbf16>, vector<16x8xf32> -> vector<16x8xf32>
    %c12_146 = arith.constant 12 : index
    %c0_147 = arith.constant 0 : index
    %c0_148 = arith.constant 0 : index
    %254 = vector.load %arg5[%c12_146, %c0_147, %c0_148] : memref<24x1x8xf32, #tpu.memory_space<vmem>>, vector<1x1x8xf32>
    %255 = vector.shape_cast %254 : vector<1x1x8xf32> to vector<1x8xf32>
    %256 = vector.broadcast %255 : vector<1x8xf32> to vector<16x8xf32>
    %257 = arith.addf %253, %256 : vector<16x8xf32>
    %c16 = arith.constant 16 : index
    %c0_149 = arith.constant 0 : index
    %c0_150 = arith.constant 0 : index
    %258 = vector.load %arg4[%c16, %c0_149, %c0_150] : memref<24x32x8xbf16, #tpu.memory_space<vmem>>, vector<1x32x8xbf16>
    %259 = vector.shape_cast %258 : vector<1x32x8xbf16> to vector<32x8xbf16>
    %cst_151 = arith.constant dense<0.000000e+00> : vector<16x8xf32>
    %260 = tpu.matmul %249, %259, %cst_151 {dimension_numbers = #tpu.dot_dimension_numbers<[1], [0], [0], [1], [0, 0, 1, 1], [], []>} : vector<16x32xbf16>, vector<32x8xbf16>, vector<16x8xf32> -> vector<16x8xf32>
    %c16_152 = arith.constant 16 : index
    %c0_153 = arith.constant 0 : index
    %c0_154 = arith.constant 0 : index
    %261 = vector.load %arg5[%c16_152, %c0_153, %c0_154] : memref<24x1x8xf32, #tpu.memory_space<vmem>>, vector<1x1x8xf32>
    %262 = vector.shape_cast %261 : vector<1x1x8xf32> to vector<1x8xf32>
    %263 = vector.broadcast %262 : vector<1x8xf32> to vector<16x8xf32>
    %264 = arith.addf %260, %263 : vector<16x8xf32>
    %c20 = arith.constant 20 : index
    %c0_155 = arith.constant 0 : index
    %c0_156 = arith.constant 0 : index
    %265 = vector.load %arg4[%c20, %c0_155, %c0_156] : memref<24x32x8xbf16, #tpu.memory_space<vmem>>, vector<1x32x8xbf16>
    %266 = vector.shape_cast %265 : vector<1x32x8xbf16> to vector<32x8xbf16>
    %cst_157 = arith.constant dense<0.000000e+00> : vector<16x8xf32>
    %267 = tpu.matmul %249, %266, %cst_157 {dimension_numbers = #tpu.dot_dimension_numbers<[1], [0], [0], [1], [0, 0, 1, 1], [], []>} : vector<16x32xbf16>, vector<32x8xbf16>, vector<16x8xf32> -> vector<16x8xf32>
    %c20_158 = arith.constant 20 : index
    %c0_159 = arith.constant 0 : index
    %c0_160 = arith.constant 0 : index
    %268 = vector.load %arg5[%c20_158, %c0_159, %c0_160] : memref<24x1x8xf32, #tpu.memory_space<vmem>>, vector<1x1x8xf32>
    %269 = vector.shape_cast %268 : vector<1x1x8xf32> to vector<1x8xf32>
    %270 = vector.broadcast %269 : vector<1x8xf32> to vector<16x8xf32>
    %271 = arith.addf %267, %270 : vector<16x8xf32>
    %cst_161 = arith.constant dense<0.000000e+00> : vector<16x16xf32>
    %272 = tpu.matmul %257, %264, %cst_161 {dimension_numbers = #tpu.dot_dimension_numbers<[1], [1], [0], [0], [0, 0, 1, 0], [], []>} : vector<16x8xf32>, vector<16x8xf32>, vector<16x16xf32> -> vector<16x16xf32>
    %cst_162 = arith.constant 0.353553385 : f32
    %273 = vector.broadcast %cst_162 : f32 to vector<16x16xf32>
    %274 = arith.mulf %272, %273 : vector<16x16xf32>
    %275 = arith.addf %274, %6 : vector<16x16xf32>
    %cst_163 = arith.constant dense<0xFF800000> : vector<16xf32>
    %276 = vector.multi_reduction <maximumf>, %275, %cst_163 [1] : vector<16x16xf32> to vector<16xf32>
    %277 = vector.shape_cast %276 : vector<16xf32> to vector<16x1xf32>
    %278 = vector.broadcast %277 : vector<16x1xf32> to vector<16x16xf32>
    %279 = arith.subf %275, %278 : vector<16x16xf32>
    %280 = math.exp %279 : vector<16x16xf32>
    %cst_164 = arith.constant dense<0.000000e+00> : vector<16xf32>
    %281 = vector.multi_reduction <add>, %280, %cst_164 [1] : vector<16x16xf32> to vector<16xf32>
    %282 = vector.shape_cast %281 : vector<16xf32> to vector<16x1xf32>
    %283 = tpu.reciprocal %282 {approx = true} : vector<16x1xf32> -> vector<16x1xf32>
    %284 = vector.broadcast %283 : vector<16x1xf32> to vector<16x16xf32>
    %285 = arith.mulf %280, %284 : vector<16x16xf32>
    %cst_165 = arith.constant dense<0.000000e+00> : vector<16x8xf32>
    %286 = tpu.matmul %285, %271, %cst_165 {dimension_numbers = #tpu.dot_dimension_numbers<[1], [0], [0], [1], [0, 0, 1, 1], [], []>} : vector<16x16xf32>, vector<16x8xf32>, vector<16x8xf32> -> vector<16x8xf32>
    %287 = arith.truncf %286 : vector<16x8xf32> to vector<16x8xbf16>
    %c4_166 = arith.constant 4 : index
    %c0_167 = arith.constant 0 : index
    %c0_168 = arith.constant 0 : index
    %288 = vector.load %arg6[%c4_166, %c0_167, %c0_168] : memref<8x8x32xbf16, #tpu.memory_space<vmem>>, vector<1x8x32xbf16>
    %289 = vector.shape_cast %288 : vector<1x8x32xbf16> to vector<8x32xbf16>
    %cst_169 = arith.constant dense<0.000000e+00> : vector<16x32xf32>
    %290 = tpu.matmul %287, %289, %cst_169 {dimension_numbers = #tpu.dot_dimension_numbers<[1], [0], [0], [1], [0, 0, 1, 1], [], []>} : vector<16x8xbf16>, vector<8x32xbf16>, vector<16x32xf32> -> vector<16x32xf32>
    %291 = arith.addf %250, %290 : vector<16x32xf32>
    %c13 = arith.constant 13 : index
    %c0_170 = arith.constant 0 : index
    %c0_171 = arith.constant 0 : index
    %292 = vector.load %arg4[%c13, %c0_170, %c0_171] : memref<24x32x8xbf16, #tpu.memory_space<vmem>>, vector<1x32x8xbf16>
    %293 = vector.shape_cast %292 : vector<1x32x8xbf16> to vector<32x8xbf16>
    %cst_172 = arith.constant dense<0.000000e+00> : vector<16x8xf32>
    %294 = tpu.matmul %249, %293, %cst_172 {dimension_numbers = #tpu.dot_dimension_numbers<[1], [0], [0], [1], [0, 0, 1, 1], [], []>} : vector<16x32xbf16>, vector<32x8xbf16>, vector<16x8xf32> -> vector<16x8xf32>
    %c13_173 = arith.constant 13 : index
    %c0_174 = arith.constant 0 : index
    %c0_175 = arith.constant 0 : index
    %295 = vector.load %arg5[%c13_173, %c0_174, %c0_175] : memref<24x1x8xf32, #tpu.memory_space<vmem>>, vector<1x1x8xf32>
    %296 = vector.shape_cast %295 : vector<1x1x8xf32> to vector<1x8xf32>
    %297 = vector.broadcast %296 : vector<1x8xf32> to vector<16x8xf32>
    %298 = arith.addf %294, %297 : vector<16x8xf32>
    %c17 = arith.constant 17 : index
    %c0_176 = arith.constant 0 : index
    %c0_177 = arith.constant 0 : index
    %299 = vector.load %arg4[%c17, %c0_176, %c0_177] : memref<24x32x8xbf16, #tpu.memory_space<vmem>>, vector<1x32x8xbf16>
    %300 = vector.shape_cast %299 : vector<1x32x8xbf16> to vector<32x8xbf16>
    %cst_178 = arith.constant dense<0.000000e+00> : vector<16x8xf32>
    %301 = tpu.matmul %249, %300, %cst_178 {dimension_numbers = #tpu.dot_dimension_numbers<[1], [0], [0], [1], [0, 0, 1, 1], [], []>} : vector<16x32xbf16>, vector<32x8xbf16>, vector<16x8xf32> -> vector<16x8xf32>
    %c17_179 = arith.constant 17 : index
    %c0_180 = arith.constant 0 : index
    %c0_181 = arith.constant 0 : index
    %302 = vector.load %arg5[%c17_179, %c0_180, %c0_181] : memref<24x1x8xf32, #tpu.memory_space<vmem>>, vector<1x1x8xf32>
    %303 = vector.shape_cast %302 : vector<1x1x8xf32> to vector<1x8xf32>
    %304 = vector.broadcast %303 : vector<1x8xf32> to vector<16x8xf32>
    %305 = arith.addf %301, %304 : vector<16x8xf32>
    %c21 = arith.constant 21 : index
    %c0_182 = arith.constant 0 : index
    %c0_183 = arith.constant 0 : index
    %306 = vector.load %arg4[%c21, %c0_182, %c0_183] : memref<24x32x8xbf16, #tpu.memory_space<vmem>>, vector<1x32x8xbf16>
    %307 = vector.shape_cast %306 : vector<1x32x8xbf16> to vector<32x8xbf16>
    %cst_184 = arith.constant dense<0.000000e+00> : vector<16x8xf32>
    %308 = tpu.matmul %249, %307, %cst_184 {dimension_numbers = #tpu.dot_dimension_numbers<[1], [0], [0], [1], [0, 0, 1, 1], [], []>} : vector<16x32xbf16>, vector<32x8xbf16>, vector<16x8xf32> -> vector<16x8xf32>
    %c21_185 = arith.constant 21 : index
    %c0_186 = arith.constant 0 : index
    %c0_187 = arith.constant 0 : index
    %309 = vector.load %arg5[%c21_185, %c0_186, %c0_187] : memref<24x1x8xf32, #tpu.memory_space<vmem>>, vector<1x1x8xf32>
    %310 = vector.shape_cast %309 : vector<1x1x8xf32> to vector<1x8xf32>
    %311 = vector.broadcast %310 : vector<1x8xf32> to vector<16x8xf32>
    %312 = arith.addf %308, %311 : vector<16x8xf32>
    %cst_188 = arith.constant dense<0.000000e+00> : vector<16x16xf32>
    %313 = tpu.matmul %298, %305, %cst_188 {dimension_numbers = #tpu.dot_dimension_numbers<[1], [1], [0], [0], [0, 0, 1, 0], [], []>} : vector<16x8xf32>, vector<16x8xf32>, vector<16x16xf32> -> vector<16x16xf32>
    %cst_189 = arith.constant 0.353553385 : f32
    %314 = vector.broadcast %cst_189 : f32 to vector<16x16xf32>
    %315 = arith.mulf %313, %314 : vector<16x16xf32>
    %316 = arith.addf %315, %6 : vector<16x16xf32>
    %cst_190 = arith.constant dense<0xFF800000> : vector<16xf32>
    %317 = vector.multi_reduction <maximumf>, %316, %cst_190 [1] : vector<16x16xf32> to vector<16xf32>
    %318 = vector.shape_cast %317 : vector<16xf32> to vector<16x1xf32>
    %319 = vector.broadcast %318 : vector<16x1xf32> to vector<16x16xf32>
    %320 = arith.subf %316, %319 : vector<16x16xf32>
    %321 = math.exp %320 : vector<16x16xf32>
    %cst_191 = arith.constant dense<0.000000e+00> : vector<16xf32>
    %322 = vector.multi_reduction <add>, %321, %cst_191 [1] : vector<16x16xf32> to vector<16xf32>
    %323 = vector.shape_cast %322 : vector<16xf32> to vector<16x1xf32>
    %324 = tpu.reciprocal %323 {approx = true} : vector<16x1xf32> -> vector<16x1xf32>
    %325 = vector.broadcast %324 : vector<16x1xf32> to vector<16x16xf32>
    %326 = arith.mulf %321, %325 : vector<16x16xf32>
    %cst_192 = arith.constant dense<0.000000e+00> : vector<16x8xf32>
    %327 = tpu.matmul %326, %312, %cst_192 {dimension_numbers = #tpu.dot_dimension_numbers<[1], [0], [0], [1], [0, 0, 1, 1], [], []>} : vector<16x16xf32>, vector<16x8xf32>, vector<16x8xf32> -> vector<16x8xf32>
    %328 = arith.truncf %327 : vector<16x8xf32> to vector<16x8xbf16>
    %c5_193 = arith.constant 5 : index
    %c0_194 = arith.constant 0 : index
    %c0_195 = arith.constant 0 : index
    %329 = vector.load %arg6[%c5_193, %c0_194, %c0_195] : memref<8x8x32xbf16, #tpu.memory_space<vmem>>, vector<1x8x32xbf16>
    %330 = vector.shape_cast %329 : vector<1x8x32xbf16> to vector<8x32xbf16>
    %cst_196 = arith.constant dense<0.000000e+00> : vector<16x32xf32>
    %331 = tpu.matmul %328, %330, %cst_196 {dimension_numbers = #tpu.dot_dimension_numbers<[1], [0], [0], [1], [0, 0, 1, 1], [], []>} : vector<16x8xbf16>, vector<8x32xbf16>, vector<16x32xf32> -> vector<16x32xf32>
    %332 = arith.addf %291, %331 : vector<16x32xf32>
    %c14 = arith.constant 14 : index
    %c0_197 = arith.constant 0 : index
    %c0_198 = arith.constant 0 : index
    %333 = vector.load %arg4[%c14, %c0_197, %c0_198] : memref<24x32x8xbf16, #tpu.memory_space<vmem>>, vector<1x32x8xbf16>
    %334 = vector.shape_cast %333 : vector<1x32x8xbf16> to vector<32x8xbf16>
    %cst_199 = arith.constant dense<0.000000e+00> : vector<16x8xf32>
    %335 = tpu.matmul %249, %334, %cst_199 {dimension_numbers = #tpu.dot_dimension_numbers<[1], [0], [0], [1], [0, 0, 1, 1], [], []>} : vector<16x32xbf16>, vector<32x8xbf16>, vector<16x8xf32> -> vector<16x8xf32>
    %c14_200 = arith.constant 14 : index
    %c0_201 = arith.constant 0 : index
    %c0_202 = arith.constant 0 : index
    %336 = vector.load %arg5[%c14_200, %c0_201, %c0_202] : memref<24x1x8xf32, #tpu.memory_space<vmem>>, vector<1x1x8xf32>
    %337 = vector.shape_cast %336 : vector<1x1x8xf32> to vector<1x8xf32>
    %338 = vector.broadcast %337 : vector<1x8xf32> to vector<16x8xf32>
    %339 = arith.addf %335, %338 : vector<16x8xf32>
    %c18 = arith.constant 18 : index
    %c0_203 = arith.constant 0 : index
    %c0_204 = arith.constant 0 : index
    %340 = vector.load %arg4[%c18, %c0_203, %c0_204] : memref<24x32x8xbf16, #tpu.memory_space<vmem>>, vector<1x32x8xbf16>
    %341 = vector.shape_cast %340 : vector<1x32x8xbf16> to vector<32x8xbf16>
    %cst_205 = arith.constant dense<0.000000e+00> : vector<16x8xf32>
    %342 = tpu.matmul %249, %341, %cst_205 {dimension_numbers = #tpu.dot_dimension_numbers<[1], [0], [0], [1], [0, 0, 1, 1], [], []>} : vector<16x32xbf16>, vector<32x8xbf16>, vector<16x8xf32> -> vector<16x8xf32>
    %c18_206 = arith.constant 18 : index
    %c0_207 = arith.constant 0 : index
    %c0_208 = arith.constant 0 : index
    %343 = vector.load %arg5[%c18_206, %c0_207, %c0_208] : memref<24x1x8xf32, #tpu.memory_space<vmem>>, vector<1x1x8xf32>
    %344 = vector.shape_cast %343 : vector<1x1x8xf32> to vector<1x8xf32>
    %345 = vector.broadcast %344 : vector<1x8xf32> to vector<16x8xf32>
    %346 = arith.addf %342, %345 : vector<16x8xf32>
    %c22 = arith.constant 22 : index
    %c0_209 = arith.constant 0 : index
    %c0_210 = arith.constant 0 : index
    %347 = vector.load %arg4[%c22, %c0_209, %c0_210] : memref<24x32x8xbf16, #tpu.memory_space<vmem>>, vector<1x32x8xbf16>
    %348 = vector.shape_cast %347 : vector<1x32x8xbf16> to vector<32x8xbf16>
    %cst_211 = arith.constant dense<0.000000e+00> : vector<16x8xf32>
    %349 = tpu.matmul %249, %348, %cst_211 {dimension_numbers = #tpu.dot_dimension_numbers<[1], [0], [0], [1], [0, 0, 1, 1], [], []>} : vector<16x32xbf16>, vector<32x8xbf16>, vector<16x8xf32> -> vector<16x8xf32>
    %c22_212 = arith.constant 22 : index
    %c0_213 = arith.constant 0 : index
    %c0_214 = arith.constant 0 : index
    %350 = vector.load %arg5[%c22_212, %c0_213, %c0_214] : memref<24x1x8xf32, #tpu.memory_space<vmem>>, vector<1x1x8xf32>
    %351 = vector.shape_cast %350 : vector<1x1x8xf32> to vector<1x8xf32>
    %352 = vector.broadcast %351 : vector<1x8xf32> to vector<16x8xf32>
    %353 = arith.addf %349, %352 : vector<16x8xf32>
    %cst_215 = arith.constant dense<0.000000e+00> : vector<16x16xf32>
    %354 = tpu.matmul %339, %346, %cst_215 {dimension_numbers = #tpu.dot_dimension_numbers<[1], [1], [0], [0], [0, 0, 1, 0], [], []>} : vector<16x8xf32>, vector<16x8xf32>, vector<16x16xf32> -> vector<16x16xf32>
    %cst_216 = arith.constant 0.353553385 : f32
    %355 = vector.broadcast %cst_216 : f32 to vector<16x16xf32>
    %356 = arith.mulf %354, %355 : vector<16x16xf32>
    %357 = arith.addf %356, %6 : vector<16x16xf32>
    %cst_217 = arith.constant dense<0xFF800000> : vector<16xf32>
    %358 = vector.multi_reduction <maximumf>, %357, %cst_217 [1] : vector<16x16xf32> to vector<16xf32>
    %359 = vector.shape_cast %358 : vector<16xf32> to vector<16x1xf32>
    %360 = vector.broadcast %359 : vector<16x1xf32> to vector<16x16xf32>
    %361 = arith.subf %357, %360 : vector<16x16xf32>
    %362 = math.exp %361 : vector<16x16xf32>
    %cst_218 = arith.constant dense<0.000000e+00> : vector<16xf32>
    %363 = vector.multi_reduction <add>, %362, %cst_218 [1] : vector<16x16xf32> to vector<16xf32>
    %364 = vector.shape_cast %363 : vector<16xf32> to vector<16x1xf32>
    %365 = tpu.reciprocal %364 {approx = true} : vector<16x1xf32> -> vector<16x1xf32>
    %366 = vector.broadcast %365 : vector<16x1xf32> to vector<16x16xf32>
    %367 = arith.mulf %362, %366 : vector<16x16xf32>
    %cst_219 = arith.constant dense<0.000000e+00> : vector<16x8xf32>
    %368 = tpu.matmul %367, %353, %cst_219 {dimension_numbers = #tpu.dot_dimension_numbers<[1], [0], [0], [1], [0, 0, 1, 1], [], []>} : vector<16x16xf32>, vector<16x8xf32>, vector<16x8xf32> -> vector<16x8xf32>
    %369 = arith.truncf %368 : vector<16x8xf32> to vector<16x8xbf16>
    %c6_220 = arith.constant 6 : index
    %c0_221 = arith.constant 0 : index
    %c0_222 = arith.constant 0 : index
    %370 = vector.load %arg6[%c6_220, %c0_221, %c0_222] : memref<8x8x32xbf16, #tpu.memory_space<vmem>>, vector<1x8x32xbf16>
    %371 = vector.shape_cast %370 : vector<1x8x32xbf16> to vector<8x32xbf16>
    %cst_223 = arith.constant dense<0.000000e+00> : vector<16x32xf32>
    %372 = tpu.matmul %369, %371, %cst_223 {dimension_numbers = #tpu.dot_dimension_numbers<[1], [0], [0], [1], [0, 0, 1, 1], [], []>} : vector<16x8xbf16>, vector<8x32xbf16>, vector<16x32xf32> -> vector<16x32xf32>
    %373 = arith.addf %332, %372 : vector<16x32xf32>
    %c15 = arith.constant 15 : index
    %c0_224 = arith.constant 0 : index
    %c0_225 = arith.constant 0 : index
    %374 = vector.load %arg4[%c15, %c0_224, %c0_225] : memref<24x32x8xbf16, #tpu.memory_space<vmem>>, vector<1x32x8xbf16>
    %375 = vector.shape_cast %374 : vector<1x32x8xbf16> to vector<32x8xbf16>
    %cst_226 = arith.constant dense<0.000000e+00> : vector<16x8xf32>
    %376 = tpu.matmul %249, %375, %cst_226 {dimension_numbers = #tpu.dot_dimension_numbers<[1], [0], [0], [1], [0, 0, 1, 1], [], []>} : vector<16x32xbf16>, vector<32x8xbf16>, vector<16x8xf32> -> vector<16x8xf32>
    %c15_227 = arith.constant 15 : index
    %c0_228 = arith.constant 0 : index
    %c0_229 = arith.constant 0 : index
    %377 = vector.load %arg5[%c15_227, %c0_228, %c0_229] : memref<24x1x8xf32, #tpu.memory_space<vmem>>, vector<1x1x8xf32>
    %378 = vector.shape_cast %377 : vector<1x1x8xf32> to vector<1x8xf32>
    %379 = vector.broadcast %378 : vector<1x8xf32> to vector<16x8xf32>
    %380 = arith.addf %376, %379 : vector<16x8xf32>
    %c19 = arith.constant 19 : index
    %c0_230 = arith.constant 0 : index
    %c0_231 = arith.constant 0 : index
    %381 = vector.load %arg4[%c19, %c0_230, %c0_231] : memref<24x32x8xbf16, #tpu.memory_space<vmem>>, vector<1x32x8xbf16>
    %382 = vector.shape_cast %381 : vector<1x32x8xbf16> to vector<32x8xbf16>
    %cst_232 = arith.constant dense<0.000000e+00> : vector<16x8xf32>
    %383 = tpu.matmul %249, %382, %cst_232 {dimension_numbers = #tpu.dot_dimension_numbers<[1], [0], [0], [1], [0, 0, 1, 1], [], []>} : vector<16x32xbf16>, vector<32x8xbf16>, vector<16x8xf32> -> vector<16x8xf32>
    %c19_233 = arith.constant 19 : index
    %c0_234 = arith.constant 0 : index
    %c0_235 = arith.constant 0 : index
    %384 = vector.load %arg5[%c19_233, %c0_234, %c0_235] : memref<24x1x8xf32, #tpu.memory_space<vmem>>, vector<1x1x8xf32>
    %385 = vector.shape_cast %384 : vector<1x1x8xf32> to vector<1x8xf32>
    %386 = vector.broadcast %385 : vector<1x8xf32> to vector<16x8xf32>
    %387 = arith.addf %383, %386 : vector<16x8xf32>
    %c23 = arith.constant 23 : index
    %c0_236 = arith.constant 0 : index
    %c0_237 = arith.constant 0 : index
    %388 = vector.load %arg4[%c23, %c0_236, %c0_237] : memref<24x32x8xbf16, #tpu.memory_space<vmem>>, vector<1x32x8xbf16>
    %389 = vector.shape_cast %388 : vector<1x32x8xbf16> to vector<32x8xbf16>
    %cst_238 = arith.constant dense<0.000000e+00> : vector<16x8xf32>
    %390 = tpu.matmul %249, %389, %cst_238 {dimension_numbers = #tpu.dot_dimension_numbers<[1], [0], [0], [1], [0, 0, 1, 1], [], []>} : vector<16x32xbf16>, vector<32x8xbf16>, vector<16x8xf32> -> vector<16x8xf32>
    %c23_239 = arith.constant 23 : index
    %c0_240 = arith.constant 0 : index
    %c0_241 = arith.constant 0 : index
    %391 = vector.load %arg5[%c23_239, %c0_240, %c0_241] : memref<24x1x8xf32, #tpu.memory_space<vmem>>, vector<1x1x8xf32>
    %392 = vector.shape_cast %391 : vector<1x1x8xf32> to vector<1x8xf32>
    %393 = vector.broadcast %392 : vector<1x8xf32> to vector<16x8xf32>
    %394 = arith.addf %390, %393 : vector<16x8xf32>
    %cst_242 = arith.constant dense<0.000000e+00> : vector<16x16xf32>
    %395 = tpu.matmul %380, %387, %cst_242 {dimension_numbers = #tpu.dot_dimension_numbers<[1], [1], [0], [0], [0, 0, 1, 0], [], []>} : vector<16x8xf32>, vector<16x8xf32>, vector<16x16xf32> -> vector<16x16xf32>
    %cst_243 = arith.constant 0.353553385 : f32
    %396 = vector.broadcast %cst_243 : f32 to vector<16x16xf32>
    %397 = arith.mulf %395, %396 : vector<16x16xf32>
    %398 = arith.addf %397, %6 : vector<16x16xf32>
    %cst_244 = arith.constant dense<0xFF800000> : vector<16xf32>
    %399 = vector.multi_reduction <maximumf>, %398, %cst_244 [1] : vector<16x16xf32> to vector<16xf32>
    %400 = vector.shape_cast %399 : vector<16xf32> to vector<16x1xf32>
    %401 = vector.broadcast %400 : vector<16x1xf32> to vector<16x16xf32>
    %402 = arith.subf %398, %401 : vector<16x16xf32>
    %403 = math.exp %402 : vector<16x16xf32>
    %cst_245 = arith.constant dense<0.000000e+00> : vector<16xf32>
    %404 = vector.multi_reduction <add>, %403, %cst_245 [1] : vector<16x16xf32> to vector<16xf32>
    %405 = vector.shape_cast %404 : vector<16xf32> to vector<16x1xf32>
    %406 = tpu.reciprocal %405 {approx = true} : vector<16x1xf32> -> vector<16x1xf32>
    %407 = vector.broadcast %406 : vector<16x1xf32> to vector<16x16xf32>
    %408 = arith.mulf %403, %407 : vector<16x16xf32>
    %cst_246 = arith.constant dense<0.000000e+00> : vector<16x8xf32>
    %409 = tpu.matmul %408, %394, %cst_246 {dimension_numbers = #tpu.dot_dimension_numbers<[1], [0], [0], [1], [0, 0, 1, 1], [], []>} : vector<16x16xf32>, vector<16x8xf32>, vector<16x8xf32> -> vector<16x8xf32>
    %410 = arith.truncf %409 : vector<16x8xf32> to vector<16x8xbf16>
    %c7_247 = arith.constant 7 : index
    %c0_248 = arith.constant 0 : index
    %c0_249 = arith.constant 0 : index
    %411 = vector.load %arg6[%c7_247, %c0_248, %c0_249] : memref<8x8x32xbf16, #tpu.memory_space<vmem>>, vector<1x8x32xbf16>
    %412 = vector.shape_cast %411 : vector<1x8x32xbf16> to vector<8x32xbf16>
    %cst_250 = arith.constant dense<0.000000e+00> : vector<16x32xf32>
    %413 = tpu.matmul %410, %412, %cst_250 {dimension_numbers = #tpu.dot_dimension_numbers<[1], [0], [0], [1], [0, 0, 1, 1], [], []>} : vector<16x8xbf16>, vector<8x32xbf16>, vector<16x32xf32> -> vector<16x32xf32>
    %414 = arith.addf %373, %413 : vector<16x32xf32>
    %415 = vector.broadcast %242 : vector<1x32xf32> to vector<16x32xf32>
    %416 = arith.addf %414, %415 : vector<16x32xf32>
    %417 = arith.addf %239, %416 : vector<16x32xf32>
    %cst_251 = arith.constant dense<0.000000e+00> : vector<16xf32>
    %418 = vector.multi_reduction <add>, %417, %cst_251 [1] : vector<16x32xf32> to vector<16xf32>
    %419 = vector.shape_cast %418 : vector<16xf32> to vector<16x1xf32>
    %cst_252 = arith.constant 3.200000e+01 : f32
    %420 = vector.broadcast %cst_252 : f32 to vector<16x1xf32>
    %421 = arith.divf %419, %420 : vector<16x1xf32>
    %422 = vector.broadcast %421 : vector<16x1xf32> to vector<16x32xf32>
    %423 = arith.subf %417, %422 : vector<16x32xf32>
    %424 = arith.mulf %423, %423 : vector<16x32xf32>
    %cst_253 = arith.constant dense<0.000000e+00> : vector<16xf32>
    %425 = vector.multi_reduction <add>, %424, %cst_253 [1] : vector<16x32xf32> to vector<16xf32>
    %426 = vector.shape_cast %425 : vector<16xf32> to vector<16x1xf32>
    %cst_254 = arith.constant 3.200000e+01 : f32
    %427 = vector.broadcast %cst_254 : f32 to vector<16x1xf32>
    %428 = arith.divf %426, %427 : vector<16x1xf32>
    %cst_255 = arith.constant 9.99999974E-6 : f32
    %429 = vector.broadcast %cst_255 : f32 to vector<16x1xf32>
    %430 = arith.addf %428, %429 : vector<16x1xf32>
    %431 = math.rsqrt %430 : vector<16x1xf32>
    %432 = vector.broadcast %431 : vector<16x1xf32> to vector<16x32xf32>
    %433 = arith.mulf %423, %432 : vector<16x32xf32>
    %434 = vector.broadcast %245 : vector<1x32xf32> to vector<16x32xf32>
    %435 = arith.mulf %433, %434 : vector<16x32xf32>
    %436 = vector.broadcast %246 : vector<1x32xf32> to vector<16x32xf32>
    %437 = arith.addf %435, %436 : vector<16x32xf32>
    %438 = arith.truncf %437 : vector<16x32xf32> to vector<16x32xbf16>
    %c1_256 = arith.constant 1 : index
    %c0_257 = arith.constant 0 : index
    %c0_258 = arith.constant 0 : index
    %439 = vector.load %arg7[%c1_256, %c0_257, %c0_258] : memref<2x32x64xbf16, #tpu.memory_space<vmem>>, vector<1x32x64xbf16>
    %440 = vector.shape_cast %439 : vector<1x32x64xbf16> to vector<32x64xbf16>
    %cst_259 = arith.constant dense<0.000000e+00> : vector<16x64xf32>
    %441 = tpu.matmul %438, %440, %cst_259 {dimension_numbers = #tpu.dot_dimension_numbers<[1], [0], [0], [1], [0, 0, 1, 1], [], []>} : vector<16x32xbf16>, vector<32x64xbf16>, vector<16x64xf32> -> vector<16x64xf32>
    %442 = vector.broadcast %243 : vector<1x64xf32> to vector<16x64xf32>
    %443 = arith.addf %441, %442 : vector<16x64xf32>
    %cst_260 = arith.constant 0.000000e+00 : f32
    %444 = vector.broadcast %cst_260 : f32 to vector<16x64xf32>
    %445 = arith.maximumf %443, %444 : vector<16x64xf32>
    %446 = arith.truncf %445 : vector<16x64xf32> to vector<16x64xbf16>
    %c1_261 = arith.constant 1 : index
    %c0_262 = arith.constant 0 : index
    %c0_263 = arith.constant 0 : index
    %447 = vector.load %arg8[%c1_261, %c0_262, %c0_263] : memref<2x64x32xbf16, #tpu.memory_space<vmem>>, vector<1x64x32xbf16>
    %448 = vector.shape_cast %447 : vector<1x64x32xbf16> to vector<64x32xbf16>
    %cst_264 = arith.constant dense<0.000000e+00> : vector<16x32xf32>
    %449 = tpu.matmul %446, %448, %cst_264 {dimension_numbers = #tpu.dot_dimension_numbers<[1], [0], [0], [1], [0, 0, 1, 1], [], []>} : vector<16x64xbf16>, vector<64x32xbf16>, vector<16x32xf32> -> vector<16x32xf32>
    %450 = vector.broadcast %244 : vector<1x32xf32> to vector<16x32xf32>
    %451 = arith.addf %449, %450 : vector<16x32xf32>
    %452 = arith.addf %437, %451 : vector<16x32xf32>
    %cst_265 = arith.constant dense<0.000000e+00> : vector<16xf32>
    %453 = vector.multi_reduction <add>, %452, %cst_265 [1] : vector<16x32xf32> to vector<16xf32>
    %454 = vector.shape_cast %453 : vector<16xf32> to vector<16x1xf32>
    %cst_266 = arith.constant 3.200000e+01 : f32
    %455 = vector.broadcast %cst_266 : f32 to vector<16x1xf32>
    %456 = arith.divf %454, %455 : vector<16x1xf32>
    %457 = vector.broadcast %456 : vector<16x1xf32> to vector<16x32xf32>
    %458 = arith.subf %452, %457 : vector<16x32xf32>
    %459 = arith.mulf %458, %458 : vector<16x32xf32>
    %cst_267 = arith.constant dense<0.000000e+00> : vector<16xf32>
    %460 = vector.multi_reduction <add>, %459, %cst_267 [1] : vector<16x32xf32> to vector<16xf32>
    %461 = vector.shape_cast %460 : vector<16xf32> to vector<16x1xf32>
    %cst_268 = arith.constant 3.200000e+01 : f32
    %462 = vector.broadcast %cst_268 : f32 to vector<16x1xf32>
    %463 = arith.divf %461, %462 : vector<16x1xf32>
    %cst_269 = arith.constant 9.99999974E-6 : f32
    %464 = vector.broadcast %cst_269 : f32 to vector<16x1xf32>
    %465 = arith.addf %463, %464 : vector<16x1xf32>
    %466 = math.rsqrt %465 : vector<16x1xf32>
    %467 = vector.broadcast %466 : vector<16x1xf32> to vector<16x32xf32>
    %468 = arith.mulf %458, %467 : vector<16x32xf32>
    %469 = vector.broadcast %247 : vector<1x32xf32> to vector<16x32xf32>
    %470 = arith.mulf %468, %469 : vector<16x32xf32>
    %471 = vector.broadcast %248 : vector<1x32xf32> to vector<16x32xf32>
    %472 = arith.addf %470, %471 : vector<16x32xf32>
    %c0_270 = arith.constant 0 : index
    %c0_271 = arith.constant 0 : index
    %473 = vector.load %arg10[%c0_270, %c0_271] : memref<16x32xf32, #tpu.memory_space<vmem>>, vector<16x32xf32>
    tpu.vector_store %arg10[%c0_270, %c0_271], %472 {strides = array<i32>} : memref<16x32xf32, #tpu.memory_space<vmem>>, vector<16x32xf32>,
    return
  }
}

</mosaic_0001>

<llo_original>
// kernel: tpu_custom_call.1
$region0: #{tpu_custom_call.1}
  #allocation0 [shape = 'u32[]', space=smem, size = 0x4, offset = 0x4, fixed_abs, tag = 'smem constant byte address 0x4 - core index']
  #allocation1 [shape = 'u32[72,128]{1,0:T(1,128)}', space=vmem, size = 0x9000, scoped, tag = 'internal scratch']
  %s0 = inlined_call_operand.vmem [shape: f32[16,128], index: 0, kind: input, shape index: {}]
  %s1 = inlined_call_operand.vmem [shape: bf16[128,32], index: 1, kind: input, shape index: {}]
  %s2 = inlined_call_operand.vmem [shape: f32[16,32], index: 2, kind: input, shape index: {}]
  %s3 = inlined_call_operand.vmem [shape: f32[16,16], index: 3, kind: input, shape index: {}]
  %s4 = inlined_call_operand.vmem [shape: bf16[24,32,8], index: 4, kind: input, shape index: {}]
  %s5 = inlined_call_operand.vmem [shape: f32[24,1,8], index: 5, kind: input, shape index: {}]
  %s6 = inlined_call_operand.vmem [shape: bf16[8,8,32], index: 6, kind: input, shape index: {}]
  %s7 = inlined_call_operand.vmem [shape: bf16[2,32,64], index: 7, kind: input, shape index: {}]
  %s8 = inlined_call_operand.vmem [shape: bf16[2,64,32], index: 8, kind: input, shape index: {}]
  %s9 = inlined_call_operand.vmem [shape: f32[2,8,64], index: 9, kind: input, shape index: {}]
  %s10 = inlined_call_operand.hbm [shape: f32[16,32], index: 10, kind: output, shape index: {}]
  %s11 = sld [smem:[#allocation0]]
  $region50: #{tpu_custom_call.1} parent=0
    _
  %s13 = ssub.s32 1, %s11
  %s14 = scalar_select 0, %s13, %s11
  $region1: #{tpu_custom_call.1} parent=0
    #allocation2 [shape = 'u8[8192]{0}', space=vmem, size = 0x2000, scoped, tag = 'output window, operand 0, single buffered']
    #allocation3 [shape = 's32[1]{0}', space=sflag, size = 0x4, scoped, tag = 'scoped memory for tpu_custom_call.1']
    %15 = vsyncpa [#allocation3], 0
    // Predicated region
    $region2: #{tpu_custom_call.1} parent=1 // pred_check
      _
    $region3: #{tpu_custom_call.1} parent=1 // pred_check_branch
      %17 = sbr.rel (0) target = $region5
    $region4: #{tpu_custom_call.1} parent=1 // pred_region
      _
    $region5: #{tpu_custom_call.1} parent=1 // pred_fallthru
      _
    // Predicated region
    $region6: #{tpu_custom_call.1} parent=1 // pred_check
      _
    $region7: #{tpu_custom_call.1} parent=1 // pred_check_branch
      %19 = sbr.rel (0) target = $region9
    $region8: #{tpu_custom_call.1} parent=1 // pred_region
      _
    $region9: #{tpu_custom_call.1} parent=1 // pred_fallthru
      _
    // Predicated region
    $region10: #{tpu_custom_call.1} parent=1 // pred_check
      _
    $region11: #{tpu_custom_call.1} parent=1 // pred_check_branch
      %21 = sbr.rel (0) target = $region13
    $region12: #{tpu_custom_call.1} parent=1 // pred_region
      _
    $region13: #{tpu_custom_call.1} parent=1 // pred_fallthru
      _
    // Predicated region
    $region14: #{tpu_custom_call.1} parent=1 // pred_check
      _
    $region15: #{tpu_custom_call.1} parent=1 // pred_check_branch
      %23 = sbr.rel (0) target = $region17
    $region16: #{tpu_custom_call.1} parent=1 // pred_region
      _
    $region17: #{tpu_custom_call.1} parent=1 // pred_fallthru
      _
    // Predicated region
    $region18: #{tpu_custom_call.1} parent=1 // pred_check
      _
    $region19: #{tpu_custom_call.1} parent=1 // pred_check_branch
      %25 = sbr.rel (0) target = $region21
    $region20: #{tpu_custom_call.1} parent=1 // pred_region
      _
    $region21: #{tpu_custom_call.1} parent=1 // pred_fallthru
      _
    // Predicated region
    $region22: #{tpu_custom_call.1} parent=1 // pred_check
      _
    $region23: #{tpu_custom_call.1} parent=1 // pred_check_branch
      %27 = sbr.rel (0) target = $region25
    $region24: #{tpu_custom_call.1} parent=1 // pred_region
      _
    $region25: #{tpu_custom_call.1} parent=1 // pred_fallthru
      _
    // Predicated region
    $region26: #{tpu_custom_call.1} parent=1 // pred_check
      _
    $region27: #{tpu_custom_call.1} parent=1 // pred_check_branch
      %29 = sbr.rel (0) target = $region29
    $region28: #{tpu_custom_call.1} parent=1 // pred_region
      _
    $region29: #{tpu_custom_call.1} parent=1 // pred_fallthru
      _
    // Predicated region
    $region30: #{tpu_custom_call.1} parent=1 // pred_check
      _
    $region31: #{tpu_custom_call.1} parent=1 // pred_check_branch
      %31 = sbr.rel (0) target = $region33
    $region32: #{tpu_custom_call.1} parent=1 // pred_region
      _
    $region33: #{tpu_custom_call.1} parent=1 // pred_fallthru
      _
    // Predicated region
    $region34: #{tpu_custom_call.1} parent=1 // pred_check
      _
    $region35: #{tpu_custom_call.1} parent=1 // pred_check_branch
      %33 = sbr.rel (0) target = $region37
    $region36: #{tpu_custom_call.1} parent=1 // pred_region
      _
    $region37: #{tpu_custom_call.1} parent=1 // pred_fallthru
      _
    // Predicated region
    $region38: #{tpu_custom_call.1} parent=1 // pred_check
      _
    $region39: #{tpu_custom_call.1} parent=1 // pred_check_branch
      %35 = sbr.rel (0) target = $region41
    $region40: #{tpu_custom_call.1} parent=1 // pred_region
      _
    $region41: #{tpu_custom_call.1} parent=1 // pred_fallthru
      _
    %v37 = vld [vmem:[%s0] sm:$0xff]
    %v38 = vld [vmem:[%s0 + $0x8] sm:$0xff]
    %v39 = vpack.c.bf16 %v38, %v37
    %v40 = vld [vmem:[%s1] sm:$0xf]
    %v41 = vld [vmem:[%s1 + $0x4] sm:$0xf]
    %v42 = vld [vmem:[%s1 + $0x8] sm:$0xf]
    %v43 = vld [vmem:[%s1 + $0xc] sm:$0xf]
    %v44 = vld [vmem:[%s1 + $0x10] sm:$0xf]
    %v45 = vld [vmem:[%s1 + $0x14] sm:$0xf]
    %v46 = vld [vmem:[%s1 + $0x18] sm:$0xf]
    %v47 = vld [vmem:[%s1 + $0x1c] sm:$0xf]
    %v48 = vld [vmem:[%s1 + $0x20] sm:$0xf]
    %v49 = vld [vmem:[%s1 + $0x24] sm:$0xf]
    %v50 = vld [vmem:[%s1 + $0x28] sm:$0xf]
    %v51 = vld [vmem:[%s1 + $0x2c] sm:$0xf]
    %v52 = vld [vmem:[%s1 + $0x30] sm:$0xf]
    %v53 = vld [vmem:[%s1 + $0x34] sm:$0xf]
    %v54 = vld [vmem:[%s1 + $0x38] sm:$0xf]
    %v55 = vld [vmem:[%s1 + $0x3c] sm:$0xf]
    %v56 = vld [vmem:[%s2] sm:$0xff]
    %v57 = vld [vmem:[%s2 + $0x8] sm:$0xff]
    %v74 = vunpack.c.l.b16 %v40
    %v75 = vunpack.c.l.b16 %v41
    %v76 = vunpack.c.l.b16 %v42
    %v77 = vunpack.c.l.b16 %v43
    %v78 = vunpack.c.l.b16 %v44
    %v79 = vunpack.c.l.b16 %v45
    %v80 = vunpack.c.l.b16 %v46
    %v81 = vunpack.c.l.b16 %v47
    %v82 = vunpack.c.l.b16 %v48
    %v83 = vunpack.c.l.b16 %v49
    %v84 = vunpack.c.l.b16 %v50
    %v85 = vunpack.c.l.b16 %v51
    %v86 = vunpack.c.l.b16 %v52
    %v87 = vunpack.c.l.b16 %v53
    %v88 = vunpack.c.l.b16 %v54
    %v89 = vunpack.c.l.b16 %v55
    %v90 = vpack.c.b16 %v75, %v74
    %v91 = vpack.c.b16 %v77, %v76
    %v92 = vpack.c.b16 %v79, %v78
    %v93 = vpack.c.b16 %v81, %v80
    %v94 = vpack.c.b16 %v83, %v82
    %v95 = vpack.c.b16 %v85, %v84
    %v96 = vpack.c.b16 %v87, %v86
    %v97 = vpack.c.b16 %v89, %v88
    %106 = vmatpush.bf16.msra.mxu0 %v97
    %107 = vmatpush.bf16.msra.mxu0 %v96
    %108 = vmatpush.bf16.msra.mxu0 %v95
    %109 = vmatpush.bf16.msra.mxu0 %v94
    %110 = vmatpush.bf16.msra.mxu0 %v93
    %111 = vmatpush.bf16.msra.mxu0 %v92
    %112 = vmatpush.bf16.msra.mxu0 %v91
    %113 = vmatpush.bf16.msra.mxu0 %v90
    %114 = vmatmul.bf16.gmra.mxu0 %v39
    %v115 = vpop.f32.mrf.mxu0
    %v116 = vadd.f32 %v56, %v115
    %v117 = vpop.f32.mrf.mxu0
    %v118 = vadd.f32 %v57, %v117
    %119 = vdwg.mxu0
    %v120 = vld [vmem:[%s3] sm:$0xff]
    %v121 = vld [vmem:[%s3 + $0x8] sm:$0xff]
    %v122 = vld [vmem:[%s9] sm:$0xff]
    %v123 = vpack.c.bf16 %v118, %v116
    %v124 = vld [vmem:[%s4] sm:$0xf]
    %v125 = vld [vmem:[%s4 + $0x4] sm:$0xf]
    %v126 = vld [vmem:[%s4 + $0x8] sm:$0xf]
    %v127 = vld [vmem:[%s4 + $0xc] sm:$0xf]
    %v128 = vld [vmem:[%s5] sm:$0x1]
    %v130 = vperm.slane %v128, 0
    %v136 = vunpack.c.l.b16 %v124
    %v137 = vunpack.c.l.b16 %v125
    %v138 = vunpack.c.l.b16 %v126
    %v139 = vunpack.c.l.b16 %v127
    %v140 = vpack.c.b16 %v137, %v136
    %v141 = vpack.c.b16 %v139, %v138
    %vm144 = vcmask 261120
    %v146 = vsel %vm144, %v123, 0
    %148 = vmatpush.bf16.msra.mxu0 0
    %149 = vmatpush.bf16.msra.mxu0 0
    %150 = vmatpush.bf16.msra.mxu0 0
    %151 = vmatpush.bf16.msra.mxu0 0
    %152 = vmatpush.bf16.msra.mxu0 0
    %153 = vmatpush.bf16.msra.mxu0 0
    %154 = vmatpush.bf16.msra.mxu0 %v141
    %155 = vmatpush.bf16.msra.mxu0 %v140
    %156 = vmatmul.bf16.gmra.mxu0 %v146
    %v157 = vpop.f32.mrf.mxu0
    %v158 = vadd.f32 %v130, %v157
    %v159 = vpop.f32.mrf.mxu0
    %v160 = vadd.f32 %v130, %v159
    %161 = vdwg.mxu0
    %s162 = scalar_lea.vmem %s4, 64
    %v163 = vld [vmem:[%s162] sm:$0xf]
    %v164 = vld [vmem:[%s162 + $0x4] sm:$0xf]
    %v165 = vld [vmem:[%s162 + $0x8] sm:$0xf]
    %v166 = vld [vmem:[%s162 + $0xc] sm:$0xf]
    %s167 = scalar_lea.vmem %s5, 4
    %v168 = vld [vmem:[%s167] sm:$0x1]
    %v170 = vperm.slane %v168, 0
    %v176 = vunpack.c.l.b16 %v163
    %v177 = vunpack.c.l.b16 %v164
    %v178 = vunpack.c.l.b16 %v165
    %v179 = vunpack.c.l.b16 %v166
    %v180 = vpack.c.b16 %v177, %v176
    %v181 = vpack.c.b16 %v179, %v178
    %184 = vmatpush.bf16.msra.mxu0 0
    %185 = vmatpush.bf16.msra.mxu0 0
    %186 = vmatpush.bf16.msra.mxu0 0
    %187 = vmatpush.bf16.msra.mxu0 0
    %188 = vmatpush.bf16.msra.mxu0 0
    %189 = vmatpush.bf16.msra.mxu0 0
    %190 = vmatpush.bf16.msra.mxu0 %v181
    %191 = vmatpush.bf16.msra.mxu0 %v180
    %192 = vmatmul.bf16.gmra.mxu0 %v146
    %v193 = vpop.f32.mrf.mxu0
    %v194 = vadd.f32 %v170, %v193
    %v195 = vpop.f32.mrf.mxu0
    %v196 = vadd.f32 %v170, %v195
    %197 = vdwg.mxu0
    %s198 = scalar_lea.vmem %s4, 128
    %v199 = vld [vmem:[%s198] sm:$0xf]
    %v200 = vld [vmem:[%s198 + $0x4] sm:$0xf]
    %v201 = vld [vmem:[%s198 + $0x8] sm:$0xf]
    %v202 = vld [vmem:[%s198 + $0xc] sm:$0xf]
    %s203 = scalar_lea.vmem %s5, 8
    %v204 = vld [vmem:[%s203] sm:$0x1]
    %v206 = vperm.slane %v204, 0
    %v212 = vunpack.c.l.b16 %v199
    %v213 = vunpack.c.l.b16 %v200
    %v214 = vunpack.c.l.b16 %v201
    %v215 = vunpack.c.l.b16 %v202
    %v216 = vpack.c.b16 %v213, %v212
    %v217 = vpack.c.b16 %v215, %v214
    %220 = vmatpush.bf16.msra.mxu0 0
    %221 = vmatpush.bf16.msra.mxu0 0
    %222 = vmatpush.bf16.msra.mxu0 0
    %223 = vmatpush.bf16.msra.mxu0 0
    %224 = vmatpush.bf16.msra.mxu0 0
    %225 = vmatpush.bf16.msra.mxu0 0
    %226 = vmatpush.bf16.msra.mxu0 %v217
    %227 = vmatpush.bf16.msra.mxu0 %v216
    %228 = vmatmul.bf16.gmra.mxu0 %v146
    %v229 = vpop.f32.mrf.mxu0
    %v230 = vadd.f32 %v206, %v229
    %v231 = vpop.f32.mrf.mxu0
    %v232 = vadd.f32 %v206, %v231
    %233 = vdwg.mxu0
    %vm234 = vcmask 64512
    %v236 = vsel %vm234, %v158, 0
    %v239 = vsel %vm234, %v160, 0
    %v242 = vsel %vm234, %v194, 0
    %v245 = vsel %vm234, %v196, 0
    %247 = vmatpush.xpose.msra.mxu0 0.0
    %248 = vmatpush.xpose.msra.mxu0 0.0
    %249 = vmatpush.xpose.msra.mxu0 0.0
    %250 = vmatpush.xpose.msra.mxu0 0.0
    %251 = vmatpush.xpose.msra.mxu0 0.0
    %252 = vmatpush.xpose.msra.mxu0 0.0
    %253 = vmatpush.xpose.msra.mxu0 0.0
    %254 = vmatpush.xpose.msra.mxu0 0.0
    %255 = vmatpush.xpose.msra.mxu0 0.0
    %256 = vmatpush.xpose.msra.mxu0 0.0
    %257 = vmatpush.xpose.msra.mxu0 0.0
    %258 = vmatpush.xpose.msra.mxu0 0.0
    %259 = vmatpush.xpose.msra.mxu0 0.0
    %260 = vmatpush.xpose.msra.mxu0 0.0
    %261 = vmatpush.xpose.msra.mxu0 %v245
    %262 = vmatpush.xpose.msra.mxu0 %v242
    %263 = vmatmul.f32.gmra.mxu0 %v236
    %v264 = vpop.f32.mrf.mxu0
    %v265 = vadd.f32 0.0, %v264
    %266 = vmatmul.f32.gmra.mxu0 %v239
    %v267 = vpop.f32.mrf.mxu0
    %v268 = vadd.f32 0.0, %v267
    %269 = vdwg.mxu0
    %v270 = vmul.f32 %v265, 0.35355338
    %v271 = vmul.f32 %v268, 0.35355338
    %v272 = vadd.f32 %v270, %v120
    %v273 = vadd.f32 %v271, %v121
    %vm274 = vcmask 130048
    %v275 = vsel %vm274, %v272, -inf
    %276 = vmax.xlane.f32.xlu0 %v275
    %v277 = vpop.xlane.xlu0 %276
    %v278 = vsel %vm274, %v273, -inf
    %279 = vmax.xlane.f32.xlu0 %v278
    %v280 = vpop.xlane.xlu0 %279
    %v281 = vsub.f32 %v272, %v277
    %v282 = vsub.f32 %v273, %v280
    %v283 = vmul.f32 %v281, 1.442695
    %v284 = vpow.pop %v283
    %v285 = vmul.f32 %v282, 1.442695
    %v286 = vpow.pop %v285
    %v287 = vsel %vm274, %v284, 0.0
    %288 = vadd.xlane.f32.xlu0 %v287
    %v289 = vpop.xlane.xlu0 %288
    %v290 = vsel %vm274, %v286, 0.0
    %291 = vadd.xlane.f32.xlu0 %v290
    %v292 = vpop.xlane.xlu0 %291
    %v293 = vrcp.pop %v289
    %v294 = vrcp.pop %v292
    %v295 = vmul.f32 %v284, %v293
    %v296 = vmul.f32 %v286, %v294
    %v298 = vsel %vm274, %v295, 0
    %v301 = vsel %vm274, %v296, 0
    %303 = vmatpush.msra.mxu0 0.0
    %304 = vmatpush.msra.mxu0 0.0
    %305 = vmatpush.msra.mxu0 0.0
    %306 = vmatpush.msra.mxu0 0.0
    %307 = vmatpush.msra.mxu0 0.0
    %308 = vmatpush.msra.mxu0 0.0
    %309 = vmatpush.msra.mxu0 0.0
    %310 = vmatpush.msra.mxu0 0.0
    %311 = vmatpush.msra.mxu0 0.0
    %312 = vmatpush.msra.mxu0 0.0
    %313 = vmatpush.msra.mxu0 0.0
    %314 = vmatpush.msra.mxu0 0.0
    %315 = vmatpush.msra.mxu0 0.0
    %316 = vmatpush.msra.mxu0 0.0
    %317 = vmatpush.msra.mxu0 %v232
    %318 = vmatpush.msra.mxu0 %v230
    %319 = vmatmul.f32.gmra.mxu0 %v298
    %v320 = vpop.f32.mrf.mxu0
    %v321 = vadd.f32 0.0, %v320
    %322 = vmatmul.f32.gmra.mxu0 %v301
    %v323 = vpop.f32.mrf.mxu0
    %v324 = vadd.f32 0.0, %v323
    %325 = vdwg.mxu0
    %v326 = vpack.c.bf16 %v324, %v321
    %v327 = vld [vmem:[%s6] sm:$0xf]
    %s328 = scalar_lea.vmem %s4, 16
    %v329 = vld [vmem:[%s328] sm:$0xf]
    %v330 = vld [vmem:[%s328 + $0x4] sm:$0xf]
    %v331 = vld [vmem:[%s328 + $0x8] sm:$0xf]
    %v332 = vld [vmem:[%s328 + $0xc] sm:$0xf]
    %s333 = scalar_lea.vmem %s5, 1
    %v334 = vld [vmem:[%s333] sm:$0x1]
    %v336 = vperm.slane %v334, 0
    %v342 = vunpack.c.l.b16 %v329
    %v343 = vunpack.c.l.b16 %v330
    %v344 = vunpack.c.l.b16 %v331
    %v345 = vunpack.c.l.b16 %v332
    %v346 = vpack.c.b16 %v343, %v342
    %v347 = vpack.c.b16 %v345, %v344
    %350 = vmatpush.bf16.msra.mxu0 0
    %351 = vmatpush.bf16.msra.mxu0 0
    %352 = vmatpush.bf16.msra.mxu0 0
    %353 = vmatpush.bf16.msra.mxu0 0
    %354 = vmatpush.bf16.msra.mxu0 0
    %355 = vmatpush.bf16.msra.mxu0 0
    %356 = vmatpush.bf16.msra.mxu0 %v347
    %357 = vmatpush.bf16.msra.mxu0 %v346
    %358 = vmatmul.bf16.gmra.mxu0 %v146
    %v359 = vpop.f32.mrf.mxu0
    %v360 = vadd.f32 %v336, %v359
    %v361 = vpop.f32.mrf.mxu0
    %v362 = vadd.f32 %v336, %v361
    %363 = vdwg.mxu0
    %s364 = scalar_lea.vmem %s4, 80
    %v365 = vld [vmem:[%s364] sm:$0xf]
    %v366 = vld [vmem:[%s364 + $0x4] sm:$0xf]
    %v367 = vld [vmem:[%s364 + $0x8] sm:$0xf]
    %v368 = vld [vmem:[%s364 + $0xc] sm:$0xf]
    %s369 = scalar_lea.vmem %s5, 5
    %v370 = vld [vmem:[%s369] sm:$0x1]
    %v372 = vperm.slane %v370, 0
    %v378 = vunpack.c.l.b16 %v365
    %v379 = vunpack.c.l.b16 %v366
    %v380 = vunpack.c.l.b16 %v367
    %v381 = vunpack.c.l.b16 %v368
    %v382 = vpack.c.b16 %v379, %v378
    %v383 = vpack.c.b16 %v381, %v380
    %386 = vmatpush.bf16.msra.mxu0 0
    %387 = vmatpush.bf16.msra.mxu0 0
    %388 = vmatpush.bf16.msra.mxu0 0
    %389 = vmatpush.bf16.msra.mxu0 0
    %390 = vmatpush.bf16.msra.mxu0 0
    %391 = vmatpush.bf16.msra.mxu0 0
    %392 = vmatpush.bf16.msra.mxu0 %v383
    %393 = vmatpush.bf16.msra.mxu0 %v382
    %394 = vmatmul.bf16.gmra.mxu0 %v146
    %v395 = vpop.f32.mrf.mxu0
    %v396 = vadd.f32 %v372, %v395
    %v397 = vpop.f32.mrf.mxu0
    %v398 = vadd.f32 %v372, %v397
    %399 = vdwg.mxu0
    %s400 = scalar_lea.vmem %s4, 144
    %v401 = vld [vmem:[%s400] sm:$0xf]
    %v402 = vld [vmem:[%s400 + $0x4] sm:$0xf]
    %v403 = vld [vmem:[%s400 + $0x8] sm:$0xf]
    %v404 = vld [vmem:[%s400 + $0xc] sm:$0xf]
    %s405 = scalar_lea.vmem %s5, 9
    %v406 = vld [vmem:[%s405] sm:$0x1]
    %v408 = vperm.slane %v406, 0
    %v414 = vunpack.c.l.b16 %v401
    %v415 = vunpack.c.l.b16 %v402
    %v416 = vunpack.c.l.b16 %v403
    %v417 = vunpack.c.l.b16 %v404
    %v418 = vpack.c.b16 %v415, %v414
    %v419 = vpack.c.b16 %v417, %v416
    %422 = vmatpush.bf16.msra.mxu0 0
    %423 = vmatpush.bf16.msra.mxu0 0
    %424 = vmatpush.bf16.msra.mxu0 0
    %425 = vmatpush.bf16.msra.mxu0 0
    %426 = vmatpush.bf16.msra.mxu0 0
    %427 = vmatpush.bf16.msra.mxu0 0
    %428 = vmatpush.bf16.msra.mxu0 %v419
    %429 = vmatpush.bf16.msra.mxu0 %v418
    %430 = vmatmul.bf16.gmra.mxu0 %v146
    %v431 = vpop.f32.mrf.mxu0
    %v432 = vadd.f32 %v408, %v431
    %v433 = vpop.f32.mrf.mxu0
    %v434 = vadd.f32 %v408, %v433
    %435 = vdwg.mxu0
    %v437 = vsel %vm234, %v360, 0
    %v440 = vsel %vm234, %v362, 0
    %v443 = vsel %vm234, %v396, 0
    %v446 = vsel %vm234, %v398, 0
    %448 = vmatpush.xpose.msra.mxu0 0.0
    %449 = vmatpush.xpose.msra.mxu0 0.0
    %450 = vmatpush.xpose.msra.mxu0 0.0
    %451 = vmatpush.xpose.msra.mxu0 0.0
    %452 = vmatpush.xpose.msra.mxu0 0.0
    %453 = vmatpush.xpose.msra.mxu0 0.0
    %454 = vmatpush.xpose.msra.mxu0 0.0
    %455 = vmatpush.xpose.msra.mxu0 0.0
    %456 = vmatpush.xpose.msra.mxu0 0.0
    %457 = vmatpush.xpose.msra.mxu0 0.0
    %458 = vmatpush.xpose.msra.mxu0 0.0
    %459 = vmatpush.xpose.msra.mxu0 0.0
    %460 = vmatpush.xpose.msra.mxu0 0.0
    %461 = vmatpush.xpose.msra.mxu0 0.0
    %462 = vmatpush.xpose.msra.mxu0 %v446
    %463 = vmatpush.xpose.msra.mxu0 %v443
    %464 = vmatmul.f32.gmra.mxu0 %v437
    %v465 = vpop.f32.mrf.mxu0
    %v466 = vadd.f32 0.0, %v465
    %467 = vmatmul.f32.gmra.mxu0 %v440
    %v468 = vpop.f32.mrf.mxu0
    %v469 = vadd.f32 0.0, %v468
    %470 = vdwg.mxu0
    %v471 = vmul.f32 %v466, 0.35355338
    %v472 = vmul.f32 %v469, 0.35355338
    %v473 = vadd.f32 %v471, %v120
    %v474 = vadd.f32 %v472, %v121
    %v475 = vsel %vm274, %v473, -inf
    %476 = vmax.xlane.f32.xlu0 %v475
    %v477 = vpop.xlane.xlu0 %476
    %v478 = vsel %vm274, %v474, -inf
    %479 = vmax.xlane.f32.xlu0 %v478
    %v480 = vpop.xlane.xlu0 %479
    %v481 = vsub.f32 %v473, %v477
    %v482 = vsub.f32 %v474, %v480
    %v483 = vmul.f32 %v481, 1.442695
    %v484 = vpow.pop %v483
    %v485 = vmul.f32 %v482, 1.442695
    %v486 = vpow.pop %v485
    %v487 = vsel %vm274, %v484, 0.0
    %488 = vadd.xlane.f32.xlu0 %v487
    %v489 = vpop.xlane.xlu0 %488
    %v490 = vsel %vm274, %v486, 0.0
    %491 = vadd.xlane.f32.xlu0 %v490
    %v492 = vpop.xlane.xlu0 %491
    %v493 = vrcp.pop %v489
    %v494 = vrcp.pop %v492
    %v495 = vmul.f32 %v484, %v493
    %v496 = vmul.f32 %v486, %v494
    %v498 = vsel %vm274, %v495, 0
    %v501 = vsel %vm274, %v496, 0
    %503 = vmatpush.msra.mxu0 0.0
    %504 = vmatpush.msra.mxu0 0.0
    %505 = vmatpush.msra.mxu0 0.0
    %506 = vmatpush.msra.mxu0 0.0
    %507 = vmatpush.msra.mxu0 0.0
    %508 = vmatpush.msra.mxu0 0.0
    %509 = vmatpush.msra.mxu0 0.0
    %510 = vmatpush.msra.mxu0 0.0
    %511 = vmatpush.msra.mxu0 0.0
    %512 = vmatpush.msra.mxu0 0.0
    %513 = vmatpush.msra.mxu0 0.0
    %514 = vmatpush.msra.mxu0 0.0
    %515 = vmatpush.msra.mxu0 0.0
    %516 = vmatpush.msra.mxu0 0.0
    %517 = vmatpush.msra.mxu0 %v434
    %518 = vmatpush.msra.mxu0 %v432
    %519 = vmatmul.f32.gmra.mxu0 %v498
    %v520 = vpop.f32.mrf.mxu0
    %v521 = vadd.f32 0.0, %v520
    %522 = vmatmul.f32.gmra.mxu0 %v501
    %v523 = vpop.f32.mrf.mxu0
    %v524 = vadd.f32 0.0, %v523
    %525 = vdwg.mxu0
    %v526 = vpack.c.bf16 %v524, %v521
    %s527 = scalar_lea.vmem %s6, 4
    %v528 = vld [vmem:[%s527] sm:$0xf]
    %v530 = vsel %vm234, %v526, 0
    %vm532 = vcmask 1043456
    %v534 = vsel %vm532, %v528, 0
    %536 = vmatpush.bf16.msra.mxu0 0
    %537 = vmatpush.bf16.msra.mxu0 0
    %538 = vmatpush.bf16.msra.mxu0 0
    %539 = vmatpush.bf16.msra.mxu0 0
    %540 = vmatpush.bf16.msra.mxu0 0
    %541 = vmatpush.bf16.msra.mxu0 0
    %542 = vmatpush.bf16.msra.mxu0 0
    %543 = vmatpush.bf16.msra.mxu0 %v534
    %544 = vmatmul.bf16.gmra.mxu0 %v530
    %v545 = vpop.f32.mrf.mxu0
    %v546 = vadd.f32 0.0, %v545
    %v547 = vpop.f32.mrf.mxu0
    %v548 = vadd.f32 0.0, %v547
    %549 = vdwg.mxu0
    %v551 = vsel %vm234, %v326, 0
    %v554 = vsel %vm532, %v327, 0
    %556 = vmatpush.bf16.msra.mxu0 0
    %557 = vmatpush.bf16.msra.mxu0 0
    %558 = vmatpush.bf16.msra.mxu0 0
    %559 = vmatpush.bf16.msra.mxu0 0
    %560 = vmatpush.bf16.msra.mxu0 0
    %561 = vmatpush.bf16.msra.mxu0 0
    %562 = vmatpush.bf16.msra.mxu0 0
    %563 = vmatpush.bf16.msra.mxu0 %v554
    %564 = vmatmul.bf16.gmra.mxu0 %v551
    %v565 = vpop.f32.mrf.mxu0
    %v566 = vadd.f32 %v546, %v565
    %v567 = vpop.f32.mrf.mxu0
    %v568 = vadd.f32 %v548, %v567
    %569 = vdwg.mxu0
    %s570 = scalar_lea.vmem %s4, 32
    %v571 = vld [vmem:[%s570] sm:$0xf]
    %v572 = vld [vmem:[%s570 + $0x4] sm:$0xf]
    %v573 = vld [vmem:[%s570 + $0x8] sm:$0xf]
    %v574 = vld [vmem:[%s570 + $0xc] sm:$0xf]
    %s575 = scalar_lea.vmem %s5, 2
    %v576 = vld [vmem:[%s575] sm:$0x1]
    %v578 = vperm.slane %v576, 0
    %v584 = vunpack.c.l.b16 %v571
    %v585 = vunpack.c.l.b16 %v572
    %v586 = vunpack.c.l.b16 %v573
    %v587 = vunpack.c.l.b16 %v574
    %v588 = vpack.c.b16 %v585, %v584
    %v589 = vpack.c.b16 %v587, %v586
    %592 = vmatpush.bf16.msra.mxu0 0
    %593 = vmatpush.bf16.msra.mxu0 0
    %594 = vmatpush.bf16.msra.mxu0 0
    %595 = vmatpush.bf16.msra.mxu0 0
    %596 = vmatpush.bf16.msra.mxu0 0
    %597 = vmatpush.bf16.msra.mxu0 0
    %598 = vmatpush.bf16.msra.mxu0 %v589
    %599 = vmatpush.bf16.msra.mxu0 %v588
    %600 = vmatmul.bf16.gmra.mxu0 %v146
    %v601 = vpop.f32.mrf.mxu0
    %v602 = vadd.f32 %v578, %v601
    %v603 = vpop.f32.mrf.mxu0
    %v604 = vadd.f32 %v578, %v603
    %605 = vdwg.mxu0
    %s606 = scalar_lea.vmem %s4, 96
    %v607 = vld [vmem:[%s606] sm:$0xf]
    %v608 = vld [vmem:[%s606 + $0x4] sm:$0xf]
    %v609 = vld [vmem:[%s606 + $0x8] sm:$0xf]
    %v610 = vld [vmem:[%s606 + $0xc] sm:$0xf]
    %s611 = scalar_lea.vmem %s5, 6
    %v612 = vld [vmem:[%s611] sm:$0x1]
    %v614 = vperm.slane %v612, 0
    %v620 = vunpack.c.l.b16 %v607
    %v621 = vunpack.c.l.b16 %v608
    %v622 = vunpack.c.l.b16 %v609
    %v623 = vunpack.c.l.b16 %v610
    %v624 = vpack.c.b16 %v621, %v620
    %v625 = vpack.c.b16 %v623, %v622
    %628 = vmatpush.bf16.msra.mxu0 0
    %629 = vmatpush.bf16.msra.mxu0 0
    %630 = vmatpush.bf16.msra.mxu0 0
    %631 = vmatpush.bf16.msra.mxu0 0
    %632 = vmatpush.bf16.msra.mxu0 0
    %633 = vmatpush.bf16.msra.mxu0 0
    %634 = vmatpush.bf16.msra.mxu0 %v625
    %635 = vmatpush.bf16.msra.mxu0 %v624
    %636 = vmatmul.bf16.gmra.mxu0 %v146
    %v637 = vpop.f32.mrf.mxu0
    %v638 = vadd.f32 %v614, %v637
    %v639 = vpop.f32.mrf.mxu0
    %v640 = vadd.f32 %v614, %v639
    %641 = vdwg.mxu0
    %s642 = scalar_lea.vmem %s4, 160
    %v643 = vld [vmem:[%s642] sm:$0xf]
    %v644 = vld [vmem:[%s642 + $0x4] sm:$0xf]
    %v645 = vld [vmem:[%s642 + $0x8] sm:$0xf]
    %v646 = vld [vmem:[%s642 + $0xc] sm:$0xf]
    %s647 = scalar_lea.vmem %s5, 10
    %v648 = vld [vmem:[%s647] sm:$0x1]
    %v650 = vperm.slane %v648, 0
    %v656 = vunpack.c.l.b16 %v643
    %v657 = vunpack.c.l.b16 %v644
    %v658 = vunpack.c.l.b16 %v645
    %v659 = vunpack.c.l.b16 %v646
    %v660 = vpack.c.b16 %v657, %v656
    %v661 = vpack.c.b16 %v659, %v658
    %664 = vmatpush.bf16.msra.mxu0 0
    %665 = vmatpush.bf16.msra.mxu0 0
    %666 = vmatpush.bf16.msra.mxu0 0
    %667 = vmatpush.bf16.msra.mxu0 0
    %668 = vmatpush.bf16.msra.mxu0 0
    %669 = vmatpush.bf16.msra.mxu0 0
    %670 = vmatpush.bf16.msra.mxu0 %v661
    %671 = vmatpush.bf16.msra.mxu0 %v660
    %672 = vmatmul.bf16.gmra.mxu0 %v146
    %v673 = vpop.f32.mrf.mxu0
    %v674 = vadd.f32 %v650, %v673
    %v675 = vpop.f32.mrf.mxu0
    %v676 = vadd.f32 %v650, %v675
    %677 = vdwg.mxu0
    %v679 = vsel %vm234, %v602, 0
    %v682 = vsel %vm234, %v604, 0
    %v685 = vsel %vm234, %v638, 0
    %v688 = vsel %vm234, %v640, 0
    %690 = vmatpush.xpose.msra.mxu0 0.0
    %691 = vmatpush.xpose.msra.mxu0 0.0
    %692 = vmatpush.xpose.msra.mxu0 0.0
    %693 = vmatpush.xpose.msra.mxu0 0.0
    %694 = vmatpush.xpose.msra.mxu0 0.0
    %695 = vmatpush.xpose.msra.mxu0 0.0
    %696 = vmatpush.xpose.msra.mxu0 0.0
    %697 = vmatpush.xpose.msra.mxu0 0.0
    %698 = vmatpush.xpose.msra.mxu0 0.0
    %699 = vmatpush.xpose.msra.mxu0 0.0
    %700 = vmatpush.xpose.msra.mxu0 0.0
    %701 = vmatpush.xpose.msra.mxu0 0.0
    %702 = vmatpush.xpose.msra.mxu0 0.0
    %703 = vmatpush.xpose.msra.mxu0 0.0
    %704 = vmatpush.xpose.msra.mxu0 %v688
    %705 = vmatpush.xpose.msra.mxu0 %v685
    %706 = vmatmul.f32.gmra.mxu0 %v679
    %v707 = vpop.f32.mrf.mxu0
    %v708 = vadd.f32 0.0, %v707
    %709 = vmatmul.f32.gmra.mxu0 %v682
    %v710 = vpop.f32.mrf.mxu0
    %v711 = vadd.f32 0.0, %v710
    %712 = vdwg.mxu0
    %v713 = vmul.f32 %v708, 0.35355338
    %v714 = vmul.f32 %v711, 0.35355338
    %v715 = vadd.f32 %v713, %v120
    %v716 = vadd.f32 %v714, %v121
    %v717 = vsel %vm274, %v715, -inf
    %718 = vmax.xlane.f32.xlu0 %v717
    %v719 = vpop.xlane.xlu0 %718
    %v720 = vsel %vm274, %v716, -inf
    %721 = vmax.xlane.f32.xlu0 %v720
    %v722 = vpop.xlane.xlu0 %721
    %v723 = vsub.f32 %v715, %v719
    %v724 = vsub.f32 %v716, %v722
    %v725 = vmul.f32 %v723, 1.442695
    %v726 = vpow.pop %v725
    %v727 = vmul.f32 %v724, 1.442695
    %v728 = vpow.pop %v727
    %v729 = vsel %vm274, %v726, 0.0
    %730 = vadd.xlane.f32.xlu0 %v729
    %v731 = vpop.xlane.xlu0 %730
    %v732 = vsel %vm274, %v728, 0.0
    %733 = vadd.xlane.f32.xlu0 %v732
    %v734 = vpop.xlane.xlu0 %733
    %v735 = vrcp.pop %v731
    %v736 = vrcp.pop %v734
    %v737 = vmul.f32 %v726, %v735
    %v738 = vmul.f32 %v728, %v736
    %v740 = vsel %vm274, %v737, 0
    %v743 = vsel %vm274, %v738, 0
    %745 = vmatpush.msra.mxu0 0.0
    %746 = vmatpush.msra.mxu0 0.0
    %747 = vmatpush.msra.mxu0 0.0
    %748 = vmatpush.msra.mxu0 0.0
    %749 = vmatpush.msra.mxu0 0.0
    %750 = vmatpush.msra.mxu0 0.0
    %751 = vmatpush.msra.mxu0 0.0
    %752 = vmatpush.msra.mxu0 0.0
    %753 = vmatpush.msra.mxu0 0.0
    %754 = vmatpush.msra.mxu0 0.0
    %755 = vmatpush.msra.mxu0 0.0
    %756 = vmatpush.msra.mxu0 0.0
    %757 = vmatpush.msra.mxu0 0.0
    %758 = vmatpush.msra.mxu0 0.0
    %759 = vmatpush.msra.mxu0 %v676
    %760 = vmatpush.msra.mxu0 %v674
    %761 = vmatmul.f32.gmra.mxu0 %v740
    %v762 = vpop.f32.mrf.mxu0
    %v763 = vadd.f32 0.0, %v762
    %764 = vmatmul.f32.gmra.mxu0 %v743
    %v765 = vpop.f32.mrf.mxu0
    %v766 = vadd.f32 0.0, %v765
    %767 = vdwg.mxu0
    %v768 = vpack.c.bf16 %v766, %v763
    %s769 = scalar_lea.vmem %s6, 8
    %v770 = vld [vmem:[%s769] sm:$0xf]
    %v772 = vsel %vm234, %v768, 0
    %v775 = vsel %vm532, %v770, 0
    %777 = vmatpush.bf16.msra.mxu0 0
    %778 = vmatpush.bf16.msra.mxu0 0
    %779 = vmatpush.bf16.msra.mxu0 0
    %780 = vmatpush.bf16.msra.mxu0 0
    %781 = vmatpush.bf16.msra.mxu0 0
    %782 = vmatpush.bf16.msra.mxu0 0
    %783 = vmatpush.bf16.msra.mxu0 0
    %784 = vmatpush.bf16.msra.mxu0 %v775
    %785 = vmatmul.bf16.gmra.mxu0 %v772
    %v786 = vpop.f32.mrf.mxu0
    %v787 = vadd.f32 0.0, %v786
    %v788 = vpop.f32.mrf.mxu0
    %v789 = vadd.f32 0.0, %v788
    %790 = vdwg.mxu0
    %v791 = vadd.f32 %v566, %v787
    %v792 = vadd.f32 %v568, %v789
    %s793 = scalar_lea.vmem %s4, 48
    %v794 = vld [vmem:[%s793] sm:$0xf]
    %v795 = vld [vmem:[%s793 + $0x4] sm:$0xf]
    %v796 = vld [vmem:[%s793 + $0x8] sm:$0xf]
    %v797 = vld [vmem:[%s793 + $0xc] sm:$0xf]
    %s798 = scalar_lea.vmem %s5, 3
    %v799 = vld [vmem:[%s798] sm:$0x1]
    %v801 = vperm.slane %v799, 0
    %v807 = vunpack.c.l.b16 %v794
    %v808 = vunpack.c.l.b16 %v795
    %v809 = vunpack.c.l.b16 %v796
    %v810 = vunpack.c.l.b16 %v797
    %v811 = vpack.c.b16 %v808, %v807
    %v812 = vpack.c.b16 %v810, %v809
    %815 = vmatpush.bf16.msra.mxu0 0
    %816 = vmatpush.bf16.msra.mxu0 0
    %817 = vmatpush.bf16.msra.mxu0 0
    %818 = vmatpush.bf16.msra.mxu0 0
    %819 = vmatpush.bf16.msra.mxu0 0
    %820 = vmatpush.bf16.msra.mxu0 0
    %821 = vmatpush.bf16.msra.mxu0 %v812
    %822 = vmatpush.bf16.msra.mxu0 %v811
    %823 = vmatmul.bf16.gmra.mxu0 %v146
    %v824 = vpop.f32.mrf.mxu0
    %v825 = vadd.f32 %v801, %v824
    %v826 = vpop.f32.mrf.mxu0
    %v827 = vadd.f32 %v801, %v826
    %828 = vdwg.mxu0
    %s829 = scalar_lea.vmem %s4, 112
    %v830 = vld [vmem:[%s829] sm:$0xf]
    %v831 = vld [vmem:[%s829 + $0x4] sm:$0xf]
    %v832 = vld [vmem:[%s829 + $0x8] sm:$0xf]
    %v833 = vld [vmem:[%s829 + $0xc] sm:$0xf]
    %s834 = scalar_lea.vmem %s5, 7
    %v835 = vld [vmem:[%s834] sm:$0x1]
    %v837 = vperm.slane %v835, 0
    %v843 = vunpack.c.l.b16 %v830
    %v844 = vunpack.c.l.b16 %v831
    %v845 = vunpack.c.l.b16 %v832
    %v846 = vunpack.c.l.b16 %v833
    %v847 = vpack.c.b16 %v844, %v843
    %v848 = vpack.c.b16 %v846, %v845
    %851 = vmatpush.bf16.msra.mxu0 0
    %852 = vmatpush.bf16.msra.mxu0 0
    %853 = vmatpush.bf16.msra.mxu0 0
    %854 = vmatpush.bf16.msra.mxu0 0
    %855 = vmatpush.bf16.msra.mxu0 0
    %856 = vmatpush.bf16.msra.mxu0 0
    %857 = vmatpush.bf16.msra.mxu0 %v848
    %858 = vmatpush.bf16.msra.mxu0 %v847
    %859 = vmatmul.bf16.gmra.mxu0 %v146
    %v860 = vpop.f32.mrf.mxu0
    %v861 = vadd.f32 %v837, %v860
    %v862 = vpop.f32.mrf.mxu0
    %v863 = vadd.f32 %v837, %v862
    %864 = vdwg.mxu0
    %s865 = scalar_lea.vmem %s4, 176
    %v866 = vld [vmem:[%s865] sm:$0xf]
    %v867 = vld [vmem:[%s865 + $0x4] sm:$0xf]
    %v868 = vld [vmem:[%s865 + $0x8] sm:$0xf]
    %v869 = vld [vmem:[%s865 + $0xc] sm:$0xf]
    %s870 = scalar_lea.vmem %s5, 11
    %v871 = vld [vmem:[%s870] sm:$0x1]
    %v873 = vperm.slane %v871, 0
    %v879 = vunpack.c.l.b16 %v866
    %v880 = vunpack.c.l.b16 %v867
    %v881 = vunpack.c.l.b16 %v868
    %v882 = vunpack.c.l.b16 %v869
    %v883 = vpack.c.b16 %v880, %v879
    %v884 = vpack.c.b16 %v882, %v881
    %887 = vmatpush.bf16.msra.mxu0 0
    %888 = vmatpush.bf16.msra.mxu0 0
    %889 = vmatpush.bf16.msra.mxu0 0
    %890 = vmatpush.bf16.msra.mxu0 0
    %891 = vmatpush.bf16.msra.mxu0 0
    %892 = vmatpush.bf16.msra.mxu0 0
    %893 = vmatpush.bf16.msra.mxu0 %v884
    %894 = vmatpush.bf16.msra.mxu0 %v883
    %895 = vmatmul.bf16.gmra.mxu0 %v146
    %v896 = vpop.f32.mrf.mxu0
    %v897 = vadd.f32 %v873, %v896
    %v898 = vpop.f32.mrf.mxu0
    %v899 = vadd.f32 %v873, %v898
    %900 = vdwg.mxu0
    %v902 = vsel %vm234, %v825, 0
    %v905 = vsel %vm234, %v827, 0
    %v908 = vsel %vm234, %v861, 0
    %v911 = vsel %vm234, %v863, 0
    %913 = vmatpush.xpose.msra.mxu0 0.0
    %914 = vmatpush.xpose.msra.mxu0 0.0
    %915 = vmatpush.xpose.msra.mxu0 0.0
    %916 = vmatpush.xpose.msra.mxu0 0.0
    %917 = vmatpush.xpose.msra.mxu0 0.0
    %918 = vmatpush.xpose.msra.mxu0 0.0
    %919 = vmatpush.xpose.msra.mxu0 0.0
    %920 = vmatpush.xpose.msra.mxu0 0.0
    %921 = vmatpush.xpose.msra.mxu0 0.0
    %922 = vmatpush.xpose.msra.mxu0 0.0
    %923 = vmatpush.xpose.msra.mxu0 0.0
    %924 = vmatpush.xpose.msra.mxu0 0.0
    %925 = vmatpush.xpose.msra.mxu0 0.0
    %926 = vmatpush.xpose.msra.mxu0 0.0
    %927 = vmatpush.xpose.msra.mxu0 %v911
    %928 = vmatpush.xpose.msra.mxu0 %v908
    %929 = vmatmul.f32.gmra.mxu0 %v902
    %v930 = vpop.f32.mrf.mxu0
    %v931 = vadd.f32 0.0, %v930
    %932 = vmatmul.f32.gmra.mxu0 %v905
    %v933 = vpop.f32.mrf.mxu0
    %v934 = vadd.f32 0.0, %v933
    %935 = vdwg.mxu0
    %v936 = vmul.f32 %v931, 0.35355338
    %v937 = vmul.f32 %v934, 0.35355338
    %v938 = vadd.f32 %v936, %v120
    %v939 = vadd.f32 %v937, %v121
    %v940 = vsel %vm274, %v938, -inf
    %941 = vmax.xlane.f32.xlu0 %v940
    %v942 = vpop.xlane.xlu0 %941
    %v943 = vsel %vm274, %v939, -inf
    %944 = vmax.xlane.f32.xlu0 %v943
    %v945 = vpop.xlane.xlu0 %944
    %v946 = vsub.f32 %v938, %v942
    %v947 = vsub.f32 %v939, %v945
    %v948 = vmul.f32 %v946, 1.442695
    %v949 = vpow.pop %v948
    %v950 = vmul.f32 %v947, 1.442695
    %v951 = vpow.pop %v950
    %v952 = vsel %vm274, %v949, 0.0
    %953 = vadd.xlane.f32.xlu0 %v952
    %v954 = vpop.xlane.xlu0 %953
    %v955 = vsel %vm274, %v951, 0.0
    %956 = vadd.xlane.f32.xlu0 %v955
    %v957 = vpop.xlane.xlu0 %956
    %v958 = vrcp.pop %v954
    %v959 = vrcp.pop %v957
    %v960 = vmul.f32 %v949, %v958
    %v961 = vmul.f32 %v951, %v959
    %v963 = vsel %vm274, %v960, 0
    %v966 = vsel %vm274, %v961, 0
    %968 = vmatpush.msra.mxu0 0.0
    %969 = vmatpush.msra.mxu0 0.0
    %970 = vmatpush.msra.mxu0 0.0
    %971 = vmatpush.msra.mxu0 0.0
    %972 = vmatpush.msra.mxu0 0.0
    %973 = vmatpush.msra.mxu0 0.0
    %974 = vmatpush.msra.mxu0 0.0
    %975 = vmatpush.msra.mxu0 0.0
    %976 = vmatpush.msra.mxu0 0.0
    %977 = vmatpush.msra.mxu0 0.0
    %978 = vmatpush.msra.mxu0 0.0
    %979 = vmatpush.msra.mxu0 0.0
    %980 = vmatpush.msra.mxu0 0.0
    %981 = vmatpush.msra.mxu0 0.0
    %982 = vmatpush.msra.mxu0 %v899
    %983 = vmatpush.msra.mxu0 %v897
    %984 = vmatmul.f32.gmra.mxu0 %v963
    %v985 = vpop.f32.mrf.mxu0
    %v986 = vadd.f32 0.0, %v985
    %987 = vmatmul.f32.gmra.mxu0 %v966
    %v988 = vpop.f32.mrf.mxu0
    %v989 = vadd.f32 0.0, %v988
    %990 = vdwg.mxu0
    %v991 = vpack.c.bf16 %v989, %v986
    %s992 = scalar_lea.vmem %s6, 12
    %v993 = vld [vmem:[%s992] sm:$0xf]
    %v995 = vsel %vm234, %v991, 0
    %v998 = vsel %vm532, %v993, 0
    %1000 = vmatpush.bf16.msra.mxu0 0
    %1001 = vmatpush.bf16.msra.mxu0 0
    %1002 = vmatpush.bf16.msra.mxu0 0
    %1003 = vmatpush.bf16.msra.mxu0 0
    %1004 = vmatpush.bf16.msra.mxu0 0
    %1005 = vmatpush.bf16.msra.mxu0 0
    %1006 = vmatpush.bf16.msra.mxu0 0
    %1007 = vmatpush.bf16.msra.mxu0 %v998
    %1008 = vmatmul.bf16.gmra.mxu0 %v995
    %v1009 = vpop.f32.mrf.mxu0
    %v1010 = vadd.f32 0.0, %v1009
    %v1011 = vpop.f32.mrf.mxu0
    %v1012 = vadd.f32 0.0, %v1011
    %1013 = vdwg.mxu0
    %v1014 = vadd.f32 %v791, %v1010
    %v1015 = vadd.f32 %v792, %v1012
    %v1016 = vperm.slane %v122, 0
    %v1017 = vadd.f32 %v1014, %v1016
    %v1018 = vadd.f32 %v1015, %v1016
    %v1019 = vadd.f32 %v116, %v1017
    %v1020 = vadd.f32 %v118, %v1018
    %v1021 = vsel %vm144, %v1019, 0.0
    %1022 = vadd.xlane.f32.xlu0 %v1021
    %v1023 = vpop.xlane.xlu0 %1022
    %v1024 = vsel %vm144, %v1020, 0.0
    %1025 = vadd.xlane.f32.xlu0 %v1024
    %v1026 = vpop.xlane.xlu0 %1025
    %v1027 = vrcp.pop 32.0
    %v1028 = vmul.f32 32.0, %v1027
    %v1029 = vsub.f32 1.0, %v1028
    %v1030 = vmul.f32 %v1027, %v1029
    %v1031 = vadd.f32 %v1027, %v1030
    %vm1032 = vweird.f32 %v1027
    %v1033 = vsel %vm1032, %v1027, %v1031
    %v1034 = vmul.f32 %v1023, %v1033
    %v1035 = vmul.f32 %v1026, %v1033
    %v1036 = vsub.f32 %v1019, %v1034
    %v1037 = vsub.f32 %v1020, %v1035
    %v1038 = vmul.f32 %v1036, %v1036
    %v1039 = vmul.f32 %v1037, %v1037
    %v1040 = vsel %vm144, %v1038, 0.0
    %1041 = vadd.xlane.f32.xlu0 %v1040
    %v1042 = vpop.xlane.xlu0 %1041
    %v1043 = vsel %vm144, %v1039, 0.0
    %1044 = vadd.xlane.f32.xlu0 %v1043
    %v1045 = vpop.xlane.xlu0 %1044
    %v1046 = vmul.f32 %v1042, %v1033
    %v1047 = vmul.f32 %v1045, %v1033
    %v1048 = vadd.f32 %v1046, 1e-05
    %v1049 = vadd.f32 %v1047, 1e-05
    %v1050 = vrsqrt.pop %v1048
    %v1051 = vmul.f32 %v1050, %v1048
    %v1052 = vmul.f32 %v1051, %v1050
    %v1053 = vmul.f32 0.5, %v1052
    %v1054 = vsub.f32 1.5, %v1053
    %v1055 = vmul.f32 %v1050, %v1054
    %vm1056 = vweird.f32 %v1048
    %vm1057 = vweird.f32 %v1050
    %vm1058 = vmor %vm1056, %vm1057
    %v1059 = vsel %vm1058, %v1050, %v1055
    %v1060 = vrsqrt.pop %v1049
    %v1061 = vmul.f32 %v1060, %v1049
    %v1062 = vmul.f32 %v1061, %v1060
    %v1063 = vmul.f32 0.5, %v1062
    %v1064 = vsub.f32 1.5, %v1063
    %v1065 = vmul.f32 %v1060, %v1064
    %vm1066 = vweird.f32 %v1049
    %vm1067 = vweird.f32 %v1060
    %vm1068 = vmor %vm1066, %vm1067
    %v1069 = vsel %vm1068, %v1060, %v1065
    %v1070 = vmul.f32 %v1036, %v1059
    %v1071 = vmul.f32 %v1037, %v1069
    %v1072 = vperm.slane %v122, 3
    %v1073 = vmul.f32 %v1070, %v1072
    %v1074 = vmul.f32 %v1071, %v1072
    %v1075 = vperm.slane %v122, 4
    %v1076 = vadd.f32 %v1073, %v1075
    %v1077 = vadd.f32 %v1074, %v1075
    %v1078 = vpack.c.bf16 %v1077, %v1076
    %v1079 = vld [vmem:[%s7] sm:$0xf]
    %v1080 = vld [vmem:[%s7 + $0x4] sm:$0xf]
    %v1081 = vld [vmem:[%s7 + $0x8] sm:$0xf]
    %v1082 = vld [vmem:[%s7 + $0xc] sm:$0xf]
    %v1083 = vperm.slane %v122, 1
    %v1088 = vunpack.c.l.b16 %v1079
    %v1089 = vunpack.c.l.b16 %v1080
    %v1090 = vunpack.c.l.b16 %v1081
    %v1091 = vunpack.c.l.b16 %v1082
    %v1092 = vpack.c.b16 %v1089, %v1088
    %v1093 = vpack.c.b16 %v1091, %v1090
    %v1097 = vsel %vm144, %v1078, 0
    %1099 = vmatpush.bf16.msra.mxu0 0
    %1100 = vmatpush.bf16.msra.mxu0 0
    %1101 = vmatpush.bf16.msra.mxu0 0
    %1102 = vmatpush.bf16.msra.mxu0 0
    %1103 = vmatpush.bf16.msra.mxu0 0
    %1104 = vmatpush.bf16.msra.mxu0 0
    %1105 = vmatpush.bf16.msra.mxu0 %v1093
    %1106 = vmatpush.bf16.msra.mxu0 %v1092
    %1107 = vmatmul.bf16.gmra.mxu0 %v1097
    %v1108 = vpop.f32.mrf.mxu0
    %v1109 = vadd.f32 %v1083, %v1108
    %v1110 = vpop.f32.mrf.mxu0
    %v1111 = vadd.f32 %v1083, %v1110
    %1112 = vdwg.mxu0
    %v1113 = vmax.f32 %v1109, 0.0
    %v1114 = vmax.f32 %v1111, 0.0
    %v1115 = vpack.c.bf16 %v1114, %v1113
    %v1116 = vld [vmem:[%s8] sm:$0xf]
    %v1117 = vld [vmem:[%s8 + $0x4] sm:$0xf]
    %v1118 = vld [vmem:[%s8 + $0x8] sm:$0xf]
    %v1119 = vld [vmem:[%s8 + $0xc] sm:$0xf]
    %v1120 = vld [vmem:[%s8 + $0x10] sm:$0xf]
    %v1121 = vld [vmem:[%s8 + $0x14] sm:$0xf]
    %v1122 = vld [vmem:[%s8 + $0x18] sm:$0xf]
    %v1123 = vld [vmem:[%s8 + $0x1c] sm:$0xf]
    %v1124 = vperm.slane %v122, 2
    %v1133 = vunpack.c.l.b16 %v1116
    %v1134 = vunpack.c.l.b16 %v1117
    %v1135 = vunpack.c.l.b16 %v1118
    %v1136 = vunpack.c.l.b16 %v1119
    %v1137 = vunpack.c.l.b16 %v1120
    %v1138 = vunpack.c.l.b16 %v1121
    %v1139 = vunpack.c.l.b16 %v1122
    %v1140 = vunpack.c.l.b16 %v1123
    %v1141 = vpack.c.b16 %v1134, %v1133
    %v1142 = vpack.c.b16 %v1136, %v1135
    %v1143 = vpack.c.b16 %v1138, %v1137
    %v1144 = vpack.c.b16 %v1140, %v1139
    %vm1149 = vcmask 523264
    %v1151 = vsel %vm1149, %v1115, 0
    %1153 = vmatpush.bf16.msra.mxu0 0
    %1154 = vmatpush.bf16.msra.mxu0 0
    %1155 = vmatpush.bf16.msra.mxu0 0
    %1156 = vmatpush.bf16.msra.mxu0 0
    %1157 = vmatpush.bf16.msra.mxu0 %v1144
    %1158 = vmatpush.bf16.msra.mxu0 %v1143
    %1159 = vmatpush.bf16.msra.mxu0 %v1142
    %1160 = vmatpush.bf16.msra.mxu0 %v1141
    %1161 = vmatmul.bf16.gmra.mxu0 %v1151
    %v1162 = vpop.f32.mrf.mxu0
    %v1163 = vadd.f32 %v1124, %v1162
    %v1164 = vpop.f32.mrf.mxu0
    %v1165 = vadd.f32 %v1124, %v1164
    %1166 = vdwg.mxu0
    %v1167 = vadd.f32 %v1076, %v1163
    %v1168 = vadd.f32 %v1077, %v1165
    %v1169 = vsel %vm144, %v1167, 0.0
    %1170 = vadd.xlane.f32.xlu0 %v1169
    %v1171 = vpop.xlane.xlu0 %1170
    %v1172 = vsel %vm144, %v1168, 0.0
    %1173 = vadd.xlane.f32.xlu0 %v1172
    %v1174 = vpop.xlane.xlu0 %1173
    %v1175 = vmul.f32 %v1171, %v1033
    %v1176 = vmul.f32 %v1174, %v1033
    %v1177 = vsub.f32 %v1167, %v1175
    %v1178 = vsub.f32 %v1168, %v1176
    %v1179 = vmul.f32 %v1177, %v1177
    %v1180 = vmul.f32 %v1178, %v1178
    %v1181 = vsel %vm144, %v1179, 0.0
    %1182 = vadd.xlane.f32.xlu0 %v1181
    %v1183 = vpop.xlane.xlu0 %1182
    %v1184 = vsel %vm144, %v1180, 0.0
    %1185 = vadd.xlane.f32.xlu0 %v1184
    %v1186 = vpop.xlane.xlu0 %1185
    %v1187 = vmul.f32 %v1183, %v1033
    %v1188 = vmul.f32 %v1186, %v1033
    %v1189 = vadd.f32 %v1187, 1e-05
    %v1190 = vadd.f32 %v1188, 1e-05
    %v1191 = vrsqrt.pop %v1189
    %v1192 = vmul.f32 %v1191, %v1189
    %v1193 = vmul.f32 %v1192, %v1191
    %v1194 = vmul.f32 0.5, %v1193
    %v1195 = vsub.f32 1.5, %v1194
    %v1196 = vmul.f32 %v1191, %v1195
    %vm1197 = vweird.f32 %v1189
    %vm1198 = vweird.f32 %v1191
    %vm1199 = vmor %vm1197, %vm1198
    %v1200 = vsel %vm1199, %v1191, %v1196
    %v1201 = vrsqrt.pop %v1190
    %v1202 = vmul.f32 %v1201, %v1190
    %v1203 = vmul.f32 %v1202, %v1201
    %v1204 = vmul.f32 0.5, %v1203
    %v1205 = vsub.f32 1.5, %v1204
    %v1206 = vmul.f32 %v1201, %v1205
    %vm1207 = vweird.f32 %v1190
    %vm1208 = vweird.f32 %v1201
    %vm1209 = vmor %vm1207, %vm1208
    %v1210 = vsel %vm1209, %v1201, %v1206
    %v1211 = vmul.f32 %v1177, %v1200
    %v1212 = vmul.f32 %v1178, %v1210
    %v1213 = vperm.slane %v122, 5
    %v1214 = vmul.f32 %v1211, %v1213
    %v1215 = vmul.f32 %v1212, %v1213
    %v1216 = vperm.slane %v122, 6
    %v1217 = vadd.f32 %v1214, %v1216
    %v1218 = vadd.f32 %v1215, %v1216
    %s1219 = scalar_lea.vmem %s9, 8
    %v1220 = vld [vmem:[%s1219] sm:$0xff]
    %v1221 = vpack.c.bf16 %v1218, %v1217
    %s1222 = scalar_lea.vmem %s4, 192
    %v1223 = vld [vmem:[%s1222] sm:$0xf]
    %v1224 = vld [vmem:[%s1222 + $0x4] sm:$0xf]
    %v1225 = vld [vmem:[%s1222 + $0x8] sm:$0xf]
    %v1226 = vld [vmem:[%s1222 + $0xc] sm:$0xf]
    %s1227 = scalar_lea.vmem %s5, 12
    %v1228 = vld [vmem:[%s1227] sm:$0x1]
    %v1230 = vperm.slane %v1228, 0
    %v1236 = vunpack.c.l.b16 %v1223
    %v1237 = vunpack.c.l.b16 %v1224
    %v1238 = vunpack.c.l.b16 %v1225
    %v1239 = vunpack.c.l.b16 %v1226
    %v1240 = vpack.c.b16 %v1237, %v1236
    %v1241 = vpack.c.b16 %v1239, %v1238
    %v1245 = vsel %vm144, %v1221, 0
    %1247 = vmatpush.bf16.msra.mxu0 0
    %1248 = vmatpush.bf16.msra.mxu0 0
    %1249 = vmatpush.bf16.msra.mxu0 0
    %1250 = vmatpush.bf16.msra.mxu0 0
    %1251 = vmatpush.bf16.msra.mxu0 0
    %1252 = vmatpush.bf16.msra.mxu0 0
    %1253 = vmatpush.bf16.msra.mxu0 %v1241
    %1254 = vmatpush.bf16.msra.mxu0 %v1240
    %1255 = vmatmul.bf16.gmra.mxu0 %v1245
    %v1256 = vpop.f32.mrf.mxu0
    %v1257 = vadd.f32 %v1230, %v1256
    %v1258 = vpop.f32.mrf.mxu0
    %v1259 = vadd.f32 %v1230, %v1258
    %1260 = vdwg.mxu0
    %s1261 = scalar_lea.vmem %s4, 256
    %v1262 = vld [vmem:[%s1261] sm:$0xf]
    %v1263 = vld [vmem:[%s1261 + $0x4] sm:$0xf]
    %v1264 = vld [vmem:[%s1261 + $0x8] sm:$0xf]
    %v1265 = vld [vmem:[%s1261 + $0xc] sm:$0xf]
    %s1266 = scalar_lea.vmem %s5, 16
    %v1267 = vld [vmem:[%s1266] sm:$0x1]
    %v1269 = vperm.slane %v1267, 0
    %v1275 = vunpack.c.l.b16 %v1262
    %v1276 = vunpack.c.l.b16 %v1263
    %v1277 = vunpack.c.l.b16 %v1264
    %v1278 = vunpack.c.l.b16 %v1265
    %v1279 = vpack.c.b16 %v1276, %v1275
    %v1280 = vpack.c.b16 %v1278, %v1277
    %1283 = vmatpush.bf16.msra.mxu0 0
    %1284 = vmatpush.bf16.msra.mxu0 0
    %1285 = vmatpush.bf16.msra.mxu0 0
    %1286 = vmatpush.bf16.msra.mxu0 0
    %1287 = vmatpush.bf16.msra.mxu0 0
    %1288 = vmatpush.bf16.msra.mxu0 0
    %1289 = vmatpush.bf16.msra.mxu0 %v1280
    %1290 = vmatpush.bf16.msra.mxu0 %v1279
    %1291 = vmatmul.bf16.gmra.mxu0 %v1245
    %v1292 = vpop.f32.mrf.mxu0
    %v1293 = vadd.f32 %v1269, %v1292
    %v1294 = vpop.f32.mrf.mxu0
    %v1295 = vadd.f32 %v1269, %v1294
    %1296 = vdwg.mxu0
    %s1297 = scalar_lea.vmem %s4, 320
    %v1298 = vld [vmem:[%s1297] sm:$0xf]
    %v1299 = vld [vmem:[%s1297 + $0x4] sm:$0xf]
    %v1300 = vld [vmem:[%s1297 + $0x8] sm:$0xf]
    %v1301 = vld [vmem:[%s1297 + $0xc] sm:$0xf]
    %s1302 = scalar_lea.vmem %s5, 20
    %v1303 = vld [vmem:[%s1302] sm:$0x1]
    %v1305 = vperm.slane %v1303, 0
    %v1311 = vunpack.c.l.b16 %v1298
    %v1312 = vunpack.c.l.b16 %v1299
    %v1313 = vunpack.c.l.b16 %v1300
    %v1314 = vunpack.c.l.b16 %v1301
    %v1315 = vpack.c.b16 %v1312, %v1311
    %v1316 = vpack.c.b16 %v1314, %v1313
    %1319 = vmatpush.bf16.msra.mxu0 0
    %1320 = vmatpush.bf16.msra.mxu0 0
    %1321 = vmatpush.bf16.msra.mxu0 0
    %1322 = vmatpush.bf16.msra.mxu0 0
    %1323 = vmatpush.bf16.msra.mxu0 0
    %1324 = vmatpush.bf16.msra.mxu0 0
    %1325 = vmatpush.bf16.msra.mxu0 %v1316
    %1326 = vmatpush.bf16.msra.mxu0 %v1315
    %1327 = vmatmul.bf16.gmra.mxu0 %v1245
    %v1328 = vpop.f32.mrf.mxu0
    %v1329 = vadd.f32 %v1305, %v1328
    %v1330 = vpop.f32.mrf.mxu0
    %v1331 = vadd.f32 %v1305, %v1330
    %1332 = vdwg.mxu0
    %v1334 = vsel %vm234, %v1257, 0
    %v1337 = vsel %vm234, %v1259, 0
    %v1340 = vsel %vm234, %v1293, 0
    %v1343 = vsel %vm234, %v1295, 0
    %1345 = vmatpush.xpose.msra.mxu0 0.0
    %1346 = vmatpush.xpose.msra.mxu0 0.0
    %1347 = vmatpush.xpose.msra.mxu0 0.0
    %1348 = vmatpush.xpose.msra.mxu0 0.0
    %1349 = vmatpush.xpose.msra.mxu0 0.0
    %1350 = vmatpush.xpose.msra.mxu0 0.0
    %1351 = vmatpush.xpose.msra.mxu0 0.0
    %1352 = vmatpush.xpose.msra.mxu0 0.0
    %1353 = vmatpush.xpose.msra.mxu0 0.0
    %1354 = vmatpush.xpose.msra.mxu0 0.0
    %1355 = vmatpush.xpose.msra.mxu0 0.0
    %1356 = vmatpush.xpose.msra.mxu0 0.0
    %1357 = vmatpush.xpose.msra.mxu0 0.0
    %1358 = vmatpush.xpose.msra.mxu0 0.0
    %1359 = vmatpush.xpose.msra.mxu0 %v1343
    %1360 = vmatpush.xpose.msra.mxu0 %v1340
    %1361 = vmatmul.f32.gmra.mxu0 %v1334
    %v1362 = vpop.f32.mrf.mxu0
    %v1363 = vadd.f32 0.0, %v1362
    %1364 = vmatmul.f32.gmra.mxu0 %v1337
    %v1365 = vpop.f32.mrf.mxu0
    %v1366 = vadd.f32 0.0, %v1365
    %1367 = vdwg.mxu0
    %v1368 = vmul.f32 %v1363, 0.35355338
    %v1369 = vmul.f32 %v1366, 0.35355338
    %v1370 = vadd.f32 %v1368, %v120
    %v1371 = vadd.f32 %v1369, %v121
    %v1372 = vsel %vm274, %v1370, -inf
    %1373 = vmax.xlane.f32.xlu0 %v1372
    %v1374 = vpop.xlane.xlu0 %1373
    %v1375 = vsel %vm274, %v1371, -inf
    %1376 = vmax.xlane.f32.xlu0 %v1375
    %v1377 = vpop.xlane.xlu0 %1376
    %v1378 = vsub.f32 %v1370, %v1374
    %v1379 = vsub.f32 %v1371, %v1377
    %v1380 = vmul.f32 %v1378, 1.442695
    %v1381 = vpow.pop %v1380
    %v1382 = vmul.f32 %v1379, 1.442695
    %v1383 = vpow.pop %v1382
    %v1384 = vsel %vm274, %v1381, 0.0
    %1385 = vadd.xlane.f32.xlu0 %v1384
    %v1386 = vpop.xlane.xlu0 %1385
    %v1387 = vsel %vm274, %v1383, 0.0
    %1388 = vadd.xlane.f32.xlu0 %v1387
    %v1389 = vpop.xlane.xlu0 %1388
    %v1390 = vrcp.pop %v1386
    %v1391 = vrcp.pop %v1389
    %v1392 = vmul.f32 %v1381, %v1390
    %v1393 = vmul.f32 %v1383, %v1391
    %v1395 = vsel %vm274, %v1392, 0
    %v1398 = vsel %vm274, %v1393, 0
    %1400 = vmatpush.msra.mxu0 0.0
    %1401 = vmatpush.msra.mxu0 0.0
    %1402 = vmatpush.msra.mxu0 0.0
    %1403 = vmatpush.msra.mxu0 0.0
    %1404 = vmatpush.msra.mxu0 0.0
    %1405 = vmatpush.msra.mxu0 0.0
    %1406 = vmatpush.msra.mxu0 0.0
    %1407 = vmatpush.msra.mxu0 0.0
    %1408 = vmatpush.msra.mxu0 0.0
    %1409 = vmatpush.msra.mxu0 0.0
    %1410 = vmatpush.msra.mxu0 0.0
    %1411 = vmatpush.msra.mxu0 0.0
    %1412 = vmatpush.msra.mxu0 0.0
    %1413 = vmatpush.msra.mxu0 0.0
    %1414 = vmatpush.msra.mxu0 %v1331
    %1415 = vmatpush.msra.mxu0 %v1329
    %1416 = vmatmul.f32.gmra.mxu0 %v1395
    %v1417 = vpop.f32.mrf.mxu0
    %v1418 = vadd.f32 0.0, %v1417
    %1419 = vmatmul.f32.gmra.mxu0 %v1398
    %v1420 = vpop.f32.mrf.mxu0
    %v1421 = vadd.f32 0.0, %v1420
    %1422 = vdwg.mxu0
    %v1423 = vpack.c.bf16 %v1421, %v1418
    %s1424 = scalar_lea.vmem %s6, 16
    %v1425 = vld [vmem:[%s1424] sm:$0xf]
    %s1426 = scalar_lea.vmem %s4, 208
    %v1427 = vld [vmem:[%s1426] sm:$0xf]
    %v1428 = vld [vmem:[%s1426 + $0x4] sm:$0xf]
    %v1429 = vld [vmem:[%s1426 + $0x8] sm:$0xf]
    %v1430 = vld [vmem:[%s1426 + $0xc] sm:$0xf]
    %s1431 = scalar_lea.vmem %s5, 13
    %v1432 = vld [vmem:[%s1431] sm:$0x1]
    %v1434 = vperm.slane %v1432, 0
    %v1440 = vunpack.c.l.b16 %v1427
    %v1441 = vunpack.c.l.b16 %v1428
    %v1442 = vunpack.c.l.b16 %v1429
    %v1443 = vunpack.c.l.b16 %v1430
    %v1444 = vpack.c.b16 %v1441, %v1440
    %v1445 = vpack.c.b16 %v1443, %v1442
    %1448 = vmatpush.bf16.msra.mxu0 0
    %1449 = vmatpush.bf16.msra.mxu0 0
    %1450 = vmatpush.bf16.msra.mxu0 0
    %1451 = vmatpush.bf16.msra.mxu0 0
    %1452 = vmatpush.bf16.msra.mxu0 0
    %1453 = vmatpush.bf16.msra.mxu0 0
    %1454 = vmatpush.bf16.msra.mxu0 %v1445
    %1455 = vmatpush.bf16.msra.mxu0 %v1444
    %1456 = vmatmul.bf16.gmra.mxu0 %v1245
    %v1457 = vpop.f32.mrf.mxu0
    %v1458 = vadd.f32 %v1434, %v1457
    %v1459 = vpop.f32.mrf.mxu0
    %v1460 = vadd.f32 %v1434, %v1459
    %1461 = vdwg.mxu0
    %s1462 = scalar_lea.vmem %s4, 272
    %v1463 = vld [vmem:[%s1462] sm:$0xf]
    %v1464 = vld [vmem:[%s1462 + $0x4] sm:$0xf]
    %v1465 = vld [vmem:[%s1462 + $0x8] sm:$0xf]
    %v1466 = vld [vmem:[%s1462 + $0xc] sm:$0xf]
    %s1467 = scalar_lea.vmem %s5, 17
    %v1468 = vld [vmem:[%s1467] sm:$0x1]
    %v1470 = vperm.slane %v1468, 0
    %v1476 = vunpack.c.l.b16 %v1463
    %v1477 = vunpack.c.l.b16 %v1464
    %v1478 = vunpack.c.l.b16 %v1465
    %v1479 = vunpack.c.l.b16 %v1466
    %v1480 = vpack.c.b16 %v1477, %v1476
    %v1481 = vpack.c.b16 %v1479, %v1478
    %1484 = vmatpush.bf16.msra.mxu0 0
    %1485 = vmatpush.bf16.msra.mxu0 0
    %1486 = vmatpush.bf16.msra.mxu0 0
    %1487 = vmatpush.bf16.msra.mxu0 0
    %1488 = vmatpush.bf16.msra.mxu0 0
    %1489 = vmatpush.bf16.msra.mxu0 0
    %1490 = vmatpush.bf16.msra.mxu0 %v1481
    %1491 = vmatpush.bf16.msra.mxu0 %v1480
    %1492 = vmatmul.bf16.gmra.mxu0 %v1245
    %v1493 = vpop.f32.mrf.mxu0
    %v1494 = vadd.f32 %v1470, %v1493
    %v1495 = vpop.f32.mrf.mxu0
    %v1496 = vadd.f32 %v1470, %v1495
    %1497 = vdwg.mxu0
    %s1498 = scalar_lea.vmem %s4, 336
    %v1499 = vld [vmem:[%s1498] sm:$0xf]
    %v1500 = vld [vmem:[%s1498 + $0x4] sm:$0xf]
    %v1501 = vld [vmem:[%s1498 + $0x8] sm:$0xf]
    %v1502 = vld [vmem:[%s1498 + $0xc] sm:$0xf]
    %s1503 = scalar_lea.vmem %s5, 21
    %v1504 = vld [vmem:[%s1503] sm:$0x1]
    %v1506 = vperm.slane %v1504, 0
    %v1512 = vunpack.c.l.b16 %v1499
    %v1513 = vunpack.c.l.b16 %v1500
    %v1514 = vunpack.c.l.b16 %v1501
    %v1515 = vunpack.c.l.b16 %v1502
    %v1516 = vpack.c.b16 %v1513, %v1512
    %v1517 = vpack.c.b16 %v1515, %v1514
    %1520 = vmatpush.bf16.msra.mxu0 0
    %1521 = vmatpush.bf16.msra.mxu0 0
    %1522 = vmatpush.bf16.msra.mxu0 0
    %1523 = vmatpush.bf16.msra.mxu0 0
    %1524 = vmatpush.bf16.msra.mxu0 0
    %1525 = vmatpush.bf16.msra.mxu0 0
    %1526 = vmatpush.bf16.msra.mxu0 %v1517
    %1527 = vmatpush.bf16.msra.mxu0 %v1516
    %1528 = vmatmul.bf16.gmra.mxu0 %v1245
    %v1529 = vpop.f32.mrf.mxu0
    %v1530 = vadd.f32 %v1506, %v1529
    %v1531 = vpop.f32.mrf.mxu0
    %v1532 = vadd.f32 %v1506, %v1531
    %1533 = vdwg.mxu0
    %v1535 = vsel %vm234, %v1458, 0
    %v1538 = vsel %vm234, %v1460, 0
    %v1541 = vsel %vm234, %v1494, 0
    %v1544 = vsel %vm234, %v1496, 0
    %1546 = vmatpush.xpose.msra.mxu0 0.0
    %1547 = vmatpush.xpose.msra.mxu0 0.0
    %1548 = vmatpush.xpose.msra.mxu0 0.0
    %1549 = vmatpush.xpose.msra.mxu0 0.0
    %1550 = vmatpush.xpose.msra.mxu0 0.0
    %1551 = vmatpush.xpose.msra.mxu0 0.0
    %1552 = vmatpush.xpose.msra.mxu0 0.0
    %1553 = vmatpush.xpose.msra.mxu0 0.0
    %1554 = vmatpush.xpose.msra.mxu0 0.0
    %1555 = vmatpush.xpose.msra.mxu0 0.0
    %1556 = vmatpush.xpose.msra.mxu0 0.0
    %1557 = vmatpush.xpose.msra.mxu0 0.0
    %1558 = vmatpush.xpose.msra.mxu0 0.0
    %1559 = vmatpush.xpose.msra.mxu0 0.0
    %1560 = vmatpush.xpose.msra.mxu0 %v1544
    %1561 = vmatpush.xpose.msra.mxu0 %v1541
    %1562 = vmatmul.f32.gmra.mxu0 %v1535
    %v1563 = vpop.f32.mrf.mxu0
    %v1564 = vadd.f32 0.0, %v1563
    %1565 = vmatmul.f32.gmra.mxu0 %v1538
    %v1566 = vpop.f32.mrf.mxu0
    %v1567 = vadd.f32 0.0, %v1566
    %1568 = vdwg.mxu0
    %v1569 = vmul.f32 %v1564, 0.35355338
    %v1570 = vmul.f32 %v1567, 0.35355338
    %v1571 = vadd.f32 %v1569, %v120
    %v1572 = vadd.f32 %v1570, %v121
    %v1573 = vsel %vm274, %v1571, -inf
    %1574 = vmax.xlane.f32.xlu0 %v1573
    %v1575 = vpop.xlane.xlu0 %1574
    %v1576 = vsel %vm274, %v1572, -inf
    %1577 = vmax.xlane.f32.xlu0 %v1576
    %v1578 = vpop.xlane.xlu0 %1577
    %v1579 = vsub.f32 %v1571, %v1575
    %v1580 = vsub.f32 %v1572, %v1578
    %v1581 = vmul.f32 %v1579, 1.442695
    %v1582 = vpow.pop %v1581
    %v1583 = vmul.f32 %v1580, 1.442695
    %v1584 = vpow.pop %v1583
    %v1585 = vsel %vm274, %v1582, 0.0
    %1586 = vadd.xlane.f32.xlu0 %v1585
    %v1587 = vpop.xlane.xlu0 %1586
    %v1588 = vsel %vm274, %v1584, 0.0
    %1589 = vadd.xlane.f32.xlu0 %v1588
    %v1590 = vpop.xlane.xlu0 %1589
    %v1591 = vrcp.pop %v1587
    %v1592 = vrcp.pop %v1590
    %v1593 = vmul.f32 %v1582, %v1591
    %v1594 = vmul.f32 %v1584, %v1592
    %v1596 = vsel %vm274, %v1593, 0
    %v1599 = vsel %vm274, %v1594, 0
    %1601 = vmatpush.msra.mxu0 0.0
    %1602 = vmatpush.msra.mxu0 0.0
    %1603 = vmatpush.msra.mxu0 0.0
    %1604 = vmatpush.msra.mxu0 0.0
    %1605 = vmatpush.msra.mxu0 0.0
    %1606 = vmatpush.msra.mxu0 0.0
    %1607 = vmatpush.msra.mxu0 0.0
    %1608 = vmatpush.msra.mxu0 0.0
    %1609 = vmatpush.msra.mxu0 0.0
    %1610 = vmatpush.msra.mxu0 0.0
    %1611 = vmatpush.msra.mxu0 0.0
    %1612 = vmatpush.msra.mxu0 0.0
    %1613 = vmatpush.msra.mxu0 0.0
    %1614 = vmatpush.msra.mxu0 0.0
    %1615 = vmatpush.msra.mxu0 %v1532
    %1616 = vmatpush.msra.mxu0 %v1530
    %1617 = vmatmul.f32.gmra.mxu0 %v1596
    %v1618 = vpop.f32.mrf.mxu0
    %v1619 = vadd.f32 0.0, %v1618
    %1620 = vmatmul.f32.gmra.mxu0 %v1599
    %v1621 = vpop.f32.mrf.mxu0
    %v1622 = vadd.f32 0.0, %v1621
    %1623 = vdwg.mxu0
    %v1624 = vpack.c.bf16 %v1622, %v1619
    %s1625 = scalar_lea.vmem %s6, 20
    %v1626 = vld [vmem:[%s1625] sm:$0xf]
    %v1628 = vsel %vm234, %v1624, 0
    %v1631 = vsel %vm532, %v1626, 0
    %1633 = vmatpush.bf16.msra.mxu0 0
    %1634 = vmatpush.bf16.msra.mxu0 0
    %1635 = vmatpush.bf16.msra.mxu0 0
    %1636 = vmatpush.bf16.msra.mxu0 0
    %1637 = vmatpush.bf16.msra.mxu0 0
    %1638 = vmatpush.bf16.msra.mxu0 0
    %1639 = vmatpush.bf16.msra.mxu0 0
    %1640 = vmatpush.bf16.msra.mxu0 %v1631
    %1641 = vmatmul.bf16.gmra.mxu0 %v1628
    %v1642 = vpop.f32.mrf.mxu0
    %v1643 = vadd.f32 0.0, %v1642
    %v1644 = vpop.f32.mrf.mxu0
    %v1645 = vadd.f32 0.0, %v1644
    %1646 = vdwg.mxu0
    %v1648 = vsel %vm234, %v1423, 0
    %v1651 = vsel %vm532, %v1425, 0
    %1653 = vmatpush.bf16.msra.mxu0 0
    %1654 = vmatpush.bf16.msra.mxu0 0
    %1655 = vmatpush.bf16.msra.mxu0 0
    %1656 = vmatpush.bf16.msra.mxu0 0
    %1657 = vmatpush.bf16.msra.mxu0 0
    %1658 = vmatpush.bf16.msra.mxu0 0
    %1659 = vmatpush.bf16.msra.mxu0 0
    %1660 = vmatpush.bf16.msra.mxu0 %v1651
    %1661 = vmatmul.bf16.gmra.mxu0 %v1648
    %v1662 = vpop.f32.mrf.mxu0
    %v1663 = vadd.f32 %v1643, %v1662
    %v1664 = vpop.f32.mrf.mxu0
    %v1665 = vadd.f32 %v1645, %v1664
    %1666 = vdwg.mxu0
    %s1667 = scalar_lea.vmem %s4, 224
    %v1668 = vld [vmem:[%s1667] sm:$0xf]
    %v1669 = vld [vmem:[%s1667 + $0x4] sm:$0xf]
    %v1670 = vld [vmem:[%s1667 + $0x8] sm:$0xf]
    %v1671 = vld [vmem:[%s1667 + $0xc] sm:$0xf]
    %s1672 = scalar_lea.vmem %s5, 14
    %v1673 = vld [vmem:[%s1672] sm:$0x1]
    %v1675 = vperm.slane %v1673, 0
    %v1681 = vunpack.c.l.b16 %v1668
    %v1682 = vunpack.c.l.b16 %v1669
    %v1683 = vunpack.c.l.b16 %v1670
    %v1684 = vunpack.c.l.b16 %v1671
    %v1685 = vpack.c.b16 %v1682, %v1681
    %v1686 = vpack.c.b16 %v1684, %v1683
    %1689 = vmatpush.bf16.msra.mxu0 0
    %1690 = vmatpush.bf16.msra.mxu0 0
    %1691 = vmatpush.bf16.msra.mxu0 0
    %1692 = vmatpush.bf16.msra.mxu0 0
    %1693 = vmatpush.bf16.msra.mxu0 0
    %1694 = vmatpush.bf16.msra.mxu0 0
    %1695 = vmatpush.bf16.msra.mxu0 %v1686
    %1696 = vmatpush.bf16.msra.mxu0 %v1685
    %1697 = vmatmul.bf16.gmra.mxu0 %v1245
    %v1698 = vpop.f32.mrf.mxu0
    %v1699 = vadd.f32 %v1675, %v1698
    %v1700 = vpop.f32.mrf.mxu0
    %v1701 = vadd.f32 %v1675, %v1700
    %1702 = vdwg.mxu0
    %s1703 = scalar_lea.vmem %s4, 288
    %v1704 = vld [vmem:[%s1703] sm:$0xf]
    %v1705 = vld [vmem:[%s1703 + $0x4] sm:$0xf]
    %v1706 = vld [vmem:[%s1703 + $0x8] sm:$0xf]
    %v1707 = vld [vmem:[%s1703 + $0xc] sm:$0xf]
    %s1708 = scalar_lea.vmem %s5, 18
    %v1709 = vld [vmem:[%s1708] sm:$0x1]
    %v1711 = vperm.slane %v1709, 0
    %v1717 = vunpack.c.l.b16 %v1704
    %v1718 = vunpack.c.l.b16 %v1705
    %v1719 = vunpack.c.l.b16 %v1706
    %v1720 = vunpack.c.l.b16 %v1707
    %v1721 = vpack.c.b16 %v1718, %v1717
    %v1722 = vpack.c.b16 %v1720, %v1719
    %1725 = vmatpush.bf16.msra.mxu0 0
    %1726 = vmatpush.bf16.msra.mxu0 0
    %1727 = vmatpush.bf16.msra.mxu0 0
    %1728 = vmatpush.bf16.msra.mxu0 0
    %1729 = vmatpush.bf16.msra.mxu0 0
    %1730 = vmatpush.bf16.msra.mxu0 0
    %1731 = vmatpush.bf16.msra.mxu0 %v1722
    %1732 = vmatpush.bf16.msra.mxu0 %v1721
    %1733 = vmatmul.bf16.gmra.mxu0 %v1245
    %v1734 = vpop.f32.mrf.mxu0
    %v1735 = vadd.f32 %v1711, %v1734
    %v1736 = vpop.f32.mrf.mxu0
    %v1737 = vadd.f32 %v1711, %v1736
    %1738 = vdwg.mxu0
    %s1739 = scalar_lea.vmem %s4, 352
    %v1740 = vld [vmem:[%s1739] sm:$0xf]
    %v1741 = vld [vmem:[%s1739 + $0x4] sm:$0xf]
    %v1742 = vld [vmem:[%s1739 + $0x8] sm:$0xf]
    %v1743 = vld [vmem:[%s1739 + $0xc] sm:$0xf]
    %s1744 = scalar_lea.vmem %s5, 22
    %v1745 = vld [vmem:[%s1744] sm:$0x1]
    %v1747 = vperm.slane %v1745, 0
    %v1753 = vunpack.c.l.b16 %v1740
    %v1754 = vunpack.c.l.b16 %v1741
    %v1755 = vunpack.c.l.b16 %v1742
    %v1756 = vunpack.c.l.b16 %v1743
    %v1757 = vpack.c.b16 %v1754, %v1753
    %v1758 = vpack.c.b16 %v1756, %v1755
    %1761 = vmatpush.bf16.msra.mxu0 0
    %1762 = vmatpush.bf16.msra.mxu0 0
    %1763 = vmatpush.bf16.msra.mxu0 0
    %1764 = vmatpush.bf16.msra.mxu0 0
    %1765 = vmatpush.bf16.msra.mxu0 0
    %1766 = vmatpush.bf16.msra.mxu0 0
    %1767 = vmatpush.bf16.msra.mxu0 %v1758
    %1768 = vmatpush.bf16.msra.mxu0 %v1757
    %1769 = vmatmul.bf16.gmra.mxu0 %v1245
    %v1770 = vpop.f32.mrf.mxu0
    %v1771 = vadd.f32 %v1747, %v1770
    %v1772 = vpop.f32.mrf.mxu0
    %v1773 = vadd.f32 %v1747, %v1772
    %1774 = vdwg.mxu0
    %v1776 = vsel %vm234, %v1699, 0
    %v1779 = vsel %vm234, %v1701, 0
    %v1782 = vsel %vm234, %v1735, 0
    %v1785 = vsel %vm234, %v1737, 0
    %1787 = vmatpush.xpose.msra.mxu0 0.0
    %1788 = vmatpush.xpose.msra.mxu0 0.0
    %1789 = vmatpush.xpose.msra.mxu0 0.0
    %1790 = vmatpush.xpose.msra.mxu0 0.0
    %1791 = vmatpush.xpose.msra.mxu0 0.0
    %1792 = vmatpush.xpose.msra.mxu0 0.0
    %1793 = vmatpush.xpose.msra.mxu0 0.0
    %1794 = vmatpush.xpose.msra.mxu0 0.0
    %1795 = vmatpush.xpose.msra.mxu0 0.0
    %1796 = vmatpush.xpose.msra.mxu0 0.0
    %1797 = vmatpush.xpose.msra.mxu0 0.0
    %1798 = vmatpush.xpose.msra.mxu0 0.0
    %1799 = vmatpush.xpose.msra.mxu0 0.0
    %1800 = vmatpush.xpose.msra.mxu0 0.0
    %1801 = vmatpush.xpose.msra.mxu0 %v1785
    %1802 = vmatpush.xpose.msra.mxu0 %v1782
    %1803 = vmatmul.f32.gmra.mxu0 %v1776
    %v1804 = vpop.f32.mrf.mxu0
    %v1805 = vadd.f32 0.0, %v1804
    %1806 = vmatmul.f32.gmra.mxu0 %v1779
    %v1807 = vpop.f32.mrf.mxu0
    %v1808 = vadd.f32 0.0, %v1807
    %1809 = vdwg.mxu0
    %v1810 = vmul.f32 %v1805, 0.35355338
    %v1811 = vmul.f32 %v1808, 0.35355338
    %v1812 = vadd.f32 %v1810, %v120
    %v1813 = vadd.f32 %v1811, %v121
    %v1814 = vsel %vm274, %v1812, -inf
    %1815 = vmax.xlane.f32.xlu0 %v1814
    %v1816 = vpop.xlane.xlu0 %1815
    %v1817 = vsel %vm274, %v1813, -inf
    %1818 = vmax.xlane.f32.xlu0 %v1817
    %v1819 = vpop.xlane.xlu0 %1818
    %v1820 = vsub.f32 %v1812, %v1816
    %v1821 = vsub.f32 %v1813, %v1819
    %v1822 = vmul.f32 %v1820, 1.442695
    %v1823 = vpow.pop %v1822
    %v1824 = vmul.f32 %v1821, 1.442695
    %v1825 = vpow.pop %v1824
    %v1826 = vsel %vm274, %v1823, 0.0
    %1827 = vadd.xlane.f32.xlu0 %v1826
    %v1828 = vpop.xlane.xlu0 %1827
    %v1829 = vsel %vm274, %v1825, 0.0
    %1830 = vadd.xlane.f32.xlu0 %v1829
    %v1831 = vpop.xlane.xlu0 %1830
    %v1832 = vrcp.pop %v1828
    %v1833 = vrcp.pop %v1831
    %v1834 = vmul.f32 %v1823, %v1832
    %v1835 = vmul.f32 %v1825, %v1833
    %v1837 = vsel %vm274, %v1834, 0
    %v1840 = vsel %vm274, %v1835, 0
    %1842 = vmatpush.msra.mxu0 0.0
    %1843 = vmatpush.msra.mxu0 0.0
    %1844 = vmatpush.msra.mxu0 0.0
    %1845 = vmatpush.msra.mxu0 0.0
    %1846 = vmatpush.msra.mxu0 0.0
    %1847 = vmatpush.msra.mxu0 0.0
    %1848 = vmatpush.msra.mxu0 0.0
    %1849 = vmatpush.msra.mxu0 0.0
    %1850 = vmatpush.msra.mxu0 0.0
    %1851 = vmatpush.msra.mxu0 0.0
    %1852 = vmatpush.msra.mxu0 0.0
    %1853 = vmatpush.msra.mxu0 0.0
    %1854 = vmatpush.msra.mxu0 0.0
    %1855 = vmatpush.msra.mxu0 0.0
    %1856 = vmatpush.msra.mxu0 %v1773
    %1857 = vmatpush.msra.mxu0 %v1771
    %1858 = vmatmul.f32.gmra.mxu0 %v1837
    %v1859 = vpop.f32.mrf.mxu0
    %v1860 = vadd.f32 0.0, %v1859
    %1861 = vmatmul.f32.gmra.mxu0 %v1840
    %v1862 = vpop.f32.mrf.mxu0
    %v1863 = vadd.f32 0.0, %v1862
    %1864 = vdwg.mxu0
    %v1865 = vpack.c.bf16 %v1863, %v1860
    %s1866 = scalar_lea.vmem %s6, 24
    %v1867 = vld [vmem:[%s1866] sm:$0xf]
    %v1869 = vsel %vm234, %v1865, 0
    %v1872 = vsel %vm532, %v1867, 0
    %1874 = vmatpush.bf16.msra.mxu0 0
    %1875 = vmatpush.bf16.msra.mxu0 0
    %1876 = vmatpush.bf16.msra.mxu0 0
    %1877 = vmatpush.bf16.msra.mxu0 0
    %1878 = vmatpush.bf16.msra.mxu0 0
    %1879 = vmatpush.bf16.msra.mxu0 0
    %1880 = vmatpush.bf16.msra.mxu0 0
    %1881 = vmatpush.bf16.msra.mxu0 %v1872
    %1882 = vmatmul.bf16.gmra.mxu0 %v1869
    %v1883 = vpop.f32.mrf.mxu0
    %v1884 = vadd.f32 0.0, %v1883
    %v1885 = vpop.f32.mrf.mxu0
    %v1886 = vadd.f32 0.0, %v1885
    %1887 = vdwg.mxu0
    %v1888 = vadd.f32 %v1663, %v1884
    %v1889 = vadd.f32 %v1665, %v1886
    %s1890 = scalar_lea.vmem %s4, 240
    %v1891 = vld [vmem:[%s1890] sm:$0xf]
    %v1892 = vld [vmem:[%s1890 + $0x4] sm:$0xf]
    %v1893 = vld [vmem:[%s1890 + $0x8] sm:$0xf]
    %v1894 = vld [vmem:[%s1890 + $0xc] sm:$0xf]
    %s1895 = scalar_lea.vmem %s5, 15
    %v1896 = vld [vmem:[%s1895] sm:$0x1]
    %v1898 = vperm.slane %v1896, 0
    %v1904 = vunpack.c.l.b16 %v1891
    %v1905 = vunpack.c.l.b16 %v1892
    %v1906 = vunpack.c.l.b16 %v1893
    %v1907 = vunpack.c.l.b16 %v1894
    %v1908 = vpack.c.b16 %v1905, %v1904
    %v1909 = vpack.c.b16 %v1907, %v1906
    %1912 = vmatpush.bf16.msra.mxu0 0
    %1913 = vmatpush.bf16.msra.mxu0 0
    %1914 = vmatpush.bf16.msra.mxu0 0
    %1915 = vmatpush.bf16.msra.mxu0 0
    %1916 = vmatpush.bf16.msra.mxu0 0
    %1917 = vmatpush.bf16.msra.mxu0 0
    %1918 = vmatpush.bf16.msra.mxu0 %v1909
    %1919 = vmatpush.bf16.msra.mxu0 %v1908
    %1920 = vmatmul.bf16.gmra.mxu0 %v1245
    %v1921 = vpop.f32.mrf.mxu0
    %v1922 = vadd.f32 %v1898, %v1921
    %v1923 = vpop.f32.mrf.mxu0
    %v1924 = vadd.f32 %v1898, %v1923
    %1925 = vdwg.mxu0
    %s1926 = scalar_lea.vmem %s4, 304
    %v1927 = vld [vmem:[%s1926] sm:$0xf]
    %v1928 = vld [vmem:[%s1926 + $0x4] sm:$0xf]
    %v1929 = vld [vmem:[%s1926 + $0x8] sm:$0xf]
    %v1930 = vld [vmem:[%s1926 + $0xc] sm:$0xf]
    %s1931 = scalar_lea.vmem %s5, 19
    %v1932 = vld [vmem:[%s1931] sm:$0x1]
    %v1934 = vperm.slane %v1932, 0
    %v1940 = vunpack.c.l.b16 %v1927
    %v1941 = vunpack.c.l.b16 %v1928
    %v1942 = vunpack.c.l.b16 %v1929
    %v1943 = vunpack.c.l.b16 %v1930
    %v1944 = vpack.c.b16 %v1941, %v1940
    %v1945 = vpack.c.b16 %v1943, %v1942
    %1948 = vmatpush.bf16.msra.mxu0 0
    %1949 = vmatpush.bf16.msra.mxu0 0
    %1950 = vmatpush.bf16.msra.mxu0 0
    %1951 = vmatpush.bf16.msra.mxu0 0
    %1952 = vmatpush.bf16.msra.mxu0 0
    %1953 = vmatpush.bf16.msra.mxu0 0
    %1954 = vmatpush.bf16.msra.mxu0 %v1945
    %1955 = vmatpush.bf16.msra.mxu0 %v1944
    %1956 = vmatmul.bf16.gmra.mxu0 %v1245
    %v1957 = vpop.f32.mrf.mxu0
    %v1958 = vadd.f32 %v1934, %v1957
    %v1959 = vpop.f32.mrf.mxu0
    %v1960 = vadd.f32 %v1934, %v1959
    %1961 = vdwg.mxu0
    %s1962 = scalar_lea.vmem %s4, 368
    %v1963 = vld [vmem:[%s1962] sm:$0xf]
    %v1964 = vld [vmem:[%s1962 + $0x4] sm:$0xf]
    %v1965 = vld [vmem:[%s1962 + $0x8] sm:$0xf]
    %v1966 = vld [vmem:[%s1962 + $0xc] sm:$0xf]
    %s1967 = scalar_lea.vmem %s5, 23
    %v1968 = vld [vmem:[%s1967] sm:$0x1]
    %v1970 = vperm.slane %v1968, 0
    %v1976 = vunpack.c.l.b16 %v1963
    %v1977 = vunpack.c.l.b16 %v1964
    %v1978 = vunpack.c.l.b16 %v1965
    %v1979 = vunpack.c.l.b16 %v1966
    %v1980 = vpack.c.b16 %v1977, %v1976
    %v1981 = vpack.c.b16 %v1979, %v1978
    %1984 = vmatpush.bf16.msra.mxu0 0
    %1985 = vmatpush.bf16.msra.mxu0 0
    %1986 = vmatpush.bf16.msra.mxu0 0
    %1987 = vmatpush.bf16.msra.mxu0 0
    %1988 = vmatpush.bf16.msra.mxu0 0
    %1989 = vmatpush.bf16.msra.mxu0 0
    %1990 = vmatpush.bf16.msra.mxu0 %v1981
    %1991 = vmatpush.bf16.msra.mxu0 %v1980
    %1992 = vmatmul.bf16.gmra.mxu0 %v1245
    %v1993 = vpop.f32.mrf.mxu0
    %v1994 = vadd.f32 %v1970, %v1993
    %v1995 = vpop.f32.mrf.mxu0
    %v1996 = vadd.f32 %v1970, %v1995
    %1997 = vdwg.mxu0
    %v1999 = vsel %vm234, %v1922, 0
    %v2002 = vsel %vm234, %v1924, 0
    %v2005 = vsel %vm234, %v1958, 0
    %v2008 = vsel %vm234, %v1960, 0
    %2010 = vmatpush.xpose.msra.mxu0 0.0
    %2011 = vmatpush.xpose.msra.mxu0 0.0
    %2012 = vmatpush.xpose.msra.mxu0 0.0
    %2013 = vmatpush.xpose.msra.mxu0 0.0
    %2014 = vmatpush.xpose.msra.mxu0 0.0
    %2015 = vmatpush.xpose.msra.mxu0 0.0
    %2016 = vmatpush.xpose.msra.mxu0 0.0
    %2017 = vmatpush.xpose.msra.mxu0 0.0
    %2018 = vmatpush.xpose.msra.mxu0 0.0
    %2019 = vmatpush.xpose.msra.mxu0 0.0
    %2020 = vmatpush.xpose.msra.mxu0 0.0
    %2021 = vmatpush.xpose.msra.mxu0 0.0
    %2022 = vmatpush.xpose.msra.mxu0 0.0
    %2023 = vmatpush.xpose.msra.mxu0 0.0
    %2024 = vmatpush.xpose.msra.mxu0 %v2008
    %2025 = vmatpush.xpose.msra.mxu0 %v2005
    %2026 = vmatmul.f32.gmra.mxu0 %v1999
    %v2027 = vpop.f32.mrf.mxu0
    %v2028 = vadd.f32 0.0, %v2027
    %2029 = vmatmul.f32.gmra.mxu0 %v2002
    %v2030 = vpop.f32.mrf.mxu0
    %v2031 = vadd.f32 0.0, %v2030
    %2032 = vdwg.mxu0
    %v2033 = vmul.f32 %v2028, 0.35355338
    %v2034 = vmul.f32 %v2031, 0.35355338
    %v2035 = vadd.f32 %v2033, %v120
    %v2036 = vadd.f32 %v2034, %v121
    %v2037 = vsel %vm274, %v2035, -inf
    %2038 = vmax.xlane.f32.xlu0 %v2037
    %v2039 = vpop.xlane.xlu0 %2038
    %v2040 = vsel %vm274, %v2036, -inf
    %2041 = vmax.xlane.f32.xlu0 %v2040
    %v2042 = vpop.xlane.xlu0 %2041
    %v2043 = vsub.f32 %v2035, %v2039
    %v2044 = vsub.f32 %v2036, %v2042
    %v2045 = vmul.f32 %v2043, 1.442695
    %v2046 = vpow.pop %v2045
    %v2047 = vmul.f32 %v2044, 1.442695
    %v2048 = vpow.pop %v2047
    %v2049 = vsel %vm274, %v2046, 0.0
    %2050 = vadd.xlane.f32.xlu0 %v2049
    %v2051 = vpop.xlane.xlu0 %2050
    %v2052 = vsel %vm274, %v2048, 0.0
    %2053 = vadd.xlane.f32.xlu0 %v2052
    %v2054 = vpop.xlane.xlu0 %2053
    %v2055 = vrcp.pop %v2051
    %v2056 = vrcp.pop %v2054
    %v2057 = vmul.f32 %v2046, %v2055
    %v2058 = vmul.f32 %v2048, %v2056
    %v2060 = vsel %vm274, %v2057, 0
    %v2063 = vsel %vm274, %v2058, 0
    %2065 = vmatpush.msra.mxu0 0.0
    %2066 = vmatpush.msra.mxu0 0.0
    %2067 = vmatpush.msra.mxu0 0.0
    %2068 = vmatpush.msra.mxu0 0.0
    %2069 = vmatpush.msra.mxu0 0.0
    %2070 = vmatpush.msra.mxu0 0.0
    %2071 = vmatpush.msra.mxu0 0.0
    %2072 = vmatpush.msra.mxu0 0.0
    %2073 = vmatpush.msra.mxu0 0.0
    %2074 = vmatpush.msra.mxu0 0.0
    %2075 = vmatpush.msra.mxu0 0.0
    %2076 = vmatpush.msra.mxu0 0.0
    %2077 = vmatpush.msra.mxu0 0.0
    %2078 = vmatpush.msra.mxu0 0.0
    %2079 = vmatpush.msra.mxu0 %v1996
    %2080 = vmatpush.msra.mxu0 %v1994
    %2081 = vmatmul.f32.gmra.mxu0 %v2060
    %v2082 = vpop.f32.mrf.mxu0
    %v2083 = vadd.f32 0.0, %v2082
    %2084 = vmatmul.f32.gmra.mxu0 %v2063
    %v2085 = vpop.f32.mrf.mxu0
    %v2086 = vadd.f32 0.0, %v2085
    %2087 = vdwg.mxu0
    %v2088 = vpack.c.bf16 %v2086, %v2083
    %s2089 = scalar_lea.vmem %s6, 28
    %v2090 = vld [vmem:[%s2089] sm:$0xf]
    %v2092 = vsel %vm234, %v2088, 0
    %v2095 = vsel %vm532, %v2090, 0
    %2097 = vmatpush.bf16.msra.mxu0 0
    %2098 = vmatpush.bf16.msra.mxu0 0
    %2099 = vmatpush.bf16.msra.mxu0 0
    %2100 = vmatpush.bf16.msra.mxu0 0
    %2101 = vmatpush.bf16.msra.mxu0 0
    %2102 = vmatpush.bf16.msra.mxu0 0
    %2103 = vmatpush.bf16.msra.mxu0 0
    %2104 = vmatpush.bf16.msra.mxu0 %v2095
    %2105 = vmatmul.bf16.gmra.mxu0 %v2092
    %v2106 = vpop.f32.mrf.mxu0
    %v2107 = vadd.f32 0.0, %v2106
    %v2108 = vpop.f32.mrf.mxu0
    %v2109 = vadd.f32 0.0, %v2108
    %2110 = vdwg.mxu0
    %v2111 = vadd.f32 %v1888, %v2107
    %v2112 = vadd.f32 %v1889, %v2109
    %v2113 = vperm.slane %v1220, 0
    %v2114 = vadd.f32 %v2111, %v2113
    %v2115 = vadd.f32 %v2112, %v2113
    %v2116 = vadd.f32 %v1217, %v2114
    %v2117 = vadd.f32 %v1218, %v2115
    %v2118 = vsel %vm144, %v2116, 0.0
    %2119 = vadd.xlane.f32.xlu0 %v2118
    %v2120 = vpop.xlane.xlu0 %2119
    %v2121 = vsel %vm144, %v2117, 0.0
    %2122 = vadd.xlane.f32.xlu0 %v2121
    %v2123 = vpop.xlane.xlu0 %2122
    %v2124 = vmul.f32 %v2120, %v1033
    %v2125 = vmul.f32 %v2123, %v1033
    %v2126 = vsub.f32 %v2116, %v2124
    %v2127 = vsub.f32 %v2117, %v2125
    %v2128 = vmul.f32 %v2126, %v2126
    %v2129 = vmul.f32 %v2127, %v2127
    %v2130 = vsel %vm144, %v2128, 0.0
    %2131 = vadd.xlane.f32.xlu0 %v2130
    %v2132 = vpop.xlane.xlu0 %2131
    %v2133 = vsel %vm144, %v2129, 0.0
    %2134 = vadd.xlane.f32.xlu0 %v2133
    %v2135 = vpop.xlane.xlu0 %2134
    %v2136 = vmul.f32 %v2132, %v1033
    %v2137 = vmul.f32 %v2135, %v1033
    %v2138 = vadd.f32 %v2136, 1e-05
    %v2139 = vadd.f32 %v2137, 1e-05
    %v2140 = vrsqrt.pop %v2138
    %v2141 = vmul.f32 %v2140, %v2138
    %v2142 = vmul.f32 %v2141, %v2140
    %v2143 = vmul.f32 0.5, %v2142
    %v2144 = vsub.f32 1.5, %v2143
    %v2145 = vmul.f32 %v2140, %v2144
    %vm2146 = vweird.f32 %v2138
    %vm2147 = vweird.f32 %v2140
    %vm2148 = vmor %vm2146, %vm2147
    %v2149 = vsel %vm2148, %v2140, %v2145
    %v2150 = vrsqrt.pop %v2139
    %v2151 = vmul.f32 %v2150, %v2139
    %v2152 = vmul.f32 %v2151, %v2150
    %v2153 = vmul.f32 0.5, %v2152
    %v2154 = vsub.f32 1.5, %v2153
    %v2155 = vmul.f32 %v2150, %v2154
    %vm2156 = vweird.f32 %v2139
    %vm2157 = vweird.f32 %v2150
    %vm2158 = vmor %vm2156, %vm2157
    %v2159 = vsel %vm2158, %v2150, %v2155
    %v2160 = vmul.f32 %v2126, %v2149
    %v2161 = vmul.f32 %v2127, %v2159
    %v2162 = vperm.slane %v1220, 3
    %v2163 = vmul.f32 %v2160, %v2162
    %v2164 = vmul.f32 %v2161, %v2162
    %v2165 = vperm.slane %v1220, 4
    %v2166 = vadd.f32 %v2163, %v2165
    %v2167 = vadd.f32 %v2164, %v2165
    %v2168 = vpack.c.bf16 %v2167, %v2166
    %s2169 = scalar_lea.vmem %s7, 16
    %v2170 = vld [vmem:[%s2169] sm:$0xf]
    %v2171 = vld [vmem:[%s2169 + $0x4] sm:$0xf]
    %v2172 = vld [vmem:[%s2169 + $0x8] sm:$0xf]
    %v2173 = vld [vmem:[%s2169 + $0xc] sm:$0xf]
    %v2174 = vperm.slane %v1220, 1
    %v2179 = vunpack.c.l.b16 %v2170
    %v2180 = vunpack.c.l.b16 %v2171
    %v2181 = vunpack.c.l.b16 %v2172
    %v2182 = vunpack.c.l.b16 %v2173
    %v2183 = vpack.c.b16 %v2180, %v2179
    %v2184 = vpack.c.b16 %v2182, %v2181
    %v2188 = vsel %vm144, %v2168, 0
    %2190 = vmatpush.bf16.msra.mxu0 0
    %2191 = vmatpush.bf16.msra.mxu0 0
    %2192 = vmatpush.bf16.msra.mxu0 0
    %2193 = vmatpush.bf16.msra.mxu0 0
    %2194 = vmatpush.bf16.msra.mxu0 0
    %2195 = vmatpush.bf16.msra.mxu0 0
    %2196 = vmatpush.bf16.msra.mxu0 %v2184
    %2197 = vmatpush.bf16.msra.mxu0 %v2183
    %2198 = vmatmul.bf16.gmra.mxu0 %v2188
    %v2199 = vpop.f32.mrf.mxu0
    %v2200 = vadd.f32 %v2174, %v2199
    %v2201 = vpop.f32.mrf.mxu0
    %v2202 = vadd.f32 %v2174, %v2201
    %2203 = vdwg.mxu0
    %v2204 = vmax.f32 %v2200, 0.0
    %v2205 = vmax.f32 %v2202, 0.0
    %v2206 = vpack.c.bf16 %v2205, %v2204
    %s2207 = scalar_lea.vmem %s8, 32
    %v2208 = vld [vmem:[%s2207] sm:$0xf]
    %v2209 = vld [vmem:[%s2207 + $0x4] sm:$0xf]
    %v2210 = vld [vmem:[%s2207 + $0x8] sm:$0xf]
    %v2211 = vld [vmem:[%s2207 + $0xc] sm:$0xf]
    %v2212 = vld [vmem:[%s2207 + $0x10] sm:$0xf]
    %v2213 = vld [vmem:[%s2207 + $0x14] sm:$0xf]
    %v2214 = vld [vmem:[%s2207 + $0x18] sm:$0xf]
    %v2215 = vld [vmem:[%s2207 + $0x1c] sm:$0xf]
    %v2216 = vperm.slane %v1220, 2
    %v2225 = vunpack.c.l.b16 %v2208
    %v2226 = vunpack.c.l.b16 %v2209
    %v2227 = vunpack.c.l.b16 %v2210
    %v2228 = vunpack.c.l.b16 %v2211
    %v2229 = vunpack.c.l.b16 %v2212
    %v2230 = vunpack.c.l.b16 %v2213
    %v2231 = vunpack.c.l.b16 %v2214
    %v2232 = vunpack.c.l.b16 %v2215
    %v2233 = vpack.c.b16 %v2226, %v2225
    %v2234 = vpack.c.b16 %v2228, %v2227
    %v2235 = vpack.c.b16 %v2230, %v2229
    %v2236 = vpack.c.b16 %v2232, %v2231
    %v2242 = vsel %vm1149, %v2206, 0
    %2244 = vmatpush.bf16.msra.mxu0 0
    %2245 = vmatpush.bf16.msra.mxu0 0
    %2246 = vmatpush.bf16.msra.mxu0 0
    %2247 = vmatpush.bf16.msra.mxu0 0
    %2248 = vmatpush.bf16.msra.mxu0 %v2236
    %2249 = vmatpush.bf16.msra.mxu0 %v2235
    %2250 = vmatpush.bf16.msra.mxu0 %v2234
    %2251 = vmatpush.bf16.msra.mxu0 %v2233
    %2252 = vmatmul.bf16.gmra.mxu0 %v2242
    %v2253 = vpop.f32.mrf.mxu0
    %v2254 = vadd.f32 %v2216, %v2253
    %v2255 = vpop.f32.mrf.mxu0
    %v2256 = vadd.f32 %v2216, %v2255
    %2257 = vdwg.mxu0
    %v2258 = vadd.f32 %v2166, %v2254
    %v2259 = vadd.f32 %v2167, %v2256
    %v2260 = vsel %vm144, %v2258, 0.0
    %2261 = vadd.xlane.f32.xlu0 %v2260
    %v2262 = vpop.xlane.xlu0 %2261
    %v2263 = vsel %vm144, %v2259, 0.0
    %2264 = vadd.xlane.f32.xlu0 %v2263
    %v2265 = vpop.xlane.xlu0 %2264
    %v2266 = vmul.f32 %v2262, %v1033
    %v2267 = vmul.f32 %v2265, %v1033
    %v2268 = vsub.f32 %v2258, %v2266
    %v2269 = vsub.f32 %v2259, %v2267
    %v2270 = vmul.f32 %v2268, %v2268
    %v2271 = vmul.f32 %v2269, %v2269
    %v2272 = vsel %vm144, %v2270, 0.0
    %2273 = vadd.xlane.f32.xlu0 %v2272
    %v2274 = vpop.xlane.xlu0 %2273
    %v2275 = vsel %vm144, %v2271, 0.0
    %2276 = vadd.xlane.f32.xlu0 %v2275
    %v2277 = vpop.xlane.xlu0 %2276
    %v2278 = vmul.f32 %v2274, %v1033
    %v2279 = vmul.f32 %v2277, %v1033
    %v2280 = vadd.f32 %v2278, 1e-05
    %v2281 = vadd.f32 %v2279, 1e-05
    %v2282 = vrsqrt.pop %v2280
    %v2283 = vmul.f32 %v2282, %v2280
    %v2284 = vmul.f32 %v2283, %v2282
    %v2285 = vmul.f32 0.5, %v2284
    %v2286 = vsub.f32 1.5, %v2285
    %v2287 = vmul.f32 %v2282, %v2286
    %vm2288 = vweird.f32 %v2280
    %vm2289 = vweird.f32 %v2282
    %vm2290 = vmor %vm2288, %vm2289
    %v2291 = vsel %vm2290, %v2282, %v2287
    %v2292 = vrsqrt.pop %v2281
    %v2293 = vmul.f32 %v2292, %v2281
    %v2294 = vmul.f32 %v2293, %v2292
    %v2295 = vmul.f32 0.5, %v2294
    %v2296 = vsub.f32 1.5, %v2295
    %v2297 = vmul.f32 %v2292, %v2296
    %vm2298 = vweird.f32 %v2281
    %vm2299 = vweird.f32 %v2292
    %vm2300 = vmor %vm2298, %vm2299
    %v2301 = vsel %vm2300, %v2292, %v2297
    %v2302 = vmul.f32 %v2268, %v2291
    %v2303 = vmul.f32 %v2269, %v2301
    %v2304 = vperm.slane %v1220, 5
    %v2305 = vmul.f32 %v2302, %v2304
    %v2306 = vmul.f32 %v2303, %v2304
    %v2307 = vperm.slane %v1220, 6
    %v2308 = vadd.f32 %v2305, %v2307
    %v2309 = vadd.f32 %v2306, %v2307
    %2310 = vst.msk [vmem:[#allocation2] sm:$0xff] %vm144, %v2308
    %2311 = vst.msk [vmem:[#allocation2 + $0x8] sm:$0xff] %vm144, %v2309
    // Predicated region
    $region42: #{tpu_custom_call.1} parent=1 // pred_check
      _
    $region43: #{tpu_custom_call.1} parent=1 // pred_check_branch
      %2313 = sbr.rel (0) target = $region45
    $region44: #{tpu_custom_call.1} parent=1 // pred_region
      %2315 = vsyncadd [#allocation3], 0
      %s2316 = sshll.u32 [#allocation2], 4
      %s2317 = int_to_ptr.vmem [resolvable:$true] %s2316
      %s2318 = sshll.u32 %s10, 4
      %s2319 = int_to_ptr.hbm [resolvable:$true] %s2318
      %2324 = dma.vmem_to_hbm [thread:$0]  %s2317, 256, %s2319, [#allocation3], 128, 128, 8
    $region45: #{tpu_custom_call.1} parent=1 // pred_fallthru
      _
    // Predicated region
    $region46: #{tpu_custom_call.1} parent=1 // pred_check
      _
    $region47: #{tpu_custom_call.1} parent=1 // pred_check_branch
      %2326 = sbr.rel (0) target = $region49
    $region48: #{tpu_custom_call.1} parent=1 // pred_region
      %2328 = dma.done [#allocation3], 256
    $region49: #{tpu_custom_call.1} parent=1 // pred_fallthru
      _
    %2329 = vsyncpa [#allocation3], 1

</llo_original>
